<compile_context>
chip_gen: v7x
topology: tpu7x:2x2x1
jax: 0.10.0
libtpu: 0.0.40
codegen_flags: <defaults>
</compile_context>

<pallas_src>
import jax
import jax.numpy as jnp
from jax.experimental import pallas as pl
from jax.experimental.pallas import tpu as pltpu


def _round_up(a, b):
    return (a + b - 1) // b * b


# ----------------------------------------------------------------------------
# Fully fused BasicBlock kernel: one sample per grid step.
# ----------------------------------------------------------------------------
def _make_block_kernel(taps, lout, off, pad0, sp2, cout, n_valid, eps):
    inv_s = 1.0 / float(n_valid)
    c2_base = pad0 - off                       # scratch index of flat pos 0
    groups = tuple(taps[9 * g:9 * (g + 1)] for g in range(3))   # group by kd

    def conv_groups(src, w_ref, base):
        """src: (C, *) bf16; w_ref: (3, Cout, 9*C) bf16 -> (Cout, lout) f32."""
        acc = None
        for g, gtaps in enumerate(groups):
            patch = jnp.concatenate(
                [src[:, base + o: base + o + lout] for o in gtaps], axis=0)
            part = jnp.dot(w_ref[g], patch,
                           preferred_element_type=jnp.float32)
            acc = part if acc is None else acc + part
        return acc

    def instance_norm(acc, m):
        """One-pass masked mean/var (biased), clamped before rsqrt."""
        xm = acc * m                                        # zero at invalid
        s1 = jnp.sum(xm, axis=1, keepdims=True)
        s2 = jnp.sum(xm * acc, axis=1, keepdims=True)
        mean = s1 * inv_s
        var = jnp.maximum(s2 * inv_s - mean * mean, 0.0)
        return (acc - mean) * jax.lax.rsqrt(var + eps)

    def kernel(x_ref, w1_ref, w2_ref, m_ref, o_ref, y1_ref):
        x = x_ref[0]                                        # (Cin, Sp_in) bf16
        m = m_ref[...]                                      # (1, lout) f32

        # ---- conv1 + IN + ReLU, written into the conv2 scratch layout ----
        acc1 = conv_groups(x, w1_ref, 0)                    # (Cout, lout) f32
        y1 = jnp.maximum(instance_norm(acc1, m), 0.0) * m   # zero at invalid
        y1_ref[:, 0:pad0] = jnp.zeros((cout, pad0), jnp.bfloat16)
        y1_ref[:, pad0 + lout:sp2] = jnp.zeros((cout, sp2 - pad0 - lout),
                                               jnp.bfloat16)
        y1_ref[:, pad0:pad0 + lout] = y1.astype(jnp.bfloat16)

        # ---- conv2 + IN + residual + ReLU ----
        y1f = y1_ref[...]                                   # (Cout, sp2) bf16
        acc2 = conv_groups(y1f, w2_ref, c2_base)            # (Cout, lout) f32
        y2 = instance_norm(acc2, m) * m
        identity = x[:, off:off + lout].astype(jnp.float32)  # shifted view
        o_ref[0] = jnp.maximum(y2 + identity, 0.0).astype(o_ref.dtype)

    return kernel


# ----------------------------------------------------------------------------
# Host-side parameter prep (outside jit): repack conv weights to
# (3, Cout, 9*Cin) bf16 tap-group matrices (kd-major, (kh,kw) tap-major,
# channel-minor along K) so they ship in the exact MXU layout.
# ----------------------------------------------------------------------------
def prepare_params(params):
    def repack(w):                            # (Cout, Cin, 3, 3, 3)
        co, ci = w.shape[0], w.shape[1]
        wt = jnp.transpose(w, (2, 3, 4, 1, 0))        # (kd, kh, kw, ci, co)
        wt = wt.reshape(3, 9 * ci, co)                # (kd, 9*ci, co)
        return jnp.transpose(wt, (0, 2, 1)).astype(jnp.bfloat16)

    return {"w1": repack(params["conv1"]), "w2": repack(params["conv2"])}


# ----------------------------------------------------------------------------
# BasicBlock forward (NCDHW in / NCDHW out), stride=1, downsample=None.
# ----------------------------------------------------------------------------
def basic_block_forward(prepared, x, eps=1e-5):
    N, C, D, H, W = x.shape
    w1, w2 = prepared["w1"], prepared["w2"]
    Cout = w1.shape[1]
    Cin = w1.shape[2] // 9
    assert C == Cin == Cout, "identity path requires inplanes == planes"

    Sh = W + 2
    Sd = (H + 2) * (W + 2)
    S = D * H * W                              # valid voxels per (n, c)
    L = D * Sd                                 # over-computed output rows
    Lp = _round_up(L, 128)                     # lane-dense output width
    off = Sd + Sh + 1                          # flat offset of voxel (1,1,1)
    pad0 = _round_up(off, 128)                 # aligned conv2-scratch origin
    Sp = (D + 2) * Sd                          # flattened padded volume
    Sp_in = _round_up(Lp + 2 * off, 128)       # input slab width (>= Sp)
    Sp2 = 2 * pad0 + Lp                        # conv2 scratch width

    taps = tuple(kd * Sd + kh * Sh + kw
                 for kd in range(3) for kh in range(3) for kw in range(3))

    # Validity mask over the over-computed layout p = d*Sd + h*Sh + w.
    p = jnp.arange(Lp)
    hh = (p % Sd) // Sh
    ww = p % Sh
    mask = ((p < L) & (hh < H) & (ww < W)).astype(jnp.float32).reshape(1, Lp)

    # Input slab: zero-pad spatially, flatten, extend tail with zeros (bf16).
    xp = jnp.pad(x, ((0, 0), (0, 0), (1, 1), (1, 1), (1, 1)))
    x_slab = jnp.pad(xp.reshape(N, C, Sp),
                     ((0, 0), (0, 0), (0, Sp_in - Sp))).astype(jnp.bfloat16)

    kernel = _make_block_kernel(taps, Lp, off, pad0, Sp2, Cout, S, eps)

    y = pl.pallas_call(
        kernel,
        out_shape=jax.ShapeDtypeStruct((N, Cout, Lp), jnp.float32),
        grid_spec=pltpu.PrefetchScalarGridSpec(
            num_scalar_prefetch=0,
            grid=(N,),
            in_specs=[
                pl.BlockSpec((1, Cin, Sp_in), lambda n: (n, 0, 0)),
                pl.BlockSpec((3, Cout, 9 * Cin), lambda n: (0, 0, 0)),
                pl.BlockSpec((3, Cout, 9 * Cout), lambda n: (0, 0, 0)),
                pl.BlockSpec((1, Lp), lambda n: (0, 0)),
            ],
            out_specs=pl.BlockSpec((1, Cout, Lp), lambda n: (n, 0, 0)),
            scratch_shapes=[pltpu.VMEM((Cout, Sp2), jnp.bfloat16)],
        ),
        compiler_params=pltpu.CompilerParams(
            dimension_semantics=("parallel",),
            vmem_limit_bytes=48 * 1024 * 1024,
        ),
    )(x_slab, w1, w2, mask)

    # Extract the valid positions back into NCDHW.
    out = y[:, :, :L].reshape(N, Cout, D, H + 2, W + 2)[:, :, :, :H, :W]
    return out


def init_basic_block_params(key, inplanes, planes):
    k1, k2 = jax.random.split(key, 2)
    return {
        "conv1": 0.05 * jax.random.normal(
            k1, (planes, inplanes, 3, 3, 3), jnp.float32),
        "conv2": 0.05 * jax.random.normal(
            k2, (planes, planes, 3, 3, 3), jnp.float32),
    }


# Pure-JAX reference (f32) for correctness validation.
def _reference_forward(params, x, eps=1e-5):
    def conv(v, w):
        return jax.lax.conv_general_dilated(
            v, w, window_strides=(1, 1, 1), padding="SAME",
            dimension_numbers=("NCDHW", "OIDHW", "NCDHW"))

    def inorm(v):
        mean = jnp.mean(v, axis=(2, 3, 4), keepdims=True)
        var = jnp.mean((v - mean) ** 2, axis=(2, 3, 4), keepdims=True)
        return (v - mean) * jax.lax.rsqrt(var + eps)

    out = jax.nn.relu(inorm(conv(x, params["conv1"])))
    out = inorm(conv(out, params["conv2"]))
    return jax.nn.relu(out + x)


if __name__ == "__main__":
    inplanes = planes = 8
    N, D, H, W = 2, 8, 8, 8

    key = jax.random.PRNGKey(0)
    kp, kx = jax.random.split(key, 2)
    params = init_basic_block_params(kp, inplanes, planes)
    x = jax.random.normal(kx, (N, inplanes, D, H, W), jnp.float32)

    prepared = prepare_params(params)           # weight repack outside jit
    fwd = jax.jit(basic_block_forward)
    out = fwd(prepared, x)
    jax.block_until_ready(out)

    assert out.shape == (N, planes, D, H, W)
    assert bool(jnp.all(jnp.isfinite(out)))
    assert bool(jnp.all(out >= 0.0))            # final ReLU

    ref = _reference_forward(params, x)
    err = float(jnp.max(jnp.abs(out - ref)))
    assert err < 1e-1, f"max abs error vs reference: {err}"
    print("KERNEL_OK")
</pallas_src>

<mosaic_0001>
module attributes {stable_mosaic.version = 11 : i64} {
  func.func @kernel(%arg0: i32, %arg1: memref<1x8x1152xbf16, #tpu.memory_space<vmem>>, %arg2: memref<3x8x72xbf16, #tpu.memory_space<vmem>>, %arg3: memref<3x8x72xbf16, #tpu.memory_space<vmem>>, %arg4: memref<1x896xf32, #tpu.memory_space<vmem>>, %arg5: memref<1x8x896xf32, #tpu.memory_space<vmem>>, %arg6: memref<8x1152xbf16, #tpu.memory_space<vmem>>) attributes {dimension_semantics = [#tpu.dimension_semantics<parallel>], iteration_bounds = array<i64: 2>, scalar_prefetch = 0 : i64, scratch_operands = 1 : i64, tpu.core_type = #tpu.core_type<tc>, window_params = [{transform_indices = @transform_0, window_bounds = array<i64: 1, 8, 1152>}, {pipeline_mode = #tpu.pipeline_mode<synchronous>, transform_indices = @transform_1, window_bounds = array<i64: 3, 8, 72>}, {pipeline_mode = #tpu.pipeline_mode<synchronous>, transform_indices = @transform_2, window_bounds = array<i64: 3, 8, 72>}, {pipeline_mode = #tpu.pipeline_mode<synchronous>, transform_indices = @transform_3, window_bounds = array<i64: 1, 896>}, {transform_indices = @transform_4, window_bounds = array<i64: 1, 8, 896>}]} {
    %c0 = arith.constant 0 : index
    %c0_0 = arith.constant 0 : index
    %c0_1 = arith.constant 0 : index
    %0 = vector.load %arg1[%c0, %c0_0, %c0_1] : memref<1x8x1152xbf16, #tpu.memory_space<vmem>>, vector<1x8x1152xbf16>
    %1 = vector.shape_cast %0 : vector<1x8x1152xbf16> to vector<8x1152xbf16>
    %c0_2 = arith.constant 0 : index
    %c0_3 = arith.constant 0 : index
    %2 = vector.load %arg4[%c0_2, %c0_3] : memref<1x896xf32, #tpu.memory_space<vmem>>, vector<1x896xf32>
    %3 = vector.extract_strided_slice %1 {offsets = [0, 0], sizes = [8, 896], strides = [1, 1]} : vector<8x1152xbf16> to vector<8x896xbf16>
    %4 = vector.extract_strided_slice %1 {offsets = [0, 1], sizes = [8, 896], strides = [1, 1]} : vector<8x1152xbf16> to vector<8x896xbf16>
    %5 = vector.extract_strided_slice %1 {offsets = [0, 2], sizes = [8, 896], strides = [1, 1]} : vector<8x1152xbf16> to vector<8x896xbf16>
    %6 = vector.extract_strided_slice %1 {offsets = [0, 10], sizes = [8, 896], strides = [1, 1]} : vector<8x1152xbf16> to vector<8x896xbf16>
    %7 = vector.extract_strided_slice %1 {offsets = [0, 11], sizes = [8, 896], strides = [1, 1]} : vector<8x1152xbf16> to vector<8x896xbf16>
    %8 = vector.extract_strided_slice %1 {offsets = [0, 12], sizes = [8, 896], strides = [1, 1]} : vector<8x1152xbf16> to vector<8x896xbf16>
    %9 = vector.extract_strided_slice %1 {offsets = [0, 20], sizes = [8, 896], strides = [1, 1]} : vector<8x1152xbf16> to vector<8x896xbf16>
    %10 = vector.extract_strided_slice %1 {offsets = [0, 21], sizes = [8, 896], strides = [1, 1]} : vector<8x1152xbf16> to vector<8x896xbf16>
    %11 = vector.extract_strided_slice %1 {offsets = [0, 22], sizes = [8, 896], strides = [1, 1]} : vector<8x1152xbf16> to vector<8x896xbf16>
    %12 = tpu.concatenate %3, %4, %5, %6, %7, %8, %9, %10, %11 in 0 : vector<8x896xbf16>, vector<8x896xbf16>, vector<8x896xbf16>, vector<8x896xbf16>, vector<8x896xbf16>, vector<8x896xbf16>, vector<8x896xbf16>, vector<8x896xbf16>, vector<8x896xbf16> -> vector<72x896xbf16>
    %c0_4 = arith.constant 0 : index
    %c0_5 = arith.constant 0 : index
    %c0_6 = arith.constant 0 : index
    %13 = vector.load %arg2[%c0_4, %c0_5, %c0_6] : memref<3x8x72xbf16, #tpu.memory_space<vmem>>, vector<1x8x72xbf16>
    %14 = vector.shape_cast %13 : vector<1x8x72xbf16> to vector<8x72xbf16>
    %cst = arith.constant dense<0.000000e+00> : vector<8x896xf32>
    %15 = tpu.matmul %14, %12, %cst {dimension_numbers = #tpu.dot_dimension_numbers<[1], [0], [0], [1], [0, 0, 1, 1], [], []>} : vector<8x72xbf16>, vector<72x896xbf16>, vector<8x896xf32> -> vector<8x896xf32>
    %16 = vector.extract_strided_slice %1 {offsets = [0, 100], sizes = [8, 896], strides = [1, 1]} : vector<8x1152xbf16> to vector<8x896xbf16>
    %17 = vector.extract_strided_slice %1 {offsets = [0, 101], sizes = [8, 896], strides = [1, 1]} : vector<8x1152xbf16> to vector<8x896xbf16>
    %18 = vector.extract_strided_slice %1 {offsets = [0, 102], sizes = [8, 896], strides = [1, 1]} : vector<8x1152xbf16> to vector<8x896xbf16>
    %19 = vector.extract_strided_slice %1 {offsets = [0, 110], sizes = [8, 896], strides = [1, 1]} : vector<8x1152xbf16> to vector<8x896xbf16>
    %20 = vector.extract_strided_slice %1 {offsets = [0, 111], sizes = [8, 896], strides = [1, 1]} : vector<8x1152xbf16> to vector<8x896xbf16>
    %21 = vector.extract_strided_slice %1 {offsets = [0, 112], sizes = [8, 896], strides = [1, 1]} : vector<8x1152xbf16> to vector<8x896xbf16>
    %22 = vector.extract_strided_slice %1 {offsets = [0, 120], sizes = [8, 896], strides = [1, 1]} : vector<8x1152xbf16> to vector<8x896xbf16>
    %23 = vector.extract_strided_slice %1 {offsets = [0, 121], sizes = [8, 896], strides = [1, 1]} : vector<8x1152xbf16> to vector<8x896xbf16>
    %24 = vector.extract_strided_slice %1 {offsets = [0, 122], sizes = [8, 896], strides = [1, 1]} : vector<8x1152xbf16> to vector<8x896xbf16>
    %25 = tpu.concatenate %16, %17, %18, %19, %20, %21, %22, %23, %24 in 0 : vector<8x896xbf16>, vector<8x896xbf16>, vector<8x896xbf16>, vector<8x896xbf16>, vector<8x896xbf16>, vector<8x896xbf16>, vector<8x896xbf16>, vector<8x896xbf16>, vector<8x896xbf16> -> vector<72x896xbf16>
    %c1 = arith.constant 1 : index
    %c0_7 = arith.constant 0 : index
    %c0_8 = arith.constant 0 : index
    %26 = vector.load %arg2[%c1, %c0_7, %c0_8] : memref<3x8x72xbf16, #tpu.memory_space<vmem>>, vector<1x8x72xbf16>
    %27 = vector.shape_cast %26 : vector<1x8x72xbf16> to vector<8x72xbf16>
    %cst_9 = arith.constant dense<0.000000e+00> : vector<8x896xf32>
    %28 = tpu.matmul %27, %25, %cst_9 {dimension_numbers = #tpu.dot_dimension_numbers<[1], [0], [0], [1], [0, 0, 1, 1], [], []>} : vector<8x72xbf16>, vector<72x896xbf16>, vector<8x896xf32> -> vector<8x896xf32>
    %29 = arith.addf %15, %28 : vector<8x896xf32>
    %30 = vector.extract_strided_slice %1 {offsets = [0, 200], sizes = [8, 896], strides = [1, 1]} : vector<8x1152xbf16> to vector<8x896xbf16>
    %31 = vector.extract_strided_slice %1 {offsets = [0, 201], sizes = [8, 896], strides = [1, 1]} : vector<8x1152xbf16> to vector<8x896xbf16>
    %32 = vector.extract_strided_slice %1 {offsets = [0, 202], sizes = [8, 896], strides = [1, 1]} : vector<8x1152xbf16> to vector<8x896xbf16>
    %33 = vector.extract_strided_slice %1 {offsets = [0, 210], sizes = [8, 896], strides = [1, 1]} : vector<8x1152xbf16> to vector<8x896xbf16>
    %34 = vector.extract_strided_slice %1 {offsets = [0, 211], sizes = [8, 896], strides = [1, 1]} : vector<8x1152xbf16> to vector<8x896xbf16>
    %35 = vector.extract_strided_slice %1 {offsets = [0, 212], sizes = [8, 896], strides = [1, 1]} : vector<8x1152xbf16> to vector<8x896xbf16>
    %36 = vector.extract_strided_slice %1 {offsets = [0, 220], sizes = [8, 896], strides = [1, 1]} : vector<8x1152xbf16> to vector<8x896xbf16>
    %37 = vector.extract_strided_slice %1 {offsets = [0, 221], sizes = [8, 896], strides = [1, 1]} : vector<8x1152xbf16> to vector<8x896xbf16>
    %38 = vector.extract_strided_slice %1 {offsets = [0, 222], sizes = [8, 896], strides = [1, 1]} : vector<8x1152xbf16> to vector<8x896xbf16>
    %39 = tpu.concatenate %30, %31, %32, %33, %34, %35, %36, %37, %38 in 0 : vector<8x896xbf16>, vector<8x896xbf16>, vector<8x896xbf16>, vector<8x896xbf16>, vector<8x896xbf16>, vector<8x896xbf16>, vector<8x896xbf16>, vector<8x896xbf16>, vector<8x896xbf16> -> vector<72x896xbf16>
    %c2 = arith.constant 2 : index
    %c0_10 = arith.constant 0 : index
    %c0_11 = arith.constant 0 : index
    %40 = vector.load %arg2[%c2, %c0_10, %c0_11] : memref<3x8x72xbf16, #tpu.memory_space<vmem>>, vector<1x8x72xbf16>
    %41 = vector.shape_cast %40 : vector<1x8x72xbf16> to vector<8x72xbf16>
    %cst_12 = arith.constant dense<0.000000e+00> : vector<8x896xf32>
    %42 = tpu.matmul %41, %39, %cst_12 {dimension_numbers = #tpu.dot_dimension_numbers<[1], [0], [0], [1], [0, 0, 1, 1], [], []>} : vector<8x72xbf16>, vector<72x896xbf16>, vector<8x896xf32> -> vector<8x896xf32>
    %43 = arith.addf %29, %42 : vector<8x896xf32>
    %44 = vector.broadcast %2 : vector<1x896xf32> to vector<8x896xf32>
    %45 = arith.mulf %43, %44 : vector<8x896xf32>
    %cst_13 = arith.constant dense<0.000000e+00> : vector<8xf32>
    %46 = vector.multi_reduction <add>, %45, %cst_13 [1] : vector<8x896xf32> to vector<8xf32>
    %47 = vector.shape_cast %46 : vector<8xf32> to vector<8x1xf32>
    %48 = arith.mulf %45, %43 : vector<8x896xf32>
    %cst_14 = arith.constant dense<0.000000e+00> : vector<8xf32>
    %49 = vector.multi_reduction <add>, %48, %cst_14 [1] : vector<8x896xf32> to vector<8xf32>
    %50 = vector.shape_cast %49 : vector<8xf32> to vector<8x1xf32>
    %cst_15 = arith.constant 0.001953125 : f32
    %51 = vector.broadcast %cst_15 : f32 to vector<8x1xf32>
    %52 = arith.mulf %47, %51 : vector<8x1xf32>
    %cst_16 = arith.constant 0.001953125 : f32
    %53 = vector.broadcast %cst_16 : f32 to vector<8x1xf32>
    %54 = arith.mulf %50, %53 : vector<8x1xf32>
    %55 = arith.mulf %52, %52 : vector<8x1xf32>
    %56 = arith.subf %54, %55 : vector<8x1xf32>
    %cst_17 = arith.constant 0.000000e+00 : f32
    %57 = vector.broadcast %cst_17 : f32 to vector<8x1xf32>
    %58 = arith.maximumf %56, %57 : vector<8x1xf32>
    %59 = vector.broadcast %52 : vector<8x1xf32> to vector<8x896xf32>
    %60 = arith.subf %43, %59 : vector<8x896xf32>
    %cst_18 = arith.constant 9.99999974E-6 : f32
    %61 = vector.broadcast %cst_18 : f32 to vector<8x1xf32>
    %62 = arith.addf %58, %61 : vector<8x1xf32>
    %63 = math.rsqrt %62 : vector<8x1xf32>
    %64 = vector.broadcast %63 : vector<8x1xf32> to vector<8x896xf32>
    %65 = arith.mulf %60, %64 : vector<8x896xf32>
    %cst_19 = arith.constant 0.000000e+00 : f32
    %66 = vector.broadcast %cst_19 : f32 to vector<8x896xf32>
    %67 = arith.maximumf %65, %66 : vector<8x896xf32>
    %68 = vector.broadcast %2 : vector<1x896xf32> to vector<8x896xf32>
    %69 = arith.mulf %67, %68 : vector<8x896xf32>
    %cst_20 = arith.constant 0.000000e+00 : bf16
    %70 = vector.broadcast %cst_20 : bf16 to vector<8x128xbf16>
    %c0_21 = arith.constant 0 : index
    %c0_22 = arith.constant 0 : index
    %71 = vector.load %arg6[%c0_21, %c0_22] : memref<8x1152xbf16, #tpu.memory_space<vmem>>, vector<8x128xbf16>
    tpu.vector_store %arg6[%c0_21, %c0_22], %70 {strides = array<i32>} : memref<8x1152xbf16, #tpu.memory_space<vmem>>, vector<8x128xbf16>,
    %cst_23 = arith.constant 0.000000e+00 : bf16
    %72 = vector.broadcast %cst_23 : bf16 to vector<8x128xbf16>
    %c0_24 = arith.constant 0 : index
    %c1024 = arith.constant 1024 : index
    %73 = vector.load %arg6[%c0_24, %c1024] : memref<8x1152xbf16, #tpu.memory_space<vmem>>, vector<8x128xbf16>
    tpu.vector_store %arg6[%c0_24, %c1024], %72 {strides = array<i32>} : memref<8x1152xbf16, #tpu.memory_space<vmem>>, vector<8x128xbf16>,
    %74 = arith.truncf %69 : vector<8x896xf32> to vector<8x896xbf16>
    %c0_25 = arith.constant 0 : index
    %c128 = arith.constant 128 : index
    %75 = vector.load %arg6[%c0_25, %c128] : memref<8x1152xbf16, #tpu.memory_space<vmem>>, vector<8x896xbf16>
    tpu.vector_store %arg6[%c0_25, %c128], %74 {strides = array<i32>} : memref<8x1152xbf16, #tpu.memory_space<vmem>>, vector<8x896xbf16>,
    %c0_26 = arith.constant 0 : index
    %c0_27 = arith.constant 0 : index
    %76 = vector.load %arg6[%c0_26, %c0_27] : memref<8x1152xbf16, #tpu.memory_space<vmem>>, vector<8x1152xbf16>
    %77 = vector.extract_strided_slice %76 {offsets = [0, 17], sizes = [8, 896], strides = [1, 1]} : vector<8x1152xbf16> to vector<8x896xbf16>
    %78 = vector.extract_strided_slice %76 {offsets = [0, 18], sizes = [8, 896], strides = [1, 1]} : vector<8x1152xbf16> to vector<8x896xbf16>
    %79 = vector.extract_strided_slice %76 {offsets = [0, 19], sizes = [8, 896], strides = [1, 1]} : vector<8x1152xbf16> to vector<8x896xbf16>
    %80 = vector.extract_strided_slice %76 {offsets = [0, 27], sizes = [8, 896], strides = [1, 1]} : vector<8x1152xbf16> to vector<8x896xbf16>
    %81 = vector.extract_strided_slice %76 {offsets = [0, 28], sizes = [8, 896], strides = [1, 1]} : vector<8x1152xbf16> to vector<8x896xbf16>
    %82 = vector.extract_strided_slice %76 {offsets = [0, 29], sizes = [8, 896], strides = [1, 1]} : vector<8x1152xbf16> to vector<8x896xbf16>
    %83 = vector.extract_strided_slice %76 {offsets = [0, 37], sizes = [8, 896], strides = [1, 1]} : vector<8x1152xbf16> to vector<8x896xbf16>
    %84 = vector.extract_strided_slice %76 {offsets = [0, 38], sizes = [8, 896], strides = [1, 1]} : vector<8x1152xbf16> to vector<8x896xbf16>
    %85 = vector.extract_strided_slice %76 {offsets = [0, 39], sizes = [8, 896], strides = [1, 1]} : vector<8x1152xbf16> to vector<8x896xbf16>
    %86 = tpu.concatenate %77, %78, %79, %80, %81, %82, %83, %84, %85 in 0 : vector<8x896xbf16>, vector<8x896xbf16>, vector<8x896xbf16>, vector<8x896xbf16>, vector<8x896xbf16>, vector<8x896xbf16>, vector<8x896xbf16>, vector<8x896xbf16>, vector<8x896xbf16> -> vector<72x896xbf16>
    %c0_28 = arith.constant 0 : index
    %c0_29 = arith.constant 0 : index
    %c0_30 = arith.constant 0 : index
    %87 = vector.load %arg3[%c0_28, %c0_29, %c0_30] : memref<3x8x72xbf16, #tpu.memory_space<vmem>>, vector<1x8x72xbf16>
    %88 = vector.shape_cast %87 : vector<1x8x72xbf16> to vector<8x72xbf16>
    %cst_31 = arith.constant dense<0.000000e+00> : vector<8x896xf32>
    %89 = tpu.matmul %88, %86, %cst_31 {dimension_numbers = #tpu.dot_dimension_numbers<[1], [0], [0], [1], [0, 0, 1, 1], [], []>} : vector<8x72xbf16>, vector<72x896xbf16>, vector<8x896xf32> -> vector<8x896xf32>
    %90 = vector.extract_strided_slice %76 {offsets = [0, 117], sizes = [8, 896], strides = [1, 1]} : vector<8x1152xbf16> to vector<8x896xbf16>
    %91 = vector.extract_strided_slice %76 {offsets = [0, 118], sizes = [8, 896], strides = [1, 1]} : vector<8x1152xbf16> to vector<8x896xbf16>
    %92 = vector.extract_strided_slice %76 {offsets = [0, 119], sizes = [8, 896], strides = [1, 1]} : vector<8x1152xbf16> to vector<8x896xbf16>
    %93 = vector.extract_strided_slice %76 {offsets = [0, 127], sizes = [8, 896], strides = [1, 1]} : vector<8x1152xbf16> to vector<8x896xbf16>
    %94 = vector.extract_strided_slice %76 {offsets = [0, 128], sizes = [8, 896], strides = [1, 1]} : vector<8x1152xbf16> to vector<8x896xbf16>
    %95 = vector.extract_strided_slice %76 {offsets = [0, 129], sizes = [8, 896], strides = [1, 1]} : vector<8x1152xbf16> to vector<8x896xbf16>
    %96 = vector.extract_strided_slice %76 {offsets = [0, 137], sizes = [8, 896], strides = [1, 1]} : vector<8x1152xbf16> to vector<8x896xbf16>
    %97 = vector.extract_strided_slice %76 {offsets = [0, 138], sizes = [8, 896], strides = [1, 1]} : vector<8x1152xbf16> to vector<8x896xbf16>
    %98 = vector.extract_strided_slice %76 {offsets = [0, 139], sizes = [8, 896], strides = [1, 1]} : vector<8x1152xbf16> to vector<8x896xbf16>
    %99 = tpu.concatenate %90, %91, %92, %93, %94, %95, %96, %97, %98 in 0 : vector<8x896xbf16>, vector<8x896xbf16>, vector<8x896xbf16>, vector<8x896xbf16>, vector<8x896xbf16>, vector<8x896xbf16>, vector<8x896xbf16>, vector<8x896xbf16>, vector<8x896xbf16> -> vector<72x896xbf16>
    %c1_32 = arith.constant 1 : index
    %c0_33 = arith.constant 0 : index
    %c0_34 = arith.constant 0 : index
    %100 = vector.load %arg3[%c1_32, %c0_33, %c0_34] : memref<3x8x72xbf16, #tpu.memory_space<vmem>>, vector<1x8x72xbf16>
    %101 = vector.shape_cast %100 : vector<1x8x72xbf16> to vector<8x72xbf16>
    %cst_35 = arith.constant dense<0.000000e+00> : vector<8x896xf32>
    %102 = tpu.matmul %101, %99, %cst_35 {dimension_numbers = #tpu.dot_dimension_numbers<[1], [0], [0], [1], [0, 0, 1, 1], [], []>} : vector<8x72xbf16>, vector<72x896xbf16>, vector<8x896xf32> -> vector<8x896xf32>
    %103 = arith.addf %89, %102 : vector<8x896xf32>
    %104 = vector.extract_strided_slice %76 {offsets = [0, 217], sizes = [8, 896], strides = [1, 1]} : vector<8x1152xbf16> to vector<8x896xbf16>
    %105 = vector.extract_strided_slice %76 {offsets = [0, 218], sizes = [8, 896], strides = [1, 1]} : vector<8x1152xbf16> to vector<8x896xbf16>
    %106 = vector.extract_strided_slice %76 {offsets = [0, 219], sizes = [8, 896], strides = [1, 1]} : vector<8x1152xbf16> to vector<8x896xbf16>
    %107 = vector.extract_strided_slice %76 {offsets = [0, 227], sizes = [8, 896], strides = [1, 1]} : vector<8x1152xbf16> to vector<8x896xbf16>
    %108 = vector.extract_strided_slice %76 {offsets = [0, 228], sizes = [8, 896], strides = [1, 1]} : vector<8x1152xbf16> to vector<8x896xbf16>
    %109 = vector.extract_strided_slice %76 {offsets = [0, 229], sizes = [8, 896], strides = [1, 1]} : vector<8x1152xbf16> to vector<8x896xbf16>
    %110 = vector.extract_strided_slice %76 {offsets = [0, 237], sizes = [8, 896], strides = [1, 1]} : vector<8x1152xbf16> to vector<8x896xbf16>
    %111 = vector.extract_strided_slice %76 {offsets = [0, 238], sizes = [8, 896], strides = [1, 1]} : vector<8x1152xbf16> to vector<8x896xbf16>
    %112 = vector.extract_strided_slice %76 {offsets = [0, 239], sizes = [8, 896], strides = [1, 1]} : vector<8x1152xbf16> to vector<8x896xbf16>
    %113 = tpu.concatenate %104, %105, %106, %107, %108, %109, %110, %111, %112 in 0 : vector<8x896xbf16>, vector<8x896xbf16>, vector<8x896xbf16>, vector<8x896xbf16>, vector<8x896xbf16>, vector<8x896xbf16>, vector<8x896xbf16>, vector<8x896xbf16>, vector<8x896xbf16> -> vector<72x896xbf16>
    %c2_36 = arith.constant 2 : index
    %c0_37 = arith.constant 0 : index
    %c0_38 = arith.constant 0 : index
    %114 = vector.load %arg3[%c2_36, %c0_37, %c0_38] : memref<3x8x72xbf16, #tpu.memory_space<vmem>>, vector<1x8x72xbf16>
    %115 = vector.shape_cast %114 : vector<1x8x72xbf16> to vector<8x72xbf16>
    %cst_39 = arith.constant dense<0.000000e+00> : vector<8x896xf32>
    %116 = tpu.matmul %115, %113, %cst_39 {dimension_numbers = #tpu.dot_dimension_numbers<[1], [0], [0], [1], [0, 0, 1, 1], [], []>} : vector<8x72xbf16>, vector<72x896xbf16>, vector<8x896xf32> -> vector<8x896xf32>
    %117 = arith.addf %103, %116 : vector<8x896xf32>
    %118 = vector.broadcast %2 : vector<1x896xf32> to vector<8x896xf32>
    %119 = arith.mulf %117, %118 : vector<8x896xf32>
    %cst_40 = arith.constant dense<0.000000e+00> : vector<8xf32>
    %120 = vector.multi_reduction <add>, %119, %cst_40 [1] : vector<8x896xf32> to vector<8xf32>
    %121 = vector.shape_cast %120 : vector<8xf32> to vector<8x1xf32>
    %122 = arith.mulf %119, %117 : vector<8x896xf32>
    %cst_41 = arith.constant dense<0.000000e+00> : vector<8xf32>
    %123 = vector.multi_reduction <add>, %122, %cst_41 [1] : vector<8x896xf32> to vector<8xf32>
    %124 = vector.shape_cast %123 : vector<8xf32> to vector<8x1xf32>
    %cst_42 = arith.constant 0.001953125 : f32
    %125 = vector.broadcast %cst_42 : f32 to vector<8x1xf32>
    %126 = arith.mulf %121, %125 : vector<8x1xf32>
    %cst_43 = arith.constant 0.001953125 : f32
    %127 = vector.broadcast %cst_43 : f32 to vector<8x1xf32>
    %128 = arith.mulf %124, %127 : vector<8x1xf32>
    %129 = arith.mulf %126, %126 : vector<8x1xf32>
    %130 = arith.subf %128, %129 : vector<8x1xf32>
    %cst_44 = arith.constant 0.000000e+00 : f32
    %131 = vector.broadcast %cst_44 : f32 to vector<8x1xf32>
    %132 = arith.maximumf %130, %131 : vector<8x1xf32>
    %133 = vector.broadcast %126 : vector<8x1xf32> to vector<8x896xf32>
    %134 = arith.subf %117, %133 : vector<8x896xf32>
    %cst_45 = arith.constant 9.99999974E-6 : f32
    %135 = vector.broadcast %cst_45 : f32 to vector<8x1xf32>
    %136 = arith.addf %132, %135 : vector<8x1xf32>
    %137 = math.rsqrt %136 : vector<8x1xf32>
    %138 = vector.broadcast %137 : vector<8x1xf32> to vector<8x896xf32>
    %139 = arith.mulf %134, %138 : vector<8x896xf32>
    %140 = vector.broadcast %2 : vector<1x896xf32> to vector<8x896xf32>
    %141 = arith.mulf %139, %140 : vector<8x896xf32>
    %142 = vector.extract_strided_slice %1 {offsets = [0, 111], sizes = [8, 896], strides = [1, 1]} : vector<8x1152xbf16> to vector<8x896xbf16>
    %143 = arith.extf %142 : vector<8x896xbf16> to vector<8x896xf32>
    %144 = arith.addf %141, %143 : vector<8x896xf32>
    %cst_46 = arith.constant 0.000000e+00 : f32
    %145 = vector.broadcast %cst_46 : f32 to vector<8x896xf32>
    %146 = arith.maximumf %144, %145 : vector<8x896xf32>
    %c0_47 = arith.constant 0 : index
    %c0_48 = arith.constant 0 : index
    %c0_49 = arith.constant 0 : index
    %147 = vector.load %arg5[%c0_47, %c0_48, %c0_49] : memref<1x8x896xf32, #tpu.memory_space<vmem>>, vector<1x8x896xf32>
    %148 = vector.shape_cast %147 : vector<1x8x896xf32> to vector<8x896xf32>
    %149 = vector.shape_cast %146 : vector<8x896xf32> to vector<1x8x896xf32>
    tpu.vector_store %arg5[%c0_47, %c0_48, %c0_49], %149 {strides = array<i32>} : memref<1x8x896xf32, #tpu.memory_space<vmem>>, vector<1x8x896xf32>,
    return
  }
  func.func @transform_0(%arg0: i32) -> (i32, i32, i32) {
    %c0_i32 = arith.constant 0 : i32
    %c0_i32_0 = arith.constant 0 : i32
    %c0_i32_1 = arith.constant 0 : i32
    return %arg0, %c0_i32, %c0_i32_0 : i32, i32, i32
  }
  func.func @transform_1(%arg0: i32) -> (i32, i32, i32) {
    %c0_i32 = arith.constant 0 : i32
    %c0_i32_0 = arith.constant 0 : i32
    %c0_i32_1 = arith.constant 0 : i32
    %c0_i32_2 = arith.constant 0 : i32
    return %c0_i32, %c0_i32_0, %c0_i32_1 : i32, i32, i32
  }
  func.func @transform_2(%arg0: i32) -> (i32, i32, i32) {
    %c0_i32 = arith.constant 0 : i32
    %c0_i32_0 = arith.constant 0 : i32
    %c0_i32_1 = arith.constant 0 : i32
    %c0_i32_2 = arith.constant 0 : i32
    return %c0_i32, %c0_i32_0, %c0_i32_1 : i32, i32, i32
  }
  func.func @transform_3(%arg0: i32) -> (i32, i32) {
    %c0_i32 = arith.constant 0 : i32
    %c0_i32_0 = arith.constant 0 : i32
    %c0_i32_1 = arith.constant 0 : i32
    return %c0_i32, %c0_i32_0 : i32, i32
  }
  func.func @transform_4(%arg0: i32) -> (i32, i32, i32) {
    %c0_i32 = arith.constant 0 : i32
    %c0_i32_0 = arith.constant 0 : i32
    %c0_i32_1 = arith.constant 0 : i32
    return %arg0, %c0_i32, %c0_i32_0 : i32, i32, i32
  }
}

</mosaic_0001>

<llo_original>
// kernel: basic_block_forward.1
$region0: #{basic_block_forward.1}
  #allocation0 [shape = 'u32[]', space=smem, size = 0x4, offset = 0x4, fixed_abs, tag = 'smem constant byte address 0x4 - core index']
  #allocation1 [shape = 'u32[144,128]{1,0:T(1,128)}', space=vmem, size = 0x12000, scoped, tag = 'internal scratch']
  #allocation2 [shape = 'bf16[8,1152]{1,0:T(8,128)(2,1)}', space=vmem, size = 0x4800, scoped, tag = 'scratch operand']
  %s0 = inlined_call_operand.vmem [shape: bf16[2,8,1152], index: 0, kind: input, shape index: {}]
  %s1 = inlined_call_operand.vmem [shape: bf16[3,8,72], index: 1, kind: input, shape index: {}]
  %s2 = inlined_call_operand.vmem [shape: bf16[3,8,72], index: 2, kind: input, shape index: {}]
  %s3 = inlined_call_operand.vmem [shape: f32[1,896], index: 3, kind: input, shape index: {}]
  %s4 = inlined_call_operand.vmem [shape: f32[2,8,896], index: 4, kind: output, shape index: {}]
  %s5 = sld [smem:[#allocation0]]
  $region49: #{basic_block_forward.1} parent=0
    _
  %s7 = ssub.s32 1, %s5
  %s8 = scalar_select 0, %s7, %s5
  loop: start=0, step=1, limit=4
  $region2: #{basic_block_forward.1} parent=0 // loop_pre_header
    _
  $region3: #{basic_block_forward.1} parent=0 // loop_header
    %s10 = sphi 0, %s14
    %p11 = scmp.ge.s32.totalorder %s10, 4
    %s20 = sphi 0, %s22
    %s23 = sphi 0, %s20
    %s24 = sphi 0, %s23
    %s40 = sphi 0, %s24
    %s44 = sphi 0, %s44
    %s46 = sphi 0, %s44
    %s47 = sphi 0, %s46
    %s61 = sphi 0, %s47
    %s65 = sphi 0, %s65
    %s67 = sphi 0, %s65
    %s68 = sphi 0, %s67
    %s82 = sphi 0, %s68
    %s86 = sphi 0, %s86
    %s88 = sphi 0, %s86
    %s89 = sphi 0, %s88
    %s103 = sphi 0, %s89
    %s109 = sphi 0, %s111
    %s112 = sphi 0, %s109
    %s113 = sphi 0, %s112
    %s129 = sphi 0, %s113
  $region4: #{basic_block_forward.1} parent=0 // loop_header_branch
    %13 = sbr.rel (%p11) target = $region8
  $region5: #{basic_block_forward.1} parent=0 // loop_body
    %s15 = ssub.s32 %s10, 1
    %s16 = ssub.s32 %s10, 2
    %s17 = sadd.s32 %s10, 1
    %s18 = ssub.s32 %s10, %s17
    %p19 = scmp.eq.s32.totalorder %s18, 0
    %s21 = sadd.s32 %s20, 1
    %s22 = scalar_select %p19, %s20, %s21
    %p25 = pneg %p19
    %p26 = scmp.eq.s32.totalorder %s10, 1
    %p27 = por %p25, %p26
    %p28 = scmp.ne.s32.totalorder %s20, %s23
    %p29 = scmp.eq.s32.totalorder %s10, 0
    %p30 = por %p28, %p29
    %p31 = scmp.ne.s32.totalorder %s20, %s23
    %p32 = scmp.eq.s32.totalorder %s15, 1
    %p33 = por %p31, %p32
    %p34 = scmp.ne.s32.totalorder %s23, %s24
    %p35 = scmp.eq.s32.totalorder %s15, 0
    %p36 = por %p34, %p35
    %p37 = scmp.ne.s32.totalorder %s23, %s24
    %p38 = scmp.eq.s32.totalorder %s16, 1
    %p39 = por %p37, %p38
    %p41 = scmp.ne.s32.totalorder %s24, %s40
    %p42 = scmp.eq.s32.totalorder %s16, 0
    %p43 = por %p41, %p42
    %s45 = sadd.s32 %s44, 1
    %p48 = scmp.eq.s32.totalorder %s10, 1
    %p49 = scmp.ne.s32.totalorder %s44, %s46
    %p50 = scmp.eq.s32.totalorder %s10, 0
    %p51 = por %p49, %p50
    %p52 = scmp.ne.s32.totalorder %s44, %s46
    %p53 = scmp.eq.s32.totalorder %s15, 1
    %p54 = por %p52, %p53
    %p55 = scmp.ne.s32.totalorder %s46, %s47
    %p56 = scmp.eq.s32.totalorder %s15, 0
    %p57 = por %p55, %p56
    %p58 = scmp.ne.s32.totalorder %s46, %s47
    %p59 = scmp.eq.s32.totalorder %s16, 1
    %p60 = por %p58, %p59
    %p62 = scmp.ne.s32.totalorder %s47, %s61
    %p63 = scmp.eq.s32.totalorder %s16, 0
    %p64 = por %p62, %p63
    %s66 = sadd.s32 %s65, 1
    %p69 = scmp.eq.s32.totalorder %s10, 1
    %p70 = scmp.ne.s32.totalorder %s65, %s67
    %p71 = scmp.eq.s32.totalorder %s10, 0
    %p72 = por %p70, %p71
    %p73 = scmp.ne.s32.totalorder %s65, %s67
    %p74 = scmp.eq.s32.totalorder %s15, 1
    %p75 = por %p73, %p74
    %p76 = scmp.ne.s32.totalorder %s67, %s68
    %p77 = scmp.eq.s32.totalorder %s15, 0
    %p78 = por %p76, %p77
    %p79 = scmp.ne.s32.totalorder %s67, %s68
    %p80 = scmp.eq.s32.totalorder %s16, 1
    %p81 = por %p79, %p80
    %p83 = scmp.ne.s32.totalorder %s68, %s82
    %p84 = scmp.eq.s32.totalorder %s16, 0
    %p85 = por %p83, %p84
    %s87 = sadd.s32 %s86, 1
    %p90 = scmp.eq.s32.totalorder %s10, 1
    %p91 = scmp.ne.s32.totalorder %s86, %s88
    %p92 = scmp.eq.s32.totalorder %s10, 0
    %p93 = por %p91, %p92
    %p94 = scmp.ne.s32.totalorder %s86, %s88
    %p95 = scmp.eq.s32.totalorder %s15, 1
    %p96 = por %p94, %p95
    %p97 = scmp.ne.s32.totalorder %s88, %s89
    %p98 = scmp.eq.s32.totalorder %s15, 0
    %p99 = por %p97, %p98
    %p100 = scmp.ne.s32.totalorder %s88, %s89
    %p101 = scmp.eq.s32.totalorder %s16, 1
    %p102 = por %p100, %p101
    %p104 = scmp.ne.s32.totalorder %s89, %s103
    %p105 = scmp.eq.s32.totalorder %s16, 0
    %p106 = por %p104, %p105
    %s107 = ssub.s32 %s10, %s17
    %p108 = scmp.eq.s32.totalorder %s107, 0
    %s110 = sadd.s32 %s109, 1
    %s111 = scalar_select %p108, %s109, %s110
    %p114 = pneg %p108
    %p115 = scmp.eq.s32.totalorder %s10, 1
    %p116 = por %p114, %p115
    %p117 = scmp.ne.s32.totalorder %s109, %s112
    %p118 = scmp.eq.s32.totalorder %s10, 0
    %p119 = por %p117, %p118
    %p120 = scmp.ne.s32.totalorder %s109, %s112
    %p121 = scmp.eq.s32.totalorder %s15, 1
    %p122 = por %p120, %p121
    %p123 = scmp.ne.s32.totalorder %s112, %s113
    %p124 = scmp.eq.s32.totalorder %s15, 0
    %p125 = por %p123, %p124
    %p126 = scmp.ne.s32.totalorder %s112, %s113
    %p127 = scmp.eq.s32.totalorder %s16, 1
    %p128 = por %p126, %p127
    %p130 = scmp.ne.s32.totalorder %s113, %s129
    %p131 = scmp.eq.s32.totalorder %s16, 0
    %p132 = por %p130, %p131
    %p133 = scmp.le.s32.totalorder 1, %s10
    %p134 = scmp.lt.s32.totalorder %s10, 3
    %p135 = pnand %p133, %p134
    %p136 = pneg %p135
    // Predicated region
    $region9: #{basic_block_forward.1} parent=5 // pred_check
      _
    $region10: #{basic_block_forward.1} parent=5 // pred_check_branch
      %138 = sbr.rel (%p135) target = $region12
    $region11: #{basic_block_forward.1} parent=5 // pred_region
      %s139 = ssub.s32 %s10, 1
      // Predicated region
      $region13: #{basic_block_forward.1} parent=11 // pred_check
        %p140 = pneg %p57
      $region14: #{basic_block_forward.1} parent=11 // pred_check_branch
        %142 = sbr.rel (%p140) target = $region16
      $region15: #{basic_block_forward.1} parent=11 // pred_region
        _
      $region16: #{basic_block_forward.1} parent=11 // pred_fallthru
        _
      // Predicated region
      $region17: #{basic_block_forward.1} parent=11 // pred_check
        %p143 = pneg %p78
      $region18: #{basic_block_forward.1} parent=11 // pred_check_branch
        %145 = sbr.rel (%p143) target = $region20
      $region19: #{basic_block_forward.1} parent=11 // pred_region
        _
      $region20: #{basic_block_forward.1} parent=11 // pred_fallthru
        _
      // Predicated region
      $region21: #{basic_block_forward.1} parent=11 // pred_check
        %p146 = pneg %p99
      $region22: #{basic_block_forward.1} parent=11 // pred_check_branch
        %148 = sbr.rel (%p146) target = $region24
      $region23: #{basic_block_forward.1} parent=11 // pred_region
        _
      $region24: #{basic_block_forward.1} parent=11 // pred_fallthru
        _
    $region12: #{basic_block_forward.1} parent=5 // pred_fallthru
      _
    %p149 = scmp.lt.s32.totalorder %s10, 2
    // Predicated region
    $region25: #{basic_block_forward.1} parent=5 // pred_check
      %p150 = pneg %p149
    $region26: #{basic_block_forward.1} parent=5 // pred_check_branch
      %152 = sbr.rel (%p150) target = $region28
    $region27: #{basic_block_forward.1} parent=5 // pred_region
      // Predicated region
      $region29: #{basic_block_forward.1} parent=27 // pred_check
        %p153 = pneg %p30
      $region30: #{basic_block_forward.1} parent=27 // pred_check_branch
        %155 = sbr.rel (%p153) target = $region32
      $region31: #{basic_block_forward.1} parent=27 // pred_region
        %p156 = scmp.lt.s32.totalorder %s10, 1
        %s157 = scalar_select %p156, %s10, 1
        %s158 = smul.addr %s157, 9
        %s159 = smul.addr %s158, 4
        %s160 = scalar_lea.vmem %s0, %s159
      $region32: #{basic_block_forward.1} parent=27 // pred_fallthru
        _
    $region28: #{basic_block_forward.1} parent=5 // pred_fallthru
      _
    %p161 = scmp.le.s32.totalorder 1, %s10
    %p162 = scmp.lt.s32.totalorder %s10, 3
    %p163 = pnand %p161, %p162
    %p164 = pneg %p163
    // Predicated region
    $region33: #{basic_block_forward.1} parent=5 // pred_check
      _
    $region34: #{basic_block_forward.1} parent=5 // pred_check_branch
      %166 = sbr.rel (%p163) target = $region36
    $region35: #{basic_block_forward.1} parent=5 // pred_region
      %s167 = ssub.s32 %s10, 1
      %p168 = scmp.lt.s32.totalorder %s15, 1
      %s169 = scalar_select %p168, %s15, 1
      %s170 = smul.addr %s169, 9
      %s171 = smul.addr %s170, 4
      %s172 = scalar_lea.vmem %s0, %s171
      %p173 = pneg %p36
      %p174 = pneg %p33
      %p175 = pneg %p57
      %p176 = pneg %p54
      %p177 = pneg %p78
      %p178 = pneg %p75
      %p179 = pneg %p99
      %p180 = pneg %p96
      %p181 = pneg %p125
      %p182 = pneg %p122
      %p183 = scmp.lt.s32.totalorder %s15, 1
      %s184 = scalar_select %p183, %s15, 1
      %s185 = smul.addr %s184, 7
      %s186 = smul.addr %s185, 8
      %s187 = scalar_lea.vmem %s4, %s186
      %p188 = scmp.lt.s32.totalorder %s15, 1
      %s189 = scalar_select %p188, %s15, 1
      %s190 = smul.addr %s189, 9
      %s191 = smul.addr %s190, 4
      %s192 = scalar_lea.vmem %s0, %s191
      %p193 = scmp.lt.s32.totalorder %s15, 1
      %s194 = scalar_select %p193, %s15, 1
      %s195 = smul.addr %s194, 7
      %s196 = smul.addr %s195, 8
      %s197 = scalar_lea.vmem %s4, %s196
      %v199 = vld [vmem:[%s192] sm:$0xff]
      %v200 = vld [vmem:[%s192 + $0x8] sm:$0xff]
      %v201 = vld [vmem:[%s192 + $0x10] sm:$0xff]
      %v202 = vld [vmem:[%s192 + $0x18] sm:$0xff]
      %v203 = vld [vmem:[%s192 + $0x20] sm:$0xf]
      %v204 = vld [vmem:[%s3] sm:$0xff]
      %v209 = vunpack.c.l.b16 %v199
      %v210 = vunpack.c.h.b16 %v199
      %v211 = vunpack.c.l.b16 %v200
      %v212 = vunpack.c.h.b16 %v200
      %v213 = vunpack.c.l.b16 %v201
      %v214 = vunpack.c.h.b16 %v201
      %v215 = vunpack.c.l.b16 %v202
      %v216 = vpack.c.b16 %v209, %v209
      %v217 = vpack.c.b16 %v210, %v210
      %v218 = vpack.c.b16 %v211, %v211
      %v219 = vpack.c.b16 %v212, %v212
      %v220 = vpack.c.b16 %v213, %v213
      %v221 = vpack.c.b16 %v214, %v214
      %v222 = vpack.c.b16 %v215, %v215
      %v223 = vunpack.c.h.b16 %v202
      %v224 = vpack.c.b16 %v223, %v223
      %225 = vrot.lane.b32.xlu0 %v216, 127
      %v226 = vpop.permute.xlu0 %225
      %227 = vrot.lane.b32.xlu0 %v217, 127
      %v228 = vpop.permute.xlu0 %227
      %229 = vrot.lane.b32.xlu0 %v218, 127
      %v230 = vpop.permute.xlu0 %229
      %231 = vrot.lane.b32.xlu0 %v219, 127
      %v232 = vpop.permute.xlu0 %231
      %233 = vrot.lane.b32.xlu0 %v220, 127
      %v234 = vpop.permute.xlu0 %233
      %235 = vrot.lane.b32.xlu0 %v221, 127
      %v236 = vpop.permute.xlu0 %235
      %237 = vrot.lane.b32.xlu0 %v222, 127
      %v238 = vpop.permute.xlu0 %237
      %239 = vrot.lane.b32.xlu0 %v224, 127
      %v240 = vpop.permute.xlu0 %239
      %vm241 = vcmask 1039360
      %v242 = vsel %vm241, %v226, %v228
      %v243 = vsel %vm241, %v228, %v230
      %v244 = vsel %vm241, %v230, %v232
      %v245 = vsel %vm241, %v232, %v234
      %v246 = vsel %vm241, %v234, %v236
      %v247 = vsel %vm241, %v236, %v238
      %v248 = vsel %vm241, %v238, %v240
      %249 = vrot.lane.b32.xlu0 %v216, 126
      %v250 = vpop.permute.xlu0 %249
      %251 = vrot.lane.b32.xlu0 %v217, 126
      %v252 = vpop.permute.xlu0 %251
      %253 = vrot.lane.b32.xlu0 %v218, 126
      %v254 = vpop.permute.xlu0 %253
      %255 = vrot.lane.b32.xlu0 %v219, 126
      %v256 = vpop.permute.xlu0 %255
      %257 = vrot.lane.b32.xlu0 %v220, 126
      %v258 = vpop.permute.xlu0 %257
      %259 = vrot.lane.b32.xlu0 %v221, 126
      %v260 = vpop.permute.xlu0 %259
      %261 = vrot.lane.b32.xlu0 %v222, 126
      %v262 = vpop.permute.xlu0 %261
      %263 = vrot.lane.b32.xlu0 %v224, 126
      %v264 = vpop.permute.xlu0 %263
      %vm265 = vcmask 1031168
      %v266 = vsel %vm265, %v250, %v252
      %v267 = vsel %vm265, %v252, %v254
      %v268 = vsel %vm265, %v254, %v256
      %v269 = vsel %vm265, %v256, %v258
      %v270 = vsel %vm265, %v258, %v260
      %v271 = vsel %vm265, %v260, %v262
      %v272 = vsel %vm265, %v262, %v264
      %273 = vrot.lane.b32.xlu0 %v216, 118
      %v274 = vpop.permute.xlu0 %273
      %275 = vrot.lane.b32.xlu0 %v217, 118
      %v276 = vpop.permute.xlu0 %275
      %277 = vrot.lane.b32.xlu0 %v218, 118
      %v278 = vpop.permute.xlu0 %277
      %279 = vrot.lane.b32.xlu0 %v219, 118
      %v280 = vpop.permute.xlu0 %279
      %281 = vrot.lane.b32.xlu0 %v220, 118
      %v282 = vpop.permute.xlu0 %281
      %283 = vrot.lane.b32.xlu0 %v221, 118
      %v284 = vpop.permute.xlu0 %283
      %285 = vrot.lane.b32.xlu0 %v222, 118
      %v286 = vpop.permute.xlu0 %285
      %287 = vrot.lane.b32.xlu0 %v224, 118
      %v288 = vpop.permute.xlu0 %287
      %vm289 = vcmask 965632
      %v290 = vsel %vm289, %v274, %v276
      %v291 = vsel %vm289, %v276, %v278
      %v292 = vsel %vm289, %v278, %v280
      %v293 = vsel %vm289, %v280, %v282
      %v294 = vsel %vm289, %v282, %v284
      %v295 = vsel %vm289, %v284, %v286
      %v296 = vsel %vm289, %v286, %v288
      %297 = vrot.lane.b32.xlu0 %v216, 117
      %v298 = vpop.permute.xlu0 %297
      %299 = vrot.lane.b32.xlu0 %v217, 117
      %v300 = vpop.permute.xlu0 %299
      %301 = vrot.lane.b32.xlu0 %v218, 117
      %v302 = vpop.permute.xlu0 %301
      %303 = vrot.lane.b32.xlu0 %v219, 117
      %v304 = vpop.permute.xlu0 %303
      %305 = vrot.lane.b32.xlu0 %v220, 117
      %v306 = vpop.permute.xlu0 %305
      %307 = vrot.lane.b32.xlu0 %v221, 117
      %v308 = vpop.permute.xlu0 %307
      %309 = vrot.lane.b32.xlu0 %v222, 117
      %v310 = vpop.permute.xlu0 %309
      %311 = vrot.lane.b32.xlu0 %v224, 117
      %v312 = vpop.permute.xlu0 %311
      %vm313 = vcmask 957440
      %v314 = vsel %vm313, %v298, %v300
      %v315 = vsel %vm313, %v300, %v302
      %v316 = vsel %vm313, %v302, %v304
      %v317 = vsel %vm313, %v304, %v306
      %v318 = vsel %vm313, %v306, %v308
      %v319 = vsel %vm313, %v308, %v310
      %v320 = vsel %vm313, %v310, %v312
      %321 = vrot.lane.b32.xlu0 %v216, 116
      %v322 = vpop.permute.xlu0 %321
      %323 = vrot.lane.b32.xlu0 %v217, 116
      %v324 = vpop.permute.xlu0 %323
      %325 = vrot.lane.b32.xlu0 %v218, 116
      %v326 = vpop.permute.xlu0 %325
      %327 = vrot.lane.b32.xlu0 %v219, 116
      %v328 = vpop.permute.xlu0 %327
      %329 = vrot.lane.b32.xlu0 %v220, 116
      %v330 = vpop.permute.xlu0 %329
      %331 = vrot.lane.b32.xlu0 %v221, 116
      %v332 = vpop.permute.xlu0 %331
      %333 = vrot.lane.b32.xlu0 %v222, 116
      %v334 = vpop.permute.xlu0 %333
      %335 = vrot.lane.b32.xlu0 %v224, 116
      %v336 = vpop.permute.xlu0 %335
      %vm337 = vcmask 949248
      %v338 = vsel %vm337, %v322, %v324
      %v339 = vsel %vm337, %v324, %v326
      %v340 = vsel %vm337, %v326, %v328
      %v341 = vsel %vm337, %v328, %v330
      %v342 = vsel %vm337, %v330, %v332
      %v343 = vsel %vm337, %v332, %v334
      %v344 = vsel %vm337, %v334, %v336
      %345 = vrot.lane.b32.xlu0 %v216, 108
      %v346 = vpop.permute.xlu0 %345
      %347 = vrot.lane.b32.xlu0 %v217, 108
      %v348 = vpop.permute.xlu0 %347
      %349 = vrot.lane.b32.xlu0 %v218, 108
      %v350 = vpop.permute.xlu0 %349
      %351 = vrot.lane.b32.xlu0 %v219, 108
      %v352 = vpop.permute.xlu0 %351
      %353 = vrot.lane.b32.xlu0 %v220, 108
      %v354 = vpop.permute.xlu0 %353
      %355 = vrot.lane.b32.xlu0 %v221, 108
      %v356 = vpop.permute.xlu0 %355
      %357 = vrot.lane.b32.xlu0 %v222, 108
      %v358 = vpop.permute.xlu0 %357
      %359 = vrot.lane.b32.xlu0 %v224, 108
      %v360 = vpop.permute.xlu0 %359
      %vm361 = vcmask 883712
      %v362 = vsel %vm361, %v346, %v348
      %v363 = vsel %vm361, %v348, %v350
      %v364 = vsel %vm361, %v350, %v352
      %v365 = vsel %vm361, %v352, %v354
      %v366 = vsel %vm361, %v354, %v356
      %v367 = vsel %vm361, %v356, %v358
      %v368 = vsel %vm361, %v358, %v360
      %369 = vrot.lane.b32.xlu0 %v216, 107
      %v370 = vpop.permute.xlu0 %369
      %371 = vrot.lane.b32.xlu0 %v217, 107
      %v372 = vpop.permute.xlu0 %371
      %373 = vrot.lane.b32.xlu0 %v218, 107
      %v374 = vpop.permute.xlu0 %373
      %375 = vrot.lane.b32.xlu0 %v219, 107
      %v376 = vpop.permute.xlu0 %375
      %377 = vrot.lane.b32.xlu0 %v220, 107
      %v378 = vpop.permute.xlu0 %377
      %379 = vrot.lane.b32.xlu0 %v221, 107
      %v380 = vpop.permute.xlu0 %379
      %381 = vrot.lane.b32.xlu0 %v222, 107
      %v382 = vpop.permute.xlu0 %381
      %383 = vrot.lane.b32.xlu0 %v224, 107
      %v384 = vpop.permute.xlu0 %383
      %vm385 = vcmask 875520
      %v386 = vsel %vm385, %v370, %v372
      %v387 = vsel %vm385, %v372, %v374
      %v388 = vsel %vm385, %v374, %v376
      %v389 = vsel %vm385, %v376, %v378
      %v390 = vsel %vm385, %v378, %v380
      %v391 = vsel %vm385, %v380, %v382
      %v392 = vsel %vm385, %v382, %v384
      %393 = vrot.lane.b32.xlu0 %v216, 106
      %v394 = vpop.permute.xlu0 %393
      %395 = vrot.lane.b32.xlu0 %v217, 106
      %v396 = vpop.permute.xlu0 %395
      %397 = vrot.lane.b32.xlu0 %v218, 106
      %v398 = vpop.permute.xlu0 %397
      %399 = vrot.lane.b32.xlu0 %v219, 106
      %v400 = vpop.permute.xlu0 %399
      %401 = vrot.lane.b32.xlu0 %v220, 106
      %v402 = vpop.permute.xlu0 %401
      %403 = vrot.lane.b32.xlu0 %v221, 106
      %v404 = vpop.permute.xlu0 %403
      %405 = vrot.lane.b32.xlu0 %v222, 106
      %v406 = vpop.permute.xlu0 %405
      %407 = vrot.lane.b32.xlu0 %v224, 106
      %v408 = vpop.permute.xlu0 %407
      %vm409 = vcmask 867328
      %v410 = vsel %vm409, %v394, %v396
      %v411 = vsel %vm409, %v396, %v398
      %v412 = vsel %vm409, %v398, %v400
      %v413 = vsel %vm409, %v400, %v402
      %v414 = vsel %vm409, %v402, %v404
      %v415 = vsel %vm409, %v404, %v406
      %v416 = vsel %vm409, %v406, %v408
      %vm417 = vcmask 1043456
      %v420 = vsel %vm417, %v216, %v242
      %v424 = vsel %vm417, %v217, %v243
      %v428 = vsel %vm417, %v218, %v244
      %v432 = vsel %vm417, %v219, %v245
      %v436 = vsel %vm417, %v220, %v246
      %v440 = vsel %vm417, %v221, %v247
      %v444 = vsel %vm417, %v222, %v248
      %v448 = vsel %vm417, %v266, %v290
      %v452 = vsel %vm417, %v267, %v291
      %v456 = vsel %vm417, %v268, %v292
      %v460 = vsel %vm417, %v269, %v293
      %v464 = vsel %vm417, %v270, %v294
      %v468 = vsel %vm417, %v271, %v295
      %v472 = vsel %vm417, %v272, %v296
      %v476 = vsel %vm417, %v314, %v338
      %v480 = vsel %vm417, %v315, %v339
      %v484 = vsel %vm417, %v316, %v340
      %v488 = vsel %vm417, %v317, %v341
      %v492 = vsel %vm417, %v318, %v342
      %v496 = vsel %vm417, %v319, %v343
      %v500 = vsel %vm417, %v320, %v344
      %v504 = vsel %vm417, %v362, %v386
      %v508 = vsel %vm417, %v363, %v387
      %v512 = vsel %vm417, %v364, %v388
      %v516 = vsel %vm417, %v365, %v389
      %v520 = vsel %vm417, %v366, %v390
      %v524 = vsel %vm417, %v367, %v391
      %v528 = vsel %vm417, %v368, %v392
      %v530 = vld [vmem:[%s1] sm:$0xf]
      %v533 = vsel %vm417, %v224, %v240
      %v536 = vsel %vm417, %v264, %v288
      %v539 = vsel %vm417, %v312, %v336
      %v542 = vsel %vm417, %v360, %v384
      %s543 = scalar_lea.vmem %s1, 4
      %v544 = vld [vmem:[%s543] sm:$0xf]
      %577 = vrot.lane.b32.xlu0 %v420, 28
      %v578 = vpop.permute.xlu0 %577
      %579 = vrot.lane.b32.xlu0 %v424, 28
      %v580 = vpop.permute.xlu0 %579
      %581 = vrot.lane.b32.xlu0 %v428, 28
      %v582 = vpop.permute.xlu0 %581
      %583 = vrot.lane.b32.xlu0 %v432, 28
      %v584 = vpop.permute.xlu0 %583
      %585 = vrot.lane.b32.xlu0 %v436, 28
      %v586 = vpop.permute.xlu0 %585
      %587 = vrot.lane.b32.xlu0 %v440, 28
      %v588 = vpop.permute.xlu0 %587
      %589 = vrot.lane.b32.xlu0 %v444, 28
      %v590 = vpop.permute.xlu0 %589
      %591 = vrot.lane.b32.xlu0 %v533, 28
      %v592 = vpop.permute.xlu0 %591
      %593 = vrot.lane.b32.xlu0 %v448, 28
      %v594 = vpop.permute.xlu0 %593
      %595 = vrot.lane.b32.xlu0 %v452, 28
      %v596 = vpop.permute.xlu0 %595
      %597 = vrot.lane.b32.xlu0 %v456, 28
      %v598 = vpop.permute.xlu0 %597
      %599 = vrot.lane.b32.xlu0 %v460, 28
      %v600 = vpop.permute.xlu0 %599
      %601 = vrot.lane.b32.xlu0 %v464, 28
      %v602 = vpop.permute.xlu0 %601
      %603 = vrot.lane.b32.xlu0 %v468, 28
      %v604 = vpop.permute.xlu0 %603
      %605 = vrot.lane.b32.xlu0 %v472, 28
      %v606 = vpop.permute.xlu0 %605
      %607 = vrot.lane.b32.xlu0 %v536, 28
      %v608 = vpop.permute.xlu0 %607
      %609 = vrot.lane.b32.xlu0 %v476, 28
      %v610 = vpop.permute.xlu0 %609
      %611 = vrot.lane.b32.xlu0 %v480, 28
      %v612 = vpop.permute.xlu0 %611
      %613 = vrot.lane.b32.xlu0 %v484, 28
      %v614 = vpop.permute.xlu0 %613
      %615 = vrot.lane.b32.xlu0 %v488, 28
      %v616 = vpop.permute.xlu0 %615
      %617 = vrot.lane.b32.xlu0 %v492, 28
      %v618 = vpop.permute.xlu0 %617
      %619 = vrot.lane.b32.xlu0 %v496, 28
      %v620 = vpop.permute.xlu0 %619
      %621 = vrot.lane.b32.xlu0 %v500, 28
      %v622 = vpop.permute.xlu0 %621
      %623 = vrot.lane.b32.xlu0 %v539, 28
      %v624 = vpop.permute.xlu0 %623
      %625 = vrot.lane.b32.xlu0 %v504, 28
      %v626 = vpop.permute.xlu0 %625
      %627 = vrot.lane.b32.xlu0 %v508, 28
      %v628 = vpop.permute.xlu0 %627
      %629 = vrot.lane.b32.xlu0 %v512, 28
      %v630 = vpop.permute.xlu0 %629
      %631 = vrot.lane.b32.xlu0 %v516, 28
      %v632 = vpop.permute.xlu0 %631
      %633 = vrot.lane.b32.xlu0 %v520, 28
      %v634 = vpop.permute.xlu0 %633
      %635 = vrot.lane.b32.xlu0 %v524, 28
      %v636 = vpop.permute.xlu0 %635
      %637 = vrot.lane.b32.xlu0 %v528, 28
      %v638 = vpop.permute.xlu0 %637
      %639 = vrot.lane.b32.xlu0 %v542, 28
      %v640 = vpop.permute.xlu0 %639
      %641 = vrot.lane.b32.xlu0 %v410, 28
      %v642 = vpop.permute.xlu0 %641
      %643 = vrot.lane.b32.xlu0 %v411, 28
      %v644 = vpop.permute.xlu0 %643
      %645 = vrot.lane.b32.xlu0 %v412, 28
      %v646 = vpop.permute.xlu0 %645
      %647 = vrot.lane.b32.xlu0 %v413, 28
      %v648 = vpop.permute.xlu0 %647
      %649 = vrot.lane.b32.xlu0 %v414, 28
      %v650 = vpop.permute.xlu0 %649
      %651 = vrot.lane.b32.xlu0 %v415, 28
      %v652 = vpop.permute.xlu0 %651
      %653 = vrot.lane.b32.xlu0 %v416, 28
      %v654 = vpop.permute.xlu0 %653
      %655 = vrot.lane.b32.xlu0 %v408, 28
      %v656 = vpop.permute.xlu0 %655
      %vm657 = vcmask 228352
      %v658 = vsel %vm657, %v578, %v580
      %v659 = vsel %vm657, %v580, %v582
      %v660 = vsel %vm657, %v582, %v584
      %v661 = vsel %vm657, %v584, %v586
      %v662 = vsel %vm657, %v586, %v588
      %v663 = vsel %vm657, %v588, %v590
      %v664 = vsel %vm657, %v590, %v592
      %v665 = vsel %vm657, %v594, %v596
      %v666 = vsel %vm657, %v596, %v598
      %v667 = vsel %vm657, %v598, %v600
      %v668 = vsel %vm657, %v600, %v602
      %v669 = vsel %vm657, %v602, %v604
      %v670 = vsel %vm657, %v604, %v606
      %v671 = vsel %vm657, %v606, %v608
      %v672 = vsel %vm657, %v610, %v612
      %v673 = vsel %vm657, %v612, %v614
      %v674 = vsel %vm657, %v614, %v616
      %v675 = vsel %vm657, %v616, %v618
      %v676 = vsel %vm657, %v618, %v620
      %v677 = vsel %vm657, %v620, %v622
      %v678 = vsel %vm657, %v622, %v624
      %v679 = vsel %vm657, %v626, %v628
      %v680 = vsel %vm657, %v628, %v630
      %v681 = vsel %vm657, %v630, %v632
      %v682 = vsel %vm657, %v632, %v634
      %v683 = vsel %vm657, %v634, %v636
      %v684 = vsel %vm657, %v636, %v638
      %v685 = vsel %vm657, %v638, %v640
      %v686 = vsel %vm657, %v642, %v644
      %v687 = vsel %vm657, %v644, %v646
      %v688 = vsel %vm657, %v646, %v648
      %v689 = vsel %vm657, %v648, %v650
      %v690 = vsel %vm657, %v650, %v652
      %v691 = vsel %vm657, %v652, %v654
      %v692 = vsel %vm657, %v654, %v656
      %vm721 = vcmask 588800
      %v723 = vsel %vm721, %v544, 0
      %v726 = vsel %vm417, %v686, 0
      %v729 = vsel %vm417, %v687, 0
      %v732 = vsel %vm417, %v688, 0
      %v735 = vsel %vm417, %v689, 0
      %v738 = vsel %vm417, %v690, 0
      %v741 = vsel %vm417, %v691, 0
      %v744 = vsel %vm417, %v692, 0
      %746 = vmatprep.subr.bf16.mxu0 %v659
      %747 = vmatpush1.bf16.msra.mxu0 %v658
      %748 = vmatprep.subr.bf16.mxu0 %v666
      %749 = vmatpush1.bf16.msra.mxu0 %v665
      %750 = vmatprep.subr.bf16.mxu0 %v673
      %751 = vmatpush1.bf16.msra.mxu0 %v672
      %752 = vmatprep.subr.bf16.mxu0 %v680
      %753 = vmatpush1.bf16.msra.mxu0 %v679
      %754 = vmatprep.subr.bf16.mxu0 %v729
      %755 = vmatpush1.bf16.msra.mxu0 %v726
      %756 = vmatprep.subr.bf16.mxu0 0
      %757 = vmatpush1.bf16.msra.mxu0 0
      %758 = vmatprep.subr.bf16.mxu0 0
      %759 = vmatpush1.bf16.msra.mxu0 0
      %760 = vmatprep.subr.bf16.mxu0 0
      %761 = vmatpush1.bf16.msra.mxu0 0
      %762 = vmatprep.subr.bf16.mxu0 0
      %763 = vmatpush1.bf16.msra.mxu0 0
      %764 = vmatprep.subr.bf16.mxu0 0
      %765 = vmatpush1.bf16.msra.mxu0 0
      %766 = vmatprep.subr.bf16.mxu0 0
      %767 = vmatpush1.bf16.msra.mxu0 0
      %768 = vmatprep.subr.bf16.mxu0 0
      %769 = vmatpush1.bf16.msra.mxu0 0
      %770 = vmatprep.subr.bf16.mxu0 0
      %771 = vmatpush1.bf16.msra.mxu0 0
      %772 = vmatprep.subr.bf16.mxu0 0
      %773 = vmatpush1.bf16.msra.mxu0 0
      %774 = vmatprep.subr.bf16.mxu0 0
      %775 = vmatpush1.bf16.msra.mxu0 0
      %776 = vmatprep.subr.bf16.mxu0 0
      %777 = vmatpush1.bf16.msra.mxu0 0
      %778 = vmatprep.mubr.bf16.mxu0 0
      %779 = vmatmul.mubr.bf16.gmra.mrb[0].mxu0 %v723
      %v780 = vpop.f32.mrb[0].mxu0
      %v781 = vadd.f32 0.0, %v780
      %v782 = vpop.f32.mrb[0].mxu0
      %v783 = vadd.f32 0.0, %v782
      %v784 = vpop.f32.mrb[0].mxu0
      %v785 = vpop.f32.mrb[0].mxu0
      %786 = vdwg.mxu0
      %787 = vmatprep.subr.bf16.mxu0 %v661
      %788 = vmatpush1.bf16.msra.mxu0 %v660
      %789 = vmatprep.subr.bf16.mxu0 %v668
      %790 = vmatpush1.bf16.msra.mxu0 %v667
      %791 = vmatprep.subr.bf16.mxu0 %v675
      %792 = vmatpush1.bf16.msra.mxu0 %v674
      %793 = vmatprep.subr.bf16.mxu0 %v682
      %794 = vmatpush1.bf16.msra.mxu0 %v681
      %795 = vmatprep.subr.bf16.mxu0 %v735
      %796 = vmatpush1.bf16.msra.mxu0 %v732
      %797 = vmatprep.subr.bf16.mxu0 0
      %798 = vmatpush1.bf16.msra.mxu0 0
      %799 = vmatprep.subr.bf16.mxu0 0
      %800 = vmatpush1.bf16.msra.mxu0 0
      %801 = vmatprep.subr.bf16.mxu0 0
      %802 = vmatpush1.bf16.msra.mxu0 0
      %803 = vmatprep.subr.bf16.mxu0 0
      %804 = vmatpush1.bf16.msra.mxu0 0
      %805 = vmatprep.subr.bf16.mxu0 0
      %806 = vmatpush1.bf16.msra.mxu0 0
      %807 = vmatprep.subr.bf16.mxu0 0
      %808 = vmatpush1.bf16.msra.mxu0 0
      %809 = vmatprep.subr.bf16.mxu0 0
      %810 = vmatpush1.bf16.msra.mxu0 0
      %811 = vmatprep.subr.bf16.mxu0 0
      %812 = vmatpush1.bf16.msra.mxu0 0
      %813 = vmatprep.subr.bf16.mxu0 0
      %814 = vmatpush1.bf16.msra.mxu0 0
      %815 = vmatprep.subr.bf16.mxu0 0
      %816 = vmatpush1.bf16.msra.mxu0 0
      %817 = vmatprep.subr.bf16.mxu0 0
      %818 = vmatpush1.bf16.msra.mxu0 0
      %819 = vmatprep.mubr.bf16.mxu0 0
      %820 = vmatmul.mubr.bf16.gmra.mrb[0].mxu0 %v723
      %v821 = vpop.f32.mrb[0].mxu0
      %v822 = vadd.f32 0.0, %v821
      %v823 = vpop.f32.mrb[0].mxu0
      %v824 = vadd.f32 0.0, %v823
      %v825 = vpop.f32.mrb[0].mxu0
      %v826 = vpop.f32.mrb[0].mxu0
      %827 = vdwg.mxu0
      %828 = vmatprep.subr.bf16.mxu0 %v663
      %829 = vmatpush1.bf16.msra.mxu0 %v662
      %830 = vmatprep.subr.bf16.mxu0 %v670
      %831 = vmatpush1.bf16.msra.mxu0 %v669
      %832 = vmatprep.subr.bf16.mxu0 %v677
      %833 = vmatpush1.bf16.msra.mxu0 %v676
      %834 = vmatprep.subr.bf16.mxu0 %v684
      %835 = vmatpush1.bf16.msra.mxu0 %v683
      %836 = vmatprep.subr.bf16.mxu0 %v741
      %837 = vmatpush1.bf16.msra.mxu0 %v738
      %838 = vmatprep.subr.bf16.mxu0 0
      %839 = vmatpush1.bf16.msra.mxu0 0
      %840 = vmatprep.subr.bf16.mxu0 0
      %841 = vmatpush1.bf16.msra.mxu0 0
      %842 = vmatprep.subr.bf16.mxu0 0
      %843 = vmatpush1.bf16.msra.mxu0 0
      %844 = vmatprep.subr.bf16.mxu0 0
      %845 = vmatpush1.bf16.msra.mxu0 0
      %846 = vmatprep.subr.bf16.mxu0 0
      %847 = vmatpush1.bf16.msra.mxu0 0
      %848 = vmatprep.subr.bf16.mxu0 0
      %849 = vmatpush1.bf16.msra.mxu0 0
      %850 = vmatprep.subr.bf16.mxu0 0
      %851 = vmatpush1.bf16.msra.mxu0 0
      %852 = vmatprep.subr.bf16.mxu0 0
      %853 = vmatpush1.bf16.msra.mxu0 0
      %854 = vmatprep.subr.bf16.mxu0 0
      %855 = vmatpush1.bf16.msra.mxu0 0
      %856 = vmatprep.subr.bf16.mxu0 0
      %857 = vmatpush1.bf16.msra.mxu0 0
      %858 = vmatprep.subr.bf16.mxu0 0
      %859 = vmatpush1.bf16.msra.mxu0 0
      %860 = vmatprep.mubr.bf16.mxu0 0
      %861 = vmatmul.mubr.bf16.gmra.mrb[0].mxu0 %v723
      %v862 = vpop.f32.mrb[0].mxu0
      %v863 = vadd.f32 0.0, %v862
      %v864 = vpop.f32.mrb[0].mxu0
      %v865 = vadd.f32 0.0, %v864
      %v866 = vpop.f32.mrb[0].mxu0
      %v867 = vpop.f32.mrb[0].mxu0
      %868 = vdwg.mxu0
      %869 = vmatprep.subr.bf16.mxu0 0
      %870 = vmatpush1.bf16.msra.mxu0 %v664
      %871 = vmatprep.subr.bf16.mxu0 0
      %872 = vmatpush1.bf16.msra.mxu0 %v671
      %873 = vmatprep.subr.bf16.mxu0 0
      %874 = vmatpush1.bf16.msra.mxu0 %v678
      %875 = vmatprep.subr.bf16.mxu0 0
      %876 = vmatpush1.bf16.msra.mxu0 %v685
      %877 = vmatprep.subr.bf16.mxu0 0
      %878 = vmatpush1.bf16.msra.mxu0 %v744
      %879 = vmatprep.subr.bf16.mxu0 0
      %880 = vmatpush1.bf16.msra.mxu0 0
      %881 = vmatprep.subr.bf16.mxu0 0
      %882 = vmatpush1.bf16.msra.mxu0 0
      %883 = vmatprep.subr.bf16.mxu0 0
      %884 = vmatpush1.bf16.msra.mxu0 0
      %885 = vmatprep.subr.bf16.mxu0 0
      %886 = vmatpush1.bf16.msra.mxu0 0
      %887 = vmatprep.subr.bf16.mxu0 0
      %888 = vmatpush1.bf16.msra.mxu0 0
      %889 = vmatprep.subr.bf16.mxu0 0
      %890 = vmatpush1.bf16.msra.mxu0 0
      %891 = vmatprep.subr.bf16.mxu0 0
      %892 = vmatpush1.bf16.msra.mxu0 0
      %893 = vmatprep.subr.bf16.mxu0 0
      %894 = vmatpush1.bf16.msra.mxu0 0
      %895 = vmatprep.subr.bf16.mxu0 0
      %896 = vmatpush1.bf16.msra.mxu0 0
      %897 = vmatprep.subr.bf16.mxu0 0
      %898 = vmatpush1.bf16.msra.mxu0 0
      %899 = vmatprep.subr.bf16.mxu0 0
      %900 = vmatpush1.bf16.msra.mxu0 0
      %901 = vmatprep.mubr.bf16.mxu0 0
      %902 = vmatmul.mubr.bf16.gmra.mrb[0].mxu0 %v723
      %v903 = vpop.f32.mrb[0].mxu0
      %v904 = vadd.f32 0.0, %v903
      %v905 = vpop.f32.mrb[0].mxu0
      %v906 = vpop.f32.mrb[0].mxu0
      %v907 = vpop.f32.mrb[0].mxu0
      %908 = vdwg.mxu0
      %v910 = vsel %vm721, %v530, 0
      %v913 = vsel %vm417, %v410, 0
      %v916 = vsel %vm417, %v411, 0
      %v919 = vsel %vm417, %v412, 0
      %v922 = vsel %vm417, %v413, 0
      %v925 = vsel %vm417, %v414, 0
      %v928 = vsel %vm417, %v415, 0
      %v931 = vsel %vm417, %v416, 0
      %933 = vmatprep.subr.bf16.mxu0 %v424
      %934 = vmatpush1.bf16.msra.mxu0 %v420
      %935 = vmatprep.subr.bf16.mxu0 %v452
      %936 = vmatpush1.bf16.msra.mxu0 %v448
      %937 = vmatprep.subr.bf16.mxu0 %v480
      %938 = vmatpush1.bf16.msra.mxu0 %v476
      %939 = vmatprep.subr.bf16.mxu0 %v508
      %940 = vmatpush1.bf16.msra.mxu0 %v504
      %941 = vmatprep.subr.bf16.mxu0 %v916
      %942 = vmatpush1.bf16.msra.mxu0 %v913
      %943 = vmatprep.subr.bf16.mxu0 0
      %944 = vmatpush1.bf16.msra.mxu0 0
      %945 = vmatprep.subr.bf16.mxu0 0
      %946 = vmatpush1.bf16.msra.mxu0 0
      %947 = vmatprep.subr.bf16.mxu0 0
      %948 = vmatpush1.bf16.msra.mxu0 0
      %949 = vmatprep.subr.bf16.mxu0 0
      %950 = vmatpush1.bf16.msra.mxu0 0
      %951 = vmatprep.subr.bf16.mxu0 0
      %952 = vmatpush1.bf16.msra.mxu0 0
      %953 = vmatprep.subr.bf16.mxu0 0
      %954 = vmatpush1.bf16.msra.mxu0 0
      %955 = vmatprep.subr.bf16.mxu0 0
      %956 = vmatpush1.bf16.msra.mxu0 0
      %957 = vmatprep.subr.bf16.mxu0 0
      %958 = vmatpush1.bf16.msra.mxu0 0
      %959 = vmatprep.subr.bf16.mxu0 0
      %960 = vmatpush1.bf16.msra.mxu0 0
      %961 = vmatprep.subr.bf16.mxu0 0
      %962 = vmatpush1.bf16.msra.mxu0 0
      %963 = vmatprep.subr.bf16.mxu0 0
      %964 = vmatpush1.bf16.msra.mxu0 0
      %965 = vmatprep.mubr.bf16.mxu0 0
      %966 = vmatmul.mubr.bf16.gmra.mrb[0].mxu0 %v910
      %v967 = vpop.f32.mrb[0].mxu0
      %v968 = vadd.f32 %v781, %v967
      %v969 = vpop.f32.mrb[0].mxu0
      %v970 = vadd.f32 %v783, %v969
      %v971 = vpop.f32.mrb[0].mxu0
      %v972 = vpop.f32.mrb[0].mxu0
      %973 = vdwg.mxu0
      %974 = vmatprep.subr.bf16.mxu0 %v432
      %975 = vmatpush1.bf16.msra.mxu0 %v428
      %976 = vmatprep.subr.bf16.mxu0 %v460
      %977 = vmatpush1.bf16.msra.mxu0 %v456
      %978 = vmatprep.subr.bf16.mxu0 %v488
      %979 = vmatpush1.bf16.msra.mxu0 %v484
      %980 = vmatprep.subr.bf16.mxu0 %v516
      %981 = vmatpush1.bf16.msra.mxu0 %v512
      %982 = vmatprep.subr.bf16.mxu0 %v922
      %983 = vmatpush1.bf16.msra.mxu0 %v919
      %984 = vmatprep.subr.bf16.mxu0 0
      %985 = vmatpush1.bf16.msra.mxu0 0
      %986 = vmatprep.subr.bf16.mxu0 0
      %987 = vmatpush1.bf16.msra.mxu0 0
      %988 = vmatprep.subr.bf16.mxu0 0
      %989 = vmatpush1.bf16.msra.mxu0 0
      %990 = vmatprep.subr.bf16.mxu0 0
      %991 = vmatpush1.bf16.msra.mxu0 0
      %992 = vmatprep.subr.bf16.mxu0 0
      %993 = vmatpush1.bf16.msra.mxu0 0
      %994 = vmatprep.subr.bf16.mxu0 0
      %995 = vmatpush1.bf16.msra.mxu0 0
      %996 = vmatprep.subr.bf16.mxu0 0
      %997 = vmatpush1.bf16.msra.mxu0 0
      %998 = vmatprep.subr.bf16.mxu0 0
      %999 = vmatpush1.bf16.msra.mxu0 0
      %1000 = vmatprep.subr.bf16.mxu0 0
      %1001 = vmatpush1.bf16.msra.mxu0 0
      %1002 = vmatprep.subr.bf16.mxu0 0
      %1003 = vmatpush1.bf16.msra.mxu0 0
      %1004 = vmatprep.subr.bf16.mxu0 0
      %1005 = vmatpush1.bf16.msra.mxu0 0
      %1006 = vmatprep.mubr.bf16.mxu0 0
      %1007 = vmatmul.mubr.bf16.gmra.mrb[0].mxu0 %v910
      %v1008 = vpop.f32.mrb[0].mxu0
      %v1009 = vadd.f32 %v822, %v1008
      %v1010 = vpop.f32.mrb[0].mxu0
      %v1011 = vadd.f32 %v824, %v1010
      %v1012 = vpop.f32.mrb[0].mxu0
      %v1013 = vpop.f32.mrb[0].mxu0
      %1014 = vdwg.mxu0
      %1015 = vmatprep.subr.bf16.mxu0 %v440
      %1016 = vmatpush1.bf16.msra.mxu0 %v436
      %1017 = vmatprep.subr.bf16.mxu0 %v468
      %1018 = vmatpush1.bf16.msra.mxu0 %v464
      %1019 = vmatprep.subr.bf16.mxu0 %v496
      %1020 = vmatpush1.bf16.msra.mxu0 %v492
      %1021 = vmatprep.subr.bf16.mxu0 %v524
      %1022 = vmatpush1.bf16.msra.mxu0 %v520
      %1023 = vmatprep.subr.bf16.mxu0 %v928
      %1024 = vmatpush1.bf16.msra.mxu0 %v925
      %1025 = vmatprep.subr.bf16.mxu0 0
      %1026 = vmatpush1.bf16.msra.mxu0 0
      %1027 = vmatprep.subr.bf16.mxu0 0
      %1028 = vmatpush1.bf16.msra.mxu0 0
      %1029 = vmatprep.subr.bf16.mxu0 0
      %1030 = vmatpush1.bf16.msra.mxu0 0
      %1031 = vmatprep.subr.bf16.mxu0 0
      %1032 = vmatpush1.bf16.msra.mxu0 0
      %1033 = vmatprep.subr.bf16.mxu0 0
      %1034 = vmatpush1.bf16.msra.mxu0 0
      %1035 = vmatprep.subr.bf16.mxu0 0
      %1036 = vmatpush1.bf16.msra.mxu0 0
      %1037 = vmatprep.subr.bf16.mxu0 0
      %1038 = vmatpush1.bf16.msra.mxu0 0
      %1039 = vmatprep.subr.bf16.mxu0 0
      %1040 = vmatpush1.bf16.msra.mxu0 0
      %1041 = vmatprep.subr.bf16.mxu0 0
      %1042 = vmatpush1.bf16.msra.mxu0 0
      %1043 = vmatprep.subr.bf16.mxu0 0
      %1044 = vmatpush1.bf16.msra.mxu0 0
      %1045 = vmatprep.subr.bf16.mxu0 0
      %1046 = vmatpush1.bf16.msra.mxu0 0
      %1047 = vmatprep.mubr.bf16.mxu0 0
      %1048 = vmatmul.mubr.bf16.gmra.mrb[0].mxu0 %v910
      %v1049 = vpop.f32.mrb[0].mxu0
      %v1050 = vadd.f32 %v863, %v1049
      %v1051 = vpop.f32.mrb[0].mxu0
      %v1052 = vadd.f32 %v865, %v1051
      %v1053 = vpop.f32.mrb[0].mxu0
      %v1054 = vpop.f32.mrb[0].mxu0
      %1055 = vdwg.mxu0
      %1056 = vmatprep.subr.bf16.mxu0 0
      %1057 = vmatpush1.bf16.msra.mxu0 %v444
      %1058 = vmatprep.subr.bf16.mxu0 0
      %1059 = vmatpush1.bf16.msra.mxu0 %v472
      %1060 = vmatprep.subr.bf16.mxu0 0
      %1061 = vmatpush1.bf16.msra.mxu0 %v500
      %1062 = vmatprep.subr.bf16.mxu0 0
      %1063 = vmatpush1.bf16.msra.mxu0 %v528
      %1064 = vmatprep.subr.bf16.mxu0 0
      %1065 = vmatpush1.bf16.msra.mxu0 %v931
      %1066 = vmatprep.subr.bf16.mxu0 0
      %1067 = vmatpush1.bf16.msra.mxu0 0
      %1068 = vmatprep.subr.bf16.mxu0 0
      %1069 = vmatpush1.bf16.msra.mxu0 0
      %1070 = vmatprep.subr.bf16.mxu0 0
      %1071 = vmatpush1.bf16.msra.mxu0 0
      %1072 = vmatprep.subr.bf16.mxu0 0
      %1073 = vmatpush1.bf16.msra.mxu0 0
      %1074 = vmatprep.subr.bf16.mxu0 0
      %1075 = vmatpush1.bf16.msra.mxu0 0
      %1076 = vmatprep.subr.bf16.mxu0 0
      %1077 = vmatpush1.bf16.msra.mxu0 0
      %1078 = vmatprep.subr.bf16.mxu0 0
      %1079 = vmatpush1.bf16.msra.mxu0 0
      %1080 = vmatprep.subr.bf16.mxu0 0
      %1081 = vmatpush1.bf16.msra.mxu0 0
      %1082 = vmatprep.subr.bf16.mxu0 0
      %1083 = vmatpush1.bf16.msra.mxu0 0
      %1084 = vmatprep.subr.bf16.mxu0 0
      %1085 = vmatpush1.bf16.msra.mxu0 0
      %1086 = vmatprep.subr.bf16.mxu0 0
      %1087 = vmatpush1.bf16.msra.mxu0 0
      %1088 = vmatprep.mubr.bf16.mxu0 0
      %1089 = vmatmul.mubr.bf16.gmra.mrb[0].mxu0 %v910
      %v1090 = vpop.f32.mrb[0].mxu0
      %v1091 = vadd.f32 %v904, %v1090
      %v1092 = vpop.f32.mrb[0].mxu0
      %v1093 = vpop.f32.mrb[0].mxu0
      %v1094 = vpop.f32.mrb[0].mxu0
      %1095 = vdwg.mxu0
      %v1097 = vunpack.c.l.b16 %v203
      %v1098 = vpack.c.b16 %v1097, %v1097
      %1099 = vrot.lane.b32.xlu0 %v217, 56
      %v1100 = vpop.permute.xlu0 %1099
      %1101 = vrot.lane.b32.xlu0 %v218, 56
      %v1102 = vpop.permute.xlu0 %1101
      %1103 = vrot.lane.b32.xlu0 %v219, 56
      %v1104 = vpop.permute.xlu0 %1103
      %1105 = vrot.lane.b32.xlu0 %v220, 56
      %v1106 = vpop.permute.xlu0 %1105
      %1107 = vrot.lane.b32.xlu0 %v221, 56
      %v1108 = vpop.permute.xlu0 %1107
      %1109 = vrot.lane.b32.xlu0 %v222, 56
      %v1110 = vpop.permute.xlu0 %1109
      %1111 = vrot.lane.b32.xlu0 %v224, 56
      %v1112 = vpop.permute.xlu0 %1111
      %1113 = vrot.lane.b32.xlu0 %v1098, 56
      %v1114 = vpop.permute.xlu0 %1113
      %vm1115 = vcmask 457728
      %v1116 = vsel %vm1115, %v1100, %v1102
      %v1117 = vsel %vm1115, %v1102, %v1104
      %v1118 = vsel %vm1115, %v1104, %v1106
      %v1119 = vsel %vm1115, %v1106, %v1108
      %v1120 = vsel %vm1115, %v1108, %v1110
      %v1121 = vsel %vm1115, %v1110, %v1112
      %v1122 = vsel %vm1115, %v1112, %v1114
      %1123 = vrot.lane.b32.xlu0 %v217, 55
      %v1124 = vpop.permute.xlu0 %1123
      %1125 = vrot.lane.b32.xlu0 %v218, 55
      %v1126 = vpop.permute.xlu0 %1125
      %1127 = vrot.lane.b32.xlu0 %v219, 55
      %v1128 = vpop.permute.xlu0 %1127
      %1129 = vrot.lane.b32.xlu0 %v220, 55
      %v1130 = vpop.permute.xlu0 %1129
      %1131 = vrot.lane.b32.xlu0 %v221, 55
      %v1132 = vpop.permute.xlu0 %1131
      %1133 = vrot.lane.b32.xlu0 %v222, 55
      %v1134 = vpop.permute.xlu0 %1133
      %1135 = vrot.lane.b32.xlu0 %v224, 55
      %v1136 = vpop.permute.xlu0 %1135
      %1137 = vrot.lane.b32.xlu0 %v1098, 55
      %v1138 = vpop.permute.xlu0 %1137
      %vm1139 = vcmask 449536
      %v1140 = vsel %vm1139, %v1124, %v1126
      %v1141 = vsel %vm1139, %v1126, %v1128
      %v1142 = vsel %vm1139, %v1128, %v1130
      %v1143 = vsel %vm1139, %v1130, %v1132
      %v1144 = vsel %vm1139, %v1132, %v1134
      %v1145 = vsel %vm1139, %v1134, %v1136
      %v1146 = vsel %vm1139, %v1136, %v1138
      %1147 = vrot.lane.b32.xlu0 %v217, 54
      %v1148 = vpop.permute.xlu0 %1147
      %1149 = vrot.lane.b32.xlu0 %v218, 54
      %v1150 = vpop.permute.xlu0 %1149
      %1151 = vrot.lane.b32.xlu0 %v219, 54
      %v1152 = vpop.permute.xlu0 %1151
      %1153 = vrot.lane.b32.xlu0 %v220, 54
      %v1154 = vpop.permute.xlu0 %1153
      %1155 = vrot.lane.b32.xlu0 %v221, 54
      %v1156 = vpop.permute.xlu0 %1155
      %1157 = vrot.lane.b32.xlu0 %v222, 54
      %v1158 = vpop.permute.xlu0 %1157
      %1159 = vrot.lane.b32.xlu0 %v224, 54
      %v1160 = vpop.permute.xlu0 %1159
      %1161 = vrot.lane.b32.xlu0 %v1098, 54
      %v1162 = vpop.permute.xlu0 %1161
      %vm1163 = vcmask 441344
      %v1164 = vsel %vm1163, %v1148, %v1150
      %v1165 = vsel %vm1163, %v1150, %v1152
      %v1166 = vsel %vm1163, %v1152, %v1154
      %v1167 = vsel %vm1163, %v1154, %v1156
      %v1168 = vsel %vm1163, %v1156, %v1158
      %v1169 = vsel %vm1163, %v1158, %v1160
      %v1170 = vsel %vm1163, %v1160, %v1162
      %1171 = vrot.lane.b32.xlu0 %v217, 46
      %v1172 = vpop.permute.xlu0 %1171
      %1173 = vrot.lane.b32.xlu0 %v218, 46
      %v1174 = vpop.permute.xlu0 %1173
      %1175 = vrot.lane.b32.xlu0 %v219, 46
      %v1176 = vpop.permute.xlu0 %1175
      %1177 = vrot.lane.b32.xlu0 %v220, 46
      %v1178 = vpop.permute.xlu0 %1177
      %1179 = vrot.lane.b32.xlu0 %v221, 46
      %v1180 = vpop.permute.xlu0 %1179
      %1181 = vrot.lane.b32.xlu0 %v222, 46
      %v1182 = vpop.permute.xlu0 %1181
      %1183 = vrot.lane.b32.xlu0 %v224, 46
      %v1184 = vpop.permute.xlu0 %1183
      %1185 = vrot.lane.b32.xlu0 %v1098, 46
      %v1186 = vpop.permute.xlu0 %1185
      %vm1187 = vcmask 375808
      %v1188 = vsel %vm1187, %v1172, %v1174
      %v1189 = vsel %vm1187, %v1174, %v1176
      %v1190 = vsel %vm1187, %v1176, %v1178
      %v1191 = vsel %vm1187, %v1178, %v1180
      %v1192 = vsel %vm1187, %v1180, %v1182
      %v1193 = vsel %vm1187, %v1182, %v1184
      %v1194 = vsel %vm1187, %v1184, %v1186
      %1195 = vrot.lane.b32.xlu0 %v217, 45
      %v1196 = vpop.permute.xlu0 %1195
      %1197 = vrot.lane.b32.xlu0 %v218, 45
      %v1198 = vpop.permute.xlu0 %1197
      %1199 = vrot.lane.b32.xlu0 %v219, 45
      %v1200 = vpop.permute.xlu0 %1199
      %1201 = vrot.lane.b32.xlu0 %v220, 45
      %v1202 = vpop.permute.xlu0 %1201
      %1203 = vrot.lane.b32.xlu0 %v221, 45
      %v1204 = vpop.permute.xlu0 %1203
      %1205 = vrot.lane.b32.xlu0 %v222, 45
      %v1206 = vpop.permute.xlu0 %1205
      %1207 = vrot.lane.b32.xlu0 %v224, 45
      %v1208 = vpop.permute.xlu0 %1207
      %1209 = vrot.lane.b32.xlu0 %v1098, 45
      %v1210 = vpop.permute.xlu0 %1209
      %vm1211 = vcmask 367616
      %v1212 = vsel %vm1211, %v1196, %v1198
      %v1213 = vsel %vm1211, %v1198, %v1200
      %v1214 = vsel %vm1211, %v1200, %v1202
      %v1215 = vsel %vm1211, %v1202, %v1204
      %v1216 = vsel %vm1211, %v1204, %v1206
      %v1217 = vsel %vm1211, %v1206, %v1208
      %v1218 = vsel %vm1211, %v1208, %v1210
      %1219 = vrot.lane.b32.xlu0 %v217, 44
      %v1220 = vpop.permute.xlu0 %1219
      %1221 = vrot.lane.b32.xlu0 %v218, 44
      %v1222 = vpop.permute.xlu0 %1221
      %1223 = vrot.lane.b32.xlu0 %v219, 44
      %v1224 = vpop.permute.xlu0 %1223
      %1225 = vrot.lane.b32.xlu0 %v220, 44
      %v1226 = vpop.permute.xlu0 %1225
      %1227 = vrot.lane.b32.xlu0 %v221, 44
      %v1228 = vpop.permute.xlu0 %1227
      %1229 = vrot.lane.b32.xlu0 %v222, 44
      %v1230 = vpop.permute.xlu0 %1229
      %1231 = vrot.lane.b32.xlu0 %v224, 44
      %v1232 = vpop.permute.xlu0 %1231
      %1233 = vrot.lane.b32.xlu0 %v1098, 44
      %v1234 = vpop.permute.xlu0 %1233
      %vm1235 = vcmask 359424
      %v1236 = vsel %vm1235, %v1220, %v1222
      %v1237 = vsel %vm1235, %v1222, %v1224
      %v1238 = vsel %vm1235, %v1224, %v1226
      %v1239 = vsel %vm1235, %v1226, %v1228
      %v1240 = vsel %vm1235, %v1228, %v1230
      %v1241 = vsel %vm1235, %v1230, %v1232
      %v1242 = vsel %vm1235, %v1232, %v1234
      %1243 = vrot.lane.b32.xlu0 %v217, 36
      %v1244 = vpop.permute.xlu0 %1243
      %1245 = vrot.lane.b32.xlu0 %v218, 36
      %v1246 = vpop.permute.xlu0 %1245
      %1247 = vrot.lane.b32.xlu0 %v219, 36
      %v1248 = vpop.permute.xlu0 %1247
      %1249 = vrot.lane.b32.xlu0 %v220, 36
      %v1250 = vpop.permute.xlu0 %1249
      %1251 = vrot.lane.b32.xlu0 %v221, 36
      %v1252 = vpop.permute.xlu0 %1251
      %1253 = vrot.lane.b32.xlu0 %v222, 36
      %v1254 = vpop.permute.xlu0 %1253
      %1255 = vrot.lane.b32.xlu0 %v224, 36
      %v1256 = vpop.permute.xlu0 %1255
      %1257 = vrot.lane.b32.xlu0 %v1098, 36
      %v1258 = vpop.permute.xlu0 %1257
      %vm1259 = vcmask 293888
      %v1260 = vsel %vm1259, %v1244, %v1246
      %v1261 = vsel %vm1259, %v1246, %v1248
      %v1262 = vsel %vm1259, %v1248, %v1250
      %v1263 = vsel %vm1259, %v1250, %v1252
      %v1264 = vsel %vm1259, %v1252, %v1254
      %v1265 = vsel %vm1259, %v1254, %v1256
      %v1266 = vsel %vm1259, %v1256, %v1258
      %1267 = vrot.lane.b32.xlu0 %v217, 35
      %v1268 = vpop.permute.xlu0 %1267
      %1269 = vrot.lane.b32.xlu0 %v218, 35
      %v1270 = vpop.permute.xlu0 %1269
      %1271 = vrot.lane.b32.xlu0 %v219, 35
      %v1272 = vpop.permute.xlu0 %1271
      %1273 = vrot.lane.b32.xlu0 %v220, 35
      %v1274 = vpop.permute.xlu0 %1273
      %1275 = vrot.lane.b32.xlu0 %v221, 35
      %v1276 = vpop.permute.xlu0 %1275
      %1277 = vrot.lane.b32.xlu0 %v222, 35
      %v1278 = vpop.permute.xlu0 %1277
      %1279 = vrot.lane.b32.xlu0 %v224, 35
      %v1280 = vpop.permute.xlu0 %1279
      %1281 = vrot.lane.b32.xlu0 %v1098, 35
      %v1282 = vpop.permute.xlu0 %1281
      %vm1283 = vcmask 285696
      %v1284 = vsel %vm1283, %v1268, %v1270
      %v1285 = vsel %vm1283, %v1270, %v1272
      %v1286 = vsel %vm1283, %v1272, %v1274
      %v1287 = vsel %vm1283, %v1274, %v1276
      %v1288 = vsel %vm1283, %v1276, %v1278
      %v1289 = vsel %vm1283, %v1278, %v1280
      %v1290 = vsel %vm1283, %v1280, %v1282
      %1291 = vrot.lane.b32.xlu0 %v217, 34
      %v1292 = vpop.permute.xlu0 %1291
      %1293 = vrot.lane.b32.xlu0 %v218, 34
      %v1294 = vpop.permute.xlu0 %1293
      %1295 = vrot.lane.b32.xlu0 %v219, 34
      %v1296 = vpop.permute.xlu0 %1295
      %1297 = vrot.lane.b32.xlu0 %v220, 34
      %v1298 = vpop.permute.xlu0 %1297
      %1299 = vrot.lane.b32.xlu0 %v221, 34
      %v1300 = vpop.permute.xlu0 %1299
      %1301 = vrot.lane.b32.xlu0 %v222, 34
      %v1302 = vpop.permute.xlu0 %1301
      %1303 = vrot.lane.b32.xlu0 %v224, 34
      %v1304 = vpop.permute.xlu0 %1303
      %1305 = vrot.lane.b32.xlu0 %v1098, 34
      %v1306 = vpop.permute.xlu0 %1305
      %vm1307 = vcmask 277504
      %v1308 = vsel %vm1307, %v1292, %v1294
      %v1309 = vsel %vm1307, %v1294, %v1296
      %v1310 = vsel %vm1307, %v1296, %v1298
      %v1311 = vsel %vm1307, %v1298, %v1300
      %v1312 = vsel %vm1307, %v1300, %v1302
      %v1313 = vsel %vm1307, %v1302, %v1304
      %v1314 = vsel %vm1307, %v1304, %v1306
      %v1317 = vsel %vm417, %v1116, %v1140
      %v1321 = vsel %vm417, %v1117, %v1141
      %v1325 = vsel %vm417, %v1118, %v1142
      %v1329 = vsel %vm417, %v1119, %v1143
      %v1333 = vsel %vm417, %v1120, %v1144
      %v1337 = vsel %vm417, %v1121, %v1145
      %v1341 = vsel %vm417, %v1122, %v1146
      %v1345 = vsel %vm417, %v1164, %v1188
      %v1349 = vsel %vm417, %v1165, %v1189
      %v1353 = vsel %vm417, %v1166, %v1190
      %v1357 = vsel %vm417, %v1167, %v1191
      %v1361 = vsel %vm417, %v1168, %v1192
      %v1365 = vsel %vm417, %v1169, %v1193
      %v1369 = vsel %vm417, %v1170, %v1194
      %v1373 = vsel %vm417, %v1212, %v1236
      %v1377 = vsel %vm417, %v1213, %v1237
      %v1381 = vsel %vm417, %v1214, %v1238
      %v1385 = vsel %vm417, %v1215, %v1239
      %v1389 = vsel %vm417, %v1216, %v1240
      %v1393 = vsel %vm417, %v1217, %v1241
      %v1397 = vsel %vm417, %v1218, %v1242
      %v1401 = vsel %vm417, %v1260, %v1284
      %v1405 = vsel %vm417, %v1261, %v1285
      %v1409 = vsel %vm417, %v1262, %v1286
      %v1413 = vsel %vm417, %v1263, %v1287
      %v1417 = vsel %vm417, %v1264, %v1288
      %v1421 = vsel %vm417, %v1265, %v1289
      %v1425 = vsel %vm417, %v1266, %v1290
      %s1427 = scalar_lea.vmem %s1, 8
      %v1428 = vld [vmem:[%s1427] sm:$0xf]
      %v1430 = vsel %vm721, %v1428, 0
      %v1433 = vsel %vm417, %v1308, 0
      %v1436 = vsel %vm417, %v1309, 0
      %v1439 = vsel %vm417, %v1310, 0
      %v1442 = vsel %vm417, %v1311, 0
      %v1445 = vsel %vm417, %v1312, 0
      %v1448 = vsel %vm417, %v1313, 0
      %v1451 = vsel %vm417, %v1314, 0
      %1453 = vmatprep.subr.bf16.mxu0 %v1321
      %1454 = vmatpush1.bf16.msra.mxu0 %v1317
      %1455 = vmatprep.subr.bf16.mxu0 %v1349
      %1456 = vmatpush1.bf16.msra.mxu0 %v1345
      %1457 = vmatprep.subr.bf16.mxu0 %v1377
      %1458 = vmatpush1.bf16.msra.mxu0 %v1373
      %1459 = vmatprep.subr.bf16.mxu0 %v1405
      %1460 = vmatpush1.bf16.msra.mxu0 %v1401
      %1461 = vmatprep.subr.bf16.mxu0 %v1436
      %1462 = vmatpush1.bf16.msra.mxu0 %v1433
      %1463 = vmatprep.subr.bf16.mxu0 0
      %1464 = vmatpush1.bf16.msra.mxu0 0
      %1465 = vmatprep.subr.bf16.mxu0 0
      %1466 = vmatpush1.bf16.msra.mxu0 0
      %1467 = vmatprep.subr.bf16.mxu0 0
      %1468 = vmatpush1.bf16.msra.mxu0 0
      %1469 = vmatprep.subr.bf16.mxu0 0
      %1470 = vmatpush1.bf16.msra.mxu0 0
      %1471 = vmatprep.subr.bf16.mxu0 0
      %1472 = vmatpush1.bf16.msra.mxu0 0
      %1473 = vmatprep.subr.bf16.mxu0 0
      %1474 = vmatpush1.bf16.msra.mxu0 0
      %1475 = vmatprep.subr.bf16.mxu0 0
      %1476 = vmatpush1.bf16.msra.mxu0 0
      %1477 = vmatprep.subr.bf16.mxu0 0
      %1478 = vmatpush1.bf16.msra.mxu0 0
      %1479 = vmatprep.subr.bf16.mxu0 0
      %1480 = vmatpush1.bf16.msra.mxu0 0
      %1481 = vmatprep.subr.bf16.mxu0 0
      %1482 = vmatpush1.bf16.msra.mxu0 0
      %1483 = vmatprep.subr.bf16.mxu0 0
      %1484 = vmatpush1.bf16.msra.mxu0 0
      %1485 = vmatprep.mubr.bf16.mxu0 0
      %1486 = vmatmul.mubr.bf16.gmra.mrb[0].mxu0 %v1430
      %v1487 = vpop.f32.mrb[0].mxu0
      %v1488 = vadd.f32 0.0, %v1487
      %v1489 = vpop.f32.mrb[0].mxu0
      %v1490 = vadd.f32 0.0, %v1489
      %v1491 = vpop.f32.mrb[0].mxu0
      %v1492 = vpop.f32.mrb[0].mxu0
      %1493 = vdwg.mxu0
      %1494 = vmatprep.subr.bf16.mxu0 %v1329
      %1495 = vmatpush1.bf16.msra.mxu0 %v1325
      %1496 = vmatprep.subr.bf16.mxu0 %v1357
      %1497 = vmatpush1.bf16.msra.mxu0 %v1353
      %1498 = vmatprep.subr.bf16.mxu0 %v1385
      %1499 = vmatpush1.bf16.msra.mxu0 %v1381
      %1500 = vmatprep.subr.bf16.mxu0 %v1413
      %1501 = vmatpush1.bf16.msra.mxu0 %v1409
      %1502 = vmatprep.subr.bf16.mxu0 %v1442
      %1503 = vmatpush1.bf16.msra.mxu0 %v1439
      %1504 = vmatprep.subr.bf16.mxu0 0
      %1505 = vmatpush1.bf16.msra.mxu0 0
      %1506 = vmatprep.subr.bf16.mxu0 0
      %1507 = vmatpush1.bf16.msra.mxu0 0
      %1508 = vmatprep.subr.bf16.mxu0 0
      %1509 = vmatpush1.bf16.msra.mxu0 0
      %1510 = vmatprep.subr.bf16.mxu0 0
      %1511 = vmatpush1.bf16.msra.mxu0 0
      %1512 = vmatprep.subr.bf16.mxu0 0
      %1513 = vmatpush1.bf16.msra.mxu0 0
      %1514 = vmatprep.subr.bf16.mxu0 0
      %1515 = vmatpush1.bf16.msra.mxu0 0
      %1516 = vmatprep.subr.bf16.mxu0 0
      %1517 = vmatpush1.bf16.msra.mxu0 0
      %1518 = vmatprep.subr.bf16.mxu0 0
      %1519 = vmatpush1.bf16.msra.mxu0 0
      %1520 = vmatprep.subr.bf16.mxu0 0
      %1521 = vmatpush1.bf16.msra.mxu0 0
      %1522 = vmatprep.subr.bf16.mxu0 0
      %1523 = vmatpush1.bf16.msra.mxu0 0
      %1524 = vmatprep.subr.bf16.mxu0 0
      %1525 = vmatpush1.bf16.msra.mxu0 0
      %1526 = vmatprep.mubr.bf16.mxu0 0
      %1527 = vmatmul.mubr.bf16.gmra.mrb[0].mxu0 %v1430
      %v1528 = vpop.f32.mrb[0].mxu0
      %v1529 = vadd.f32 0.0, %v1528
      %v1530 = vpop.f32.mrb[0].mxu0
      %v1531 = vadd.f32 0.0, %v1530
      %v1532 = vpop.f32.mrb[0].mxu0
      %v1533 = vpop.f32.mrb[0].mxu0
      %1534 = vdwg.mxu0
      %1535 = vmatprep.subr.bf16.mxu0 %v1337
      %1536 = vmatpush1.bf16.msra.mxu0 %v1333
      %1537 = vmatprep.subr.bf16.mxu0 %v1365
      %1538 = vmatpush1.bf16.msra.mxu0 %v1361
      %1539 = vmatprep.subr.bf16.mxu0 %v1393
      %1540 = vmatpush1.bf16.msra.mxu0 %v1389
      %1541 = vmatprep.subr.bf16.mxu0 %v1421
      %1542 = vmatpush1.bf16.msra.mxu0 %v1417
      %1543 = vmatprep.subr.bf16.mxu0 %v1448
      %1544 = vmatpush1.bf16.msra.mxu0 %v1445
      %1545 = vmatprep.subr.bf16.mxu0 0
      %1546 = vmatpush1.bf16.msra.mxu0 0
      %1547 = vmatprep.subr.bf16.mxu0 0
      %1548 = vmatpush1.bf16.msra.mxu0 0
      %1549 = vmatprep.subr.bf16.mxu0 0
      %1550 = vmatpush1.bf16.msra.mxu0 0
      %1551 = vmatprep.subr.bf16.mxu0 0
      %1552 = vmatpush1.bf16.msra.mxu0 0
      %1553 = vmatprep.subr.bf16.mxu0 0
      %1554 = vmatpush1.bf16.msra.mxu0 0
      %1555 = vmatprep.subr.bf16.mxu0 0
      %1556 = vmatpush1.bf16.msra.mxu0 0
      %1557 = vmatprep.subr.bf16.mxu0 0
      %1558 = vmatpush1.bf16.msra.mxu0 0
      %1559 = vmatprep.subr.bf16.mxu0 0
      %1560 = vmatpush1.bf16.msra.mxu0 0
      %1561 = vmatprep.subr.bf16.mxu0 0
      %1562 = vmatpush1.bf16.msra.mxu0 0
      %1563 = vmatprep.subr.bf16.mxu0 0
      %1564 = vmatpush1.bf16.msra.mxu0 0
      %1565 = vmatprep.subr.bf16.mxu0 0
      %1566 = vmatpush1.bf16.msra.mxu0 0
      %1567 = vmatprep.mubr.bf16.mxu0 0
      %1568 = vmatmul.mubr.bf16.gmra.mrb[0].mxu0 %v1430
      %v1569 = vpop.f32.mrb[0].mxu0
      %v1570 = vadd.f32 0.0, %v1569
      %v1571 = vpop.f32.mrb[0].mxu0
      %v1572 = vadd.f32 0.0, %v1571
      %v1573 = vpop.f32.mrb[0].mxu0
      %v1574 = vpop.f32.mrb[0].mxu0
      %1575 = vdwg.mxu0
      %1576 = vmatprep.subr.bf16.mxu0 0
      %1577 = vmatpush1.bf16.msra.mxu0 %v1341
      %1578 = vmatprep.subr.bf16.mxu0 0
      %1579 = vmatpush1.bf16.msra.mxu0 %v1369
      %1580 = vmatprep.subr.bf16.mxu0 0
      %1581 = vmatpush1.bf16.msra.mxu0 %v1397
      %1582 = vmatprep.subr.bf16.mxu0 0
      %1583 = vmatpush1.bf16.msra.mxu0 %v1425
      %1584 = vmatprep.subr.bf16.mxu0 0
      %1585 = vmatpush1.bf16.msra.mxu0 %v1451
      %1586 = vmatprep.subr.bf16.mxu0 0
      %1587 = vmatpush1.bf16.msra.mxu0 0
      %1588 = vmatprep.subr.bf16.mxu0 0
      %1589 = vmatpush1.bf16.msra.mxu0 0
      %1590 = vmatprep.subr.bf16.mxu0 0
      %1591 = vmatpush1.bf16.msra.mxu0 0
      %1592 = vmatprep.subr.bf16.mxu0 0
      %1593 = vmatpush1.bf16.msra.mxu0 0
      %1594 = vmatprep.subr.bf16.mxu0 0
      %1595 = vmatpush1.bf16.msra.mxu0 0
      %1596 = vmatprep.subr.bf16.mxu0 0
      %1597 = vmatpush1.bf16.msra.mxu0 0
      %1598 = vmatprep.subr.bf16.mxu0 0
      %1599 = vmatpush1.bf16.msra.mxu0 0
      %1600 = vmatprep.subr.bf16.mxu0 0
      %1601 = vmatpush1.bf16.msra.mxu0 0
      %1602 = vmatprep.subr.bf16.mxu0 0
      %1603 = vmatpush1.bf16.msra.mxu0 0
      %1604 = vmatprep.subr.bf16.mxu0 0
      %1605 = vmatpush1.bf16.msra.mxu0 0
      %1606 = vmatprep.subr.bf16.mxu0 0
      %1607 = vmatpush1.bf16.msra.mxu0 0
      %1608 = vmatprep.mubr.bf16.mxu0 0
      %1609 = vmatmul.mubr.bf16.gmra.mrb[0].mxu0 %v1430
      %v1610 = vpop.f32.mrb[0].mxu0
      %v1611 = vadd.f32 0.0, %v1610
      %v1612 = vpop.f32.mrb[0].mxu0
      %v1613 = vpop.f32.mrb[0].mxu0
      %v1614 = vpop.f32.mrb[0].mxu0
      %1615 = vdwg.mxu0
      %v1616 = vadd.f32 %v968, %v1488
      %v1617 = vadd.f32 %v970, %v1490
      %v1618 = vadd.f32 %v1009, %v1529
      %v1619 = vadd.f32 %v1011, %v1531
      %v1620 = vadd.f32 %v1050, %v1570
      %v1621 = vadd.f32 %v1052, %v1572
      %v1622 = vadd.f32 %v1091, %v1611
      %v1624 = vlaneseq
      %v1625 = vshrl.u32 %v1624, 7
      %v1626 = vsub.s32 0, %v1625
      %v1627 = vrot.slane %v204, %v1626
      %v1628 = vlaneseq
      %v1629 = vshrl.u32 %v1628, 7
      %v1630 = vsub.s32 1, %v1629
      %v1631 = vrot.slane %v204, %v1630
      %v1632 = vlaneseq
      %v1633 = vshrl.u32 %v1632, 7
      %v1634 = vsub.s32 2, %v1633
      %v1635 = vrot.slane %v204, %v1634
      %v1636 = vlaneseq
      %v1637 = vshrl.u32 %v1636, 7
      %v1638 = vsub.s32 3, %v1637
      %v1639 = vrot.slane %v204, %v1638
      %v1640 = vlaneseq
      %v1641 = vshrl.u32 %v1640, 7
      %v1642 = vsub.s32 4, %v1641
      %v1643 = vrot.slane %v204, %v1642
      %v1644 = vlaneseq
      %v1645 = vshrl.u32 %v1644, 7
      %v1646 = vsub.s32 5, %v1645
      %v1647 = vrot.slane %v204, %v1646
      %v1648 = vlaneseq
      %v1649 = vshrl.u32 %v1648, 7
      %v1650 = vsub.s32 6, %v1649
      %v1651 = vrot.slane %v204, %v1650
      %v1659 = vmul.f32 %v1616, %v1627
      %v1660 = vmul.f32 %v1617, %v1631
      %v1661 = vmul.f32 %v1618, %v1635
      %v1662 = vmul.f32 %v1619, %v1639
      %v1663 = vmul.f32 %v1620, %v1643
      %v1664 = vmul.f32 %v1621, %v1647
      %v1665 = vmul.f32 %v1622, %v1651
      %v1666 = vadd.f32 %v1659, %v1660
      %v1667 = vadd.f32 %v1666, %v1661
      %v1668 = vadd.f32 %v1667, %v1662
      %v1669 = vadd.f32 %v1668, %v1663
      %v1670 = vadd.f32 %v1669, %v1664
      %v1671 = vadd.f32 %v1670, %v1665
      %1672 = vadd.xlane.f32.xlu0 %v1671
      %v1673 = vpop.xlane.xlu0 %1672
      %v1674 = vmul.f32 %v1659, %v1616
      %v1675 = vmul.f32 %v1660, %v1617
      %v1676 = vmul.f32 %v1661, %v1618
      %v1677 = vmul.f32 %v1662, %v1619
      %v1678 = vmul.f32 %v1663, %v1620
      %v1679 = vmul.f32 %v1664, %v1621
      %v1680 = vmul.f32 %v1665, %v1622
      %v1681 = vadd.f32 %v1674, %v1675
      %v1682 = vadd.f32 %v1681, %v1676
      %v1683 = vadd.f32 %v1682, %v1677
      %v1684 = vadd.f32 %v1683, %v1678
      %v1685 = vadd.f32 %v1684, %v1679
      %v1686 = vadd.f32 %v1685, %v1680
      %1687 = vadd.xlane.f32.xlu0 %v1686
      %v1688 = vpop.xlane.xlu0 %1687
      %v1689 = vmul.f32 %v1673, 0.001953125
      %v1690 = vmul.f32 %v1688, 0.001953125
      %v1691 = vmul.f32 %v1689, %v1689
      %v1692 = vsub.f32 %v1690, %v1691
      %v1693 = vmax.f32 %v1692, 0.0
      %v1694 = vsub.f32 %v1616, %v1689
      %v1695 = vsub.f32 %v1617, %v1689
      %v1696 = vsub.f32 %v1618, %v1689
      %v1697 = vsub.f32 %v1619, %v1689
      %v1698 = vsub.f32 %v1620, %v1689
      %v1699 = vsub.f32 %v1621, %v1689
      %v1700 = vsub.f32 %v1622, %v1689
      %v1701 = vadd.f32 %v1693, 1e-05
      %v1702 = vrsqrt.pop %v1701
      %v1703 = vmul.f32 %v1694, %v1702
      %v1704 = vmul.f32 %v1695, %v1702
      %v1705 = vmul.f32 %v1696, %v1702
      %v1706 = vmul.f32 %v1697, %v1702
      %v1707 = vmul.f32 %v1698, %v1702
      %v1708 = vmul.f32 %v1699, %v1702
      %v1709 = vmul.f32 %v1700, %v1702
      %v1710 = vmax.f32 %v1703, 0.0
      %v1711 = vmax.f32 %v1704, 0.0
      %v1712 = vmax.f32 %v1705, 0.0
      %v1713 = vmax.f32 %v1706, 0.0
      %v1714 = vmax.f32 %v1707, 0.0
      %v1715 = vmax.f32 %v1708, 0.0
      %v1716 = vmax.f32 %v1709, 0.0
      %v1717 = vmul.f32 %v1710, %v1627
      %v1718 = vmul.f32 %v1711, %v1631
      %v1719 = vmul.f32 %v1712, %v1635
      %v1720 = vmul.f32 %v1713, %v1639
      %v1721 = vmul.f32 %v1714, %v1643
      %v1722 = vmul.f32 %v1715, %v1647
      %v1723 = vmul.f32 %v1716, %v1651
      %1724 = vst [vmem:[#allocation2] sm:$0xf] 0
      %1725 = vst [vmem:[#allocation2 + $0x20] sm:$0xf] 0
      %v1726 = vpack.c.bf16 %v1717, %v1717
      %v1727 = vpack.c.bf16 %v1718, %v1718
      %v1728 = vpack.c.bf16 %v1719, %v1719
      %v1729 = vpack.c.bf16 %v1720, %v1720
      %v1730 = vpack.c.bf16 %v1721, %v1721
      %v1731 = vpack.c.bf16 %v1722, %v1722
      %v1732 = vpack.c.bf16 %v1723, %v1723
      %v1740 = vunpack.c.l.b16 %v1726
      %v1741 = vunpack.c.l.b16 %v1727
      %v1742 = vunpack.c.l.b16 %v1728
      %v1743 = vunpack.c.l.b16 %v1729
      %v1744 = vunpack.c.l.b16 %v1730
      %v1745 = vunpack.c.l.b16 %v1731
      %v1746 = vunpack.c.l.b16 %v1732
      %v1747 = vpack.c.b16 %v1741, %v1740
      %v1748 = vpack.c.b16 %v1743, %v1742
      %v1749 = vpack.c.b16 %v1745, %v1744
      %v1750 = vpack.c.b16 %v1746, %v1746
      %1755 = vst [vmem:[#allocation2 + $0x4] sm:$0xff] %v1747
      %1756 = vst [vmem:[#allocation2 + $0xc] sm:$0xff] %v1748
      %1757 = vst [vmem:[#allocation2 + $0x14] sm:$0xff] %v1749
      %1758 = vst [vmem:[#allocation2 + $0x1c] sm:$0xf] %v1750
      %v1759 = vld [vmem:[#allocation2] sm:$0xff]
      %v1760 = vld [vmem:[#allocation2 + $0x8] sm:$0xff]
      %v1761 = vld [vmem:[#allocation2 + $0x10] sm:$0xff]
      %v1762 = vld [vmem:[#allocation2 + $0x18] sm:$0xff]
      %v1763 = vld [vmem:[#allocation2 + $0x20] sm:$0xf]
      %v1768 = vunpack.c.l.b16 %v1759
      %v1769 = vunpack.c.h.b16 %v1759
      %v1770 = vunpack.c.l.b16 %v1760
      %v1771 = vunpack.c.h.b16 %v1760
      %v1772 = vunpack.c.l.b16 %v1761
      %v1773 = vunpack.c.h.b16 %v1761
      %v1774 = vunpack.c.l.b16 %v1762
      %v1775 = vunpack.c.h.b16 %v1762
      %v1776 = vpack.c.b16 %v1768, %v1768
      %v1777 = vpack.c.b16 %v1769, %v1769
      %v1778 = vpack.c.b16 %v1770, %v1770
      %v1779 = vpack.c.b16 %v1771, %v1771
      %v1780 = vpack.c.b16 %v1772, %v1772
      %v1781 = vpack.c.b16 %v1773, %v1773
      %v1782 = vpack.c.b16 %v1774, %v1774
      %v1783 = vpack.c.b16 %v1775, %v1775
      %1784 = vrot.lane.b32.xlu0 %v1776, 127
      %v1785 = vpop.permute.xlu0 %1784
      %1786 = vrot.lane.b32.xlu0 %v1777, 127
      %v1787 = vpop.permute.xlu0 %1786
      %1788 = vrot.lane.b32.xlu0 %v1778, 127
      %v1789 = vpop.permute.xlu0 %1788
      %1790 = vrot.lane.b32.xlu0 %v1779, 127
      %v1791 = vpop.permute.xlu0 %1790
      %1792 = vrot.lane.b32.xlu0 %v1780, 127
      %v1793 = vpop.permute.xlu0 %1792
      %1794 = vrot.lane.b32.xlu0 %v1781, 127
      %v1795 = vpop.permute.xlu0 %1794
      %1796 = vrot.lane.b32.xlu0 %v1782, 127
      %v1797 = vpop.permute.xlu0 %1796
      %1798 = vrot.lane.b32.xlu0 %v1783, 127
      %v1799 = vpop.permute.xlu0 %1798
      %v1800 = vsel %vm241, %v1785, %v1787
      %v1801 = vsel %vm241, %v1787, %v1789
      %v1802 = vsel %vm241, %v1789, %v1791
      %v1803 = vsel %vm241, %v1791, %v1793
      %v1804 = vsel %vm241, %v1793, %v1795
      %v1805 = vsel %vm241, %v1795, %v1797
      %v1806 = vsel %vm241, %v1797, %v1799
      %1807 = vrot.lane.b32.xlu0 %v1776, 126
      %v1808 = vpop.permute.xlu0 %1807
      %1809 = vrot.lane.b32.xlu0 %v1777, 126
      %v1810 = vpop.permute.xlu0 %1809
      %1811 = vrot.lane.b32.xlu0 %v1778, 126
      %v1812 = vpop.permute.xlu0 %1811
      %1813 = vrot.lane.b32.xlu0 %v1779, 126
      %v1814 = vpop.permute.xlu0 %1813
      %1815 = vrot.lane.b32.xlu0 %v1780, 126
      %v1816 = vpop.permute.xlu0 %1815
      %1817 = vrot.lane.b32.xlu0 %v1781, 126
      %v1818 = vpop.permute.xlu0 %1817
      %1819 = vrot.lane.b32.xlu0 %v1782, 126
      %v1820 = vpop.permute.xlu0 %1819
      %1821 = vrot.lane.b32.xlu0 %v1783, 126
      %v1822 = vpop.permute.xlu0 %1821
      %v1823 = vsel %vm265, %v1808, %v1810
      %v1824 = vsel %vm265, %v1810, %v1812
      %v1825 = vsel %vm265, %v1812, %v1814
      %v1826 = vsel %vm265, %v1814, %v1816
      %v1827 = vsel %vm265, %v1816, %v1818
      %v1828 = vsel %vm265, %v1818, %v1820
      %v1829 = vsel %vm265, %v1820, %v1822
      %1830 = vrot.lane.b32.xlu0 %v1776, 118
      %v1831 = vpop.permute.xlu0 %1830
      %1832 = vrot.lane.b32.xlu0 %v1777, 118
      %v1833 = vpop.permute.xlu0 %1832
      %1834 = vrot.lane.b32.xlu0 %v1778, 118
      %v1835 = vpop.permute.xlu0 %1834
      %1836 = vrot.lane.b32.xlu0 %v1779, 118
      %v1837 = vpop.permute.xlu0 %1836
      %1838 = vrot.lane.b32.xlu0 %v1780, 118
      %v1839 = vpop.permute.xlu0 %1838
      %1840 = vrot.lane.b32.xlu0 %v1781, 118
      %v1841 = vpop.permute.xlu0 %1840
      %1842 = vrot.lane.b32.xlu0 %v1782, 118
      %v1843 = vpop.permute.xlu0 %1842
      %1844 = vrot.lane.b32.xlu0 %v1783, 118
      %v1845 = vpop.permute.xlu0 %1844
      %v1846 = vsel %vm289, %v1831, %v1833
      %v1847 = vsel %vm289, %v1833, %v1835
      %v1848 = vsel %vm289, %v1835, %v1837
      %v1849 = vsel %vm289, %v1837, %v1839
      %v1850 = vsel %vm289, %v1839, %v1841
      %v1851 = vsel %vm289, %v1841, %v1843
      %v1852 = vsel %vm289, %v1843, %v1845
      %1853 = vrot.lane.b32.xlu0 %v1776, 117
      %v1854 = vpop.permute.xlu0 %1853
      %1855 = vrot.lane.b32.xlu0 %v1777, 117
      %v1856 = vpop.permute.xlu0 %1855
      %1857 = vrot.lane.b32.xlu0 %v1778, 117
      %v1858 = vpop.permute.xlu0 %1857
      %1859 = vrot.lane.b32.xlu0 %v1779, 117
      %v1860 = vpop.permute.xlu0 %1859
      %1861 = vrot.lane.b32.xlu0 %v1780, 117
      %v1862 = vpop.permute.xlu0 %1861
      %1863 = vrot.lane.b32.xlu0 %v1781, 117
      %v1864 = vpop.permute.xlu0 %1863
      %1865 = vrot.lane.b32.xlu0 %v1782, 117
      %v1866 = vpop.permute.xlu0 %1865
      %1867 = vrot.lane.b32.xlu0 %v1783, 117
      %v1868 = vpop.permute.xlu0 %1867
      %v1869 = vsel %vm313, %v1854, %v1856
      %v1870 = vsel %vm313, %v1856, %v1858
      %v1871 = vsel %vm313, %v1858, %v1860
      %v1872 = vsel %vm313, %v1860, %v1862
      %v1873 = vsel %vm313, %v1862, %v1864
      %v1874 = vsel %vm313, %v1864, %v1866
      %v1875 = vsel %vm313, %v1866, %v1868
      %1876 = vrot.lane.b32.xlu0 %v1776, 116
      %v1877 = vpop.permute.xlu0 %1876
      %1878 = vrot.lane.b32.xlu0 %v1777, 116
      %v1879 = vpop.permute.xlu0 %1878
      %1880 = vrot.lane.b32.xlu0 %v1778, 116
      %v1881 = vpop.permute.xlu0 %1880
      %1882 = vrot.lane.b32.xlu0 %v1779, 116
      %v1883 = vpop.permute.xlu0 %1882
      %1884 = vrot.lane.b32.xlu0 %v1780, 116
      %v1885 = vpop.permute.xlu0 %1884
      %1886 = vrot.lane.b32.xlu0 %v1781, 116
      %v1887 = vpop.permute.xlu0 %1886
      %1888 = vrot.lane.b32.xlu0 %v1782, 116
      %v1889 = vpop.permute.xlu0 %1888
      %1890 = vrot.lane.b32.xlu0 %v1783, 116
      %v1891 = vpop.permute.xlu0 %1890
      %v1892 = vsel %vm337, %v1877, %v1879
      %v1893 = vsel %vm337, %v1879, %v1881
      %v1894 = vsel %vm337, %v1881, %v1883
      %v1895 = vsel %vm337, %v1883, %v1885
      %v1896 = vsel %vm337, %v1885, %v1887
      %v1897 = vsel %vm337, %v1887, %v1889
      %v1898 = vsel %vm337, %v1889, %v1891
      %1899 = vrot.lane.b32.xlu0 %v1776, 108
      %v1900 = vpop.permute.xlu0 %1899
      %1901 = vrot.lane.b32.xlu0 %v1777, 108
      %v1902 = vpop.permute.xlu0 %1901
      %1903 = vrot.lane.b32.xlu0 %v1778, 108
      %v1904 = vpop.permute.xlu0 %1903
      %1905 = vrot.lane.b32.xlu0 %v1779, 108
      %v1906 = vpop.permute.xlu0 %1905
      %1907 = vrot.lane.b32.xlu0 %v1780, 108
      %v1908 = vpop.permute.xlu0 %1907
      %1909 = vrot.lane.b32.xlu0 %v1781, 108
      %v1910 = vpop.permute.xlu0 %1909
      %1911 = vrot.lane.b32.xlu0 %v1782, 108
      %v1912 = vpop.permute.xlu0 %1911
      %1913 = vrot.lane.b32.xlu0 %v1783, 108
      %v1914 = vpop.permute.xlu0 %1913
      %v1915 = vsel %vm361, %v1900, %v1902
      %v1916 = vsel %vm361, %v1902, %v1904
      %v1917 = vsel %vm361, %v1904, %v1906
      %v1918 = vsel %vm361, %v1906, %v1908
      %v1919 = vsel %vm361, %v1908, %v1910
      %v1920 = vsel %vm361, %v1910, %v1912
      %v1921 = vsel %vm361, %v1912, %v1914
      %1922 = vrot.lane.b32.xlu0 %v1776, 107
      %v1923 = vpop.permute.xlu0 %1922
      %1924 = vrot.lane.b32.xlu0 %v1777, 107
      %v1925 = vpop.permute.xlu0 %1924
      %1926 = vrot.lane.b32.xlu0 %v1778, 107
      %v1927 = vpop.permute.xlu0 %1926
      %1928 = vrot.lane.b32.xlu0 %v1779, 107
      %v1929 = vpop.permute.xlu0 %1928
      %1930 = vrot.lane.b32.xlu0 %v1780, 107
      %v1931 = vpop.permute.xlu0 %1930
      %1932 = vrot.lane.b32.xlu0 %v1781, 107
      %v1933 = vpop.permute.xlu0 %1932
      %1934 = vrot.lane.b32.xlu0 %v1782, 107
      %v1935 = vpop.permute.xlu0 %1934
      %1936 = vrot.lane.b32.xlu0 %v1783, 107
      %v1937 = vpop.permute.xlu0 %1936
      %v1938 = vsel %vm385, %v1923, %v1925
      %v1939 = vsel %vm385, %v1925, %v1927
      %v1940 = vsel %vm385, %v1927, %v1929
      %v1941 = vsel %vm385, %v1929, %v1931
      %v1942 = vsel %vm385, %v1931, %v1933
      %v1943 = vsel %vm385, %v1933, %v1935
      %v1944 = vsel %vm385, %v1935, %v1937
      %1945 = vrot.lane.b32.xlu0 %v1776, 106
      %v1946 = vpop.permute.xlu0 %1945
      %1947 = vrot.lane.b32.xlu0 %v1777, 106
      %v1948 = vpop.permute.xlu0 %1947
      %1949 = vrot.lane.b32.xlu0 %v1778, 106
      %v1950 = vpop.permute.xlu0 %1949
      %1951 = vrot.lane.b32.xlu0 %v1779, 106
      %v1952 = vpop.permute.xlu0 %1951
      %1953 = vrot.lane.b32.xlu0 %v1780, 106
      %v1954 = vpop.permute.xlu0 %1953
      %1955 = vrot.lane.b32.xlu0 %v1781, 106
      %v1956 = vpop.permute.xlu0 %1955
      %1957 = vrot.lane.b32.xlu0 %v1782, 106
      %v1958 = vpop.permute.xlu0 %1957
      %1959 = vrot.lane.b32.xlu0 %v1783, 106
      %v1960 = vpop.permute.xlu0 %1959
      %v1961 = vsel %vm409, %v1946, %v1948
      %v1962 = vsel %vm409, %v1948, %v1950
      %v1963 = vsel %vm409, %v1950, %v1952
      %v1964 = vsel %vm409, %v1952, %v1954
      %v1965 = vsel %vm409, %v1954, %v1956
      %v1966 = vsel %vm409, %v1956, %v1958
      %v1967 = vsel %vm409, %v1958, %v1960
      %v1970 = vsel %vm417, %v1776, %v1800
      %v1973 = vsel %vm417, %v1777, %v1801
      %v1976 = vsel %vm417, %v1778, %v1802
      %v1979 = vsel %vm417, %v1779, %v1803
      %v1982 = vsel %vm417, %v1780, %v1804
      %v1985 = vsel %vm417, %v1781, %v1805
      %v1988 = vsel %vm417, %v1782, %v1806
      %v1991 = vsel %vm417, %v1783, %v1799
      %v1994 = vsel %vm417, %v1823, %v1846
      %v1997 = vsel %vm417, %v1824, %v1847
      %v2000 = vsel %vm417, %v1825, %v1848
      %v2003 = vsel %vm417, %v1826, %v1849
      %v2006 = vsel %vm417, %v1827, %v1850
      %v2009 = vsel %vm417, %v1828, %v1851
      %v2012 = vsel %vm417, %v1829, %v1852
      %v2015 = vsel %vm417, %v1822, %v1845
      %v2018 = vsel %vm417, %v1869, %v1892
      %v2021 = vsel %vm417, %v1870, %v1893
      %v2024 = vsel %vm417, %v1871, %v1894
      %v2027 = vsel %vm417, %v1872, %v1895
      %v2030 = vsel %vm417, %v1873, %v1896
      %v2033 = vsel %vm417, %v1874, %v1897
      %v2036 = vsel %vm417, %v1875, %v1898
      %v2039 = vsel %vm417, %v1868, %v1891
      %v2042 = vsel %vm417, %v1915, %v1938
      %v2045 = vsel %vm417, %v1916, %v1939
      %v2048 = vsel %vm417, %v1917, %v1940
      %v2051 = vsel %vm417, %v1918, %v1941
      %v2054 = vsel %vm417, %v1919, %v1942
      %v2057 = vsel %vm417, %v1920, %v1943
      %v2060 = vsel %vm417, %v1921, %v1944
      %v2063 = vsel %vm417, %v1914, %v1937
      %v2064 = vld [vmem:[%s2] sm:$0xf]
      %v2066 = vunpack.c.l.b16 %v1763
      %v2067 = vpack.c.b16 %v2066, %v2066
      %2068 = vrot.lane.b32.xlu0 %v2067, 116
      %v2069 = vpop.permute.xlu0 %2068
      %v2070 = vsel %vm337, %v1891, %v2069
      %2071 = vrot.lane.b32.xlu0 %v2067, 108
      %v2072 = vpop.permute.xlu0 %2071
      %v2073 = vsel %vm361, %v1914, %v2072
      %2074 = vrot.lane.b32.xlu0 %v2067, 107
      %v2075 = vpop.permute.xlu0 %2074
      %v2076 = vsel %vm385, %v1937, %v2075
      %2077 = vrot.lane.b32.xlu0 %v2067, 106
      %v2078 = vpop.permute.xlu0 %2077
      %v2079 = vsel %vm409, %v1960, %v2078
      %v2082 = vsel %vm417, %v1856, %v1879
      %v2084 = vsel %vm417, %v1868, %v2070
      %v2087 = vsel %vm417, %v1902, %v1925
      %v2090 = vsel %vm417, %v2073, %v2076
      %s2091 = scalar_lea.vmem %s2, 4
      %v2092 = vld [vmem:[%s2091] sm:$0xf]
      %2125 = vrot.lane.b32.xlu0 %v1970, 11
      %v2126 = vpop.permute.xlu0 %2125
      %2127 = vrot.lane.b32.xlu0 %v1973, 11
      %v2128 = vpop.permute.xlu0 %2127
      %2129 = vrot.lane.b32.xlu0 %v1976, 11
      %v2130 = vpop.permute.xlu0 %2129
      %2131 = vrot.lane.b32.xlu0 %v1979, 11
      %v2132 = vpop.permute.xlu0 %2131
      %2133 = vrot.lane.b32.xlu0 %v1982, 11
      %v2134 = vpop.permute.xlu0 %2133
      %2135 = vrot.lane.b32.xlu0 %v1985, 11
      %v2136 = vpop.permute.xlu0 %2135
      %2137 = vrot.lane.b32.xlu0 %v1988, 11
      %v2138 = vpop.permute.xlu0 %2137
      %2139 = vrot.lane.b32.xlu0 %v1991, 11
      %v2140 = vpop.permute.xlu0 %2139
      %2141 = vrot.lane.b32.xlu0 %v1994, 11
      %v2142 = vpop.permute.xlu0 %2141
      %2143 = vrot.lane.b32.xlu0 %v1997, 11
      %v2144 = vpop.permute.xlu0 %2143
      %2145 = vrot.lane.b32.xlu0 %v2000, 11
      %v2146 = vpop.permute.xlu0 %2145
      %2147 = vrot.lane.b32.xlu0 %v2003, 11
      %v2148 = vpop.permute.xlu0 %2147
      %2149 = vrot.lane.b32.xlu0 %v2006, 11
      %v2150 = vpop.permute.xlu0 %2149
      %2151 = vrot.lane.b32.xlu0 %v2009, 11
      %v2152 = vpop.permute.xlu0 %2151
      %2153 = vrot.lane.b32.xlu0 %v2012, 11
      %v2154 = vpop.permute.xlu0 %2153
      %2155 = vrot.lane.b32.xlu0 %v2015, 11
      %v2156 = vpop.permute.xlu0 %2155
      %2157 = vrot.lane.b32.xlu0 %v2082, 11
      %v2158 = vpop.permute.xlu0 %2157
      %2159 = vrot.lane.b32.xlu0 %v2021, 11
      %v2160 = vpop.permute.xlu0 %2159
      %2161 = vrot.lane.b32.xlu0 %v2024, 11
      %v2162 = vpop.permute.xlu0 %2161
      %2163 = vrot.lane.b32.xlu0 %v2027, 11
      %v2164 = vpop.permute.xlu0 %2163
      %2165 = vrot.lane.b32.xlu0 %v2030, 11
      %v2166 = vpop.permute.xlu0 %2165
      %2167 = vrot.lane.b32.xlu0 %v2033, 11
      %v2168 = vpop.permute.xlu0 %2167
      %2169 = vrot.lane.b32.xlu0 %v2036, 11
      %v2170 = vpop.permute.xlu0 %2169
      %2171 = vrot.lane.b32.xlu0 %v2084, 11
      %v2172 = vpop.permute.xlu0 %2171
      %2173 = vrot.lane.b32.xlu0 %v2087, 11
      %v2174 = vpop.permute.xlu0 %2173
      %2175 = vrot.lane.b32.xlu0 %v2045, 11
      %v2176 = vpop.permute.xlu0 %2175
      %2177 = vrot.lane.b32.xlu0 %v2048, 11
      %v2178 = vpop.permute.xlu0 %2177
      %2179 = vrot.lane.b32.xlu0 %v2051, 11
      %v2180 = vpop.permute.xlu0 %2179
      %2181 = vrot.lane.b32.xlu0 %v2054, 11
      %v2182 = vpop.permute.xlu0 %2181
      %2183 = vrot.lane.b32.xlu0 %v2057, 11
      %v2184 = vpop.permute.xlu0 %2183
      %2185 = vrot.lane.b32.xlu0 %v2060, 11
      %v2186 = vpop.permute.xlu0 %2185
      %2187 = vrot.lane.b32.xlu0 %v2090, 11
      %v2188 = vpop.permute.xlu0 %2187
      %2189 = vrot.lane.b32.xlu0 %v1948, 11
      %v2190 = vpop.permute.xlu0 %2189
      %2191 = vrot.lane.b32.xlu0 %v1962, 11
      %v2192 = vpop.permute.xlu0 %2191
      %2193 = vrot.lane.b32.xlu0 %v1963, 11
      %v2194 = vpop.permute.xlu0 %2193
      %2195 = vrot.lane.b32.xlu0 %v1964, 11
      %v2196 = vpop.permute.xlu0 %2195
      %2197 = vrot.lane.b32.xlu0 %v1965, 11
      %v2198 = vpop.permute.xlu0 %2197
      %2199 = vrot.lane.b32.xlu0 %v1966, 11
      %v2200 = vpop.permute.xlu0 %2199
      %2201 = vrot.lane.b32.xlu0 %v1967, 11
      %v2202 = vpop.permute.xlu0 %2201
      %2203 = vrot.lane.b32.xlu0 %v2079, 11
      %v2204 = vpop.permute.xlu0 %2203
      %vm2205 = vcmask 89088
      %v2206 = vsel %vm2205, %v2126, %v2128
      %v2207 = vsel %vm2205, %v2128, %v2130
      %v2208 = vsel %vm2205, %v2130, %v2132
      %v2209 = vsel %vm2205, %v2132, %v2134
      %v2210 = vsel %vm2205, %v2134, %v2136
      %v2211 = vsel %vm2205, %v2136, %v2138
      %v2212 = vsel %vm2205, %v2138, %v2140
      %v2213 = vsel %vm2205, %v2142, %v2144
      %v2214 = vsel %vm2205, %v2144, %v2146
      %v2215 = vsel %vm2205, %v2146, %v2148
      %v2216 = vsel %vm2205, %v2148, %v2150
      %v2217 = vsel %vm2205, %v2150, %v2152
      %v2218 = vsel %vm2205, %v2152, %v2154
      %v2219 = vsel %vm2205, %v2154, %v2156
      %v2220 = vsel %vm2205, %v2158, %v2160
      %v2221 = vsel %vm2205, %v2160, %v2162
      %v2222 = vsel %vm2205, %v2162, %v2164
      %v2223 = vsel %vm2205, %v2164, %v2166
      %v2224 = vsel %vm2205, %v2166, %v2168
      %v2225 = vsel %vm2205, %v2168, %v2170
      %v2226 = vsel %vm2205, %v2170, %v2172
      %v2227 = vsel %vm2205, %v2174, %v2176
      %v2228 = vsel %vm2205, %v2176, %v2178
      %v2229 = vsel %vm2205, %v2178, %v2180
      %v2230 = vsel %vm2205, %v2180, %v2182
      %v2231 = vsel %vm2205, %v2182, %v2184
      %v2232 = vsel %vm2205, %v2184, %v2186
      %v2233 = vsel %vm2205, %v2186, %v2188
      %v2234 = vsel %vm2205, %v2190, %v2192
      %v2235 = vsel %vm2205, %v2192, %v2194
      %v2236 = vsel %vm2205, %v2194, %v2196
      %v2237 = vsel %vm2205, %v2196, %v2198
      %v2238 = vsel %vm2205, %v2198, %v2200
      %v2239 = vsel %vm2205, %v2200, %v2202
      %v2240 = vsel %vm2205, %v2202, %v2204
      %v2270 = vsel %vm721, %v2092, 0
      %v2273 = vsel %vm417, %v2234, 0
      %v2276 = vsel %vm417, %v2235, 0
      %v2279 = vsel %vm417, %v2236, 0
      %v2282 = vsel %vm417, %v2237, 0
      %v2285 = vsel %vm417, %v2238, 0
      %v2288 = vsel %vm417, %v2239, 0
      %v2291 = vsel %vm417, %v2240, 0
      %2293 = vmatprep.subr.bf16.mxu0 %v2207
      %2294 = vmatpush1.bf16.msra.mxu0 %v2206
      %2295 = vmatprep.subr.bf16.mxu0 %v2214
      %2296 = vmatpush1.bf16.msra.mxu0 %v2213
      %2297 = vmatprep.subr.bf16.mxu0 %v2221
      %2298 = vmatpush1.bf16.msra.mxu0 %v2220
      %2299 = vmatprep.subr.bf16.mxu0 %v2228
      %2300 = vmatpush1.bf16.msra.mxu0 %v2227
      %2301 = vmatprep.subr.bf16.mxu0 %v2276
      %2302 = vmatpush1.bf16.msra.mxu0 %v2273
      %2303 = vmatprep.subr.bf16.mxu0 0
      %2304 = vmatpush1.bf16.msra.mxu0 0
      %2305 = vmatprep.subr.bf16.mxu0 0
      %2306 = vmatpush1.bf16.msra.mxu0 0
      %2307 = vmatprep.subr.bf16.mxu0 0
      %2308 = vmatpush1.bf16.msra.mxu0 0
      %2309 = vmatprep.subr.bf16.mxu0 0
      %2310 = vmatpush1.bf16.msra.mxu0 0
      %2311 = vmatprep.subr.bf16.mxu0 0
      %2312 = vmatpush1.bf16.msra.mxu0 0
      %2313 = vmatprep.subr.bf16.mxu0 0
      %2314 = vmatpush1.bf16.msra.mxu0 0
      %2315 = vmatprep.subr.bf16.mxu0 0
      %2316 = vmatpush1.bf16.msra.mxu0 0
      %2317 = vmatprep.subr.bf16.mxu0 0
      %2318 = vmatpush1.bf16.msra.mxu0 0
      %2319 = vmatprep.subr.bf16.mxu0 0
      %2320 = vmatpush1.bf16.msra.mxu0 0
      %2321 = vmatprep.subr.bf16.mxu0 0
      %2322 = vmatpush1.bf16.msra.mxu0 0
      %2323 = vmatprep.subr.bf16.mxu0 0
      %2324 = vmatpush1.bf16.msra.mxu0 0
      %2325 = vmatprep.mubr.bf16.mxu0 0
      %2326 = vmatmul.mubr.bf16.gmra.mrb[0].mxu0 %v2270
      %v2327 = vpop.f32.mrb[0].mxu0
      %v2328 = vadd.f32 0.0, %v2327
      %v2329 = vpop.f32.mrb[0].mxu0
      %v2330 = vadd.f32 0.0, %v2329
      %v2331 = vpop.f32.mrb[0].mxu0
      %v2332 = vpop.f32.mrb[0].mxu0
      %2333 = vdwg.mxu0
      %2334 = vmatprep.subr.bf16.mxu0 %v2209
      %2335 = vmatpush1.bf16.msra.mxu0 %v2208
      %2336 = vmatprep.subr.bf16.mxu0 %v2216
      %2337 = vmatpush1.bf16.msra.mxu0 %v2215
      %2338 = vmatprep.subr.bf16.mxu0 %v2223
      %2339 = vmatpush1.bf16.msra.mxu0 %v2222
      %2340 = vmatprep.subr.bf16.mxu0 %v2230
      %2341 = vmatpush1.bf16.msra.mxu0 %v2229
      %2342 = vmatprep.subr.bf16.mxu0 %v2282
      %2343 = vmatpush1.bf16.msra.mxu0 %v2279
      %2344 = vmatprep.subr.bf16.mxu0 0
      %2345 = vmatpush1.bf16.msra.mxu0 0
      %2346 = vmatprep.subr.bf16.mxu0 0
      %2347 = vmatpush1.bf16.msra.mxu0 0
      %2348 = vmatprep.subr.bf16.mxu0 0
      %2349 = vmatpush1.bf16.msra.mxu0 0
      %2350 = vmatprep.subr.bf16.mxu0 0
      %2351 = vmatpush1.bf16.msra.mxu0 0
      %2352 = vmatprep.subr.bf16.mxu0 0
      %2353 = vmatpush1.bf16.msra.mxu0 0
      %2354 = vmatprep.subr.bf16.mxu0 0
      %2355 = vmatpush1.bf16.msra.mxu0 0
      %2356 = vmatprep.subr.bf16.mxu0 0
      %2357 = vmatpush1.bf16.msra.mxu0 0
      %2358 = vmatprep.subr.bf16.mxu0 0
      %2359 = vmatpush1.bf16.msra.mxu0 0
      %2360 = vmatprep.subr.bf16.mxu0 0
      %2361 = vmatpush1.bf16.msra.mxu0 0
      %2362 = vmatprep.subr.bf16.mxu0 0
      %2363 = vmatpush1.bf16.msra.mxu0 0
      %2364 = vmatprep.subr.bf16.mxu0 0
      %2365 = vmatpush1.bf16.msra.mxu0 0
      %2366 = vmatprep.mubr.bf16.mxu0 0
      %2367 = vmatmul.mubr.bf16.gmra.mrb[0].mxu0 %v2270
      %v2368 = vpop.f32.mrb[0].mxu0
      %v2369 = vadd.f32 0.0, %v2368
      %v2370 = vpop.f32.mrb[0].mxu0
      %v2371 = vadd.f32 0.0, %v2370
      %v2372 = vpop.f32.mrb[0].mxu0
      %v2373 = vpop.f32.mrb[0].mxu0
      %2374 = vdwg.mxu0
      %2375 = vmatprep.subr.bf16.mxu0 %v2211
      %2376 = vmatpush1.bf16.msra.mxu0 %v2210
      %2377 = vmatprep.subr.bf16.mxu0 %v2218
      %2378 = vmatpush1.bf16.msra.mxu0 %v2217
      %2379 = vmatprep.subr.bf16.mxu0 %v2225
      %2380 = vmatpush1.bf16.msra.mxu0 %v2224
      %2381 = vmatprep.subr.bf16.mxu0 %v2232
      %2382 = vmatpush1.bf16.msra.mxu0 %v2231
      %2383 = vmatprep.subr.bf16.mxu0 %v2288
      %2384 = vmatpush1.bf16.msra.mxu0 %v2285
      %2385 = vmatprep.subr.bf16.mxu0 0
      %2386 = vmatpush1.bf16.msra.mxu0 0
      %2387 = vmatprep.subr.bf16.mxu0 0
      %2388 = vmatpush1.bf16.msra.mxu0 0
      %2389 = vmatprep.subr.bf16.mxu0 0
      %2390 = vmatpush1.bf16.msra.mxu0 0
      %2391 = vmatprep.subr.bf16.mxu0 0
      %2392 = vmatpush1.bf16.msra.mxu0 0
      %2393 = vmatprep.subr.bf16.mxu0 0
      %2394 = vmatpush1.bf16.msra.mxu0 0
      %2395 = vmatprep.subr.bf16.mxu0 0
      %2396 = vmatpush1.bf16.msra.mxu0 0
      %2397 = vmatprep.subr.bf16.mxu0 0
      %2398 = vmatpush1.bf16.msra.mxu0 0
      %2399 = vmatprep.subr.bf16.mxu0 0
      %2400 = vmatpush1.bf16.msra.mxu0 0
      %2401 = vmatprep.subr.bf16.mxu0 0
      %2402 = vmatpush1.bf16.msra.mxu0 0
      %2403 = vmatprep.subr.bf16.mxu0 0
      %2404 = vmatpush1.bf16.msra.mxu0 0
      %2405 = vmatprep.subr.bf16.mxu0 0
      %2406 = vmatpush1.bf16.msra.mxu0 0
      %2407 = vmatprep.mubr.bf16.mxu0 0
      %2408 = vmatmul.mubr.bf16.gmra.mrb[0].mxu0 %v2270
      %v2409 = vpop.f32.mrb[0].mxu0
      %v2410 = vadd.f32 0.0, %v2409
      %v2411 = vpop.f32.mrb[0].mxu0
      %v2412 = vadd.f32 0.0, %v2411
      %v2413 = vpop.f32.mrb[0].mxu0
      %v2414 = vpop.f32.mrb[0].mxu0
      %2415 = vdwg.mxu0
      %2416 = vmatprep.subr.bf16.mxu0 0
      %2417 = vmatpush1.bf16.msra.mxu0 %v2212
      %2418 = vmatprep.subr.bf16.mxu0 0
      %2419 = vmatpush1.bf16.msra.mxu0 %v2219
      %2420 = vmatprep.subr.bf16.mxu0 0
      %2421 = vmatpush1.bf16.msra.mxu0 %v2226
      %2422 = vmatprep.subr.bf16.mxu0 0
      %2423 = vmatpush1.bf16.msra.mxu0 %v2233
      %2424 = vmatprep.subr.bf16.mxu0 0
      %2425 = vmatpush1.bf16.msra.mxu0 %v2291
      %2426 = vmatprep.subr.bf16.mxu0 0
      %2427 = vmatpush1.bf16.msra.mxu0 0
      %2428 = vmatprep.subr.bf16.mxu0 0
      %2429 = vmatpush1.bf16.msra.mxu0 0
      %2430 = vmatprep.subr.bf16.mxu0 0
      %2431 = vmatpush1.bf16.msra.mxu0 0
      %2432 = vmatprep.subr.bf16.mxu0 0
      %2433 = vmatpush1.bf16.msra.mxu0 0
      %2434 = vmatprep.subr.bf16.mxu0 0
      %2435 = vmatpush1.bf16.msra.mxu0 0
      %2436 = vmatprep.subr.bf16.mxu0 0
      %2437 = vmatpush1.bf16.msra.mxu0 0
      %2438 = vmatprep.subr.bf16.mxu0 0
      %2439 = vmatpush1.bf16.msra.mxu0 0
      %2440 = vmatprep.subr.bf16.mxu0 0
      %2441 = vmatpush1.bf16.msra.mxu0 0
      %2442 = vmatprep.subr.bf16.mxu0 0
      %2443 = vmatpush1.bf16.msra.mxu0 0
      %2444 = vmatprep.subr.bf16.mxu0 0
      %2445 = vmatpush1.bf16.msra.mxu0 0
      %2446 = vmatprep.subr.bf16.mxu0 0
      %2447 = vmatpush1.bf16.msra.mxu0 0
      %2448 = vmatprep.mubr.bf16.mxu0 0
      %2449 = vmatmul.mubr.bf16.gmra.mrb[0].mxu0 %v2270
      %v2450 = vpop.f32.mrb[0].mxu0
      %v2451 = vadd.f32 0.0, %v2450
      %v2452 = vpop.f32.mrb[0].mxu0
      %v2453 = vpop.f32.mrb[0].mxu0
      %v2454 = vpop.f32.mrb[0].mxu0
      %2455 = vdwg.mxu0
      %2460 = vrot.lane.b32.xlu0 %v1970, 111
      %v2461 = vpop.permute.xlu0 %2460
      %2462 = vrot.lane.b32.xlu0 %v1973, 111
      %v2463 = vpop.permute.xlu0 %2462
      %2464 = vrot.lane.b32.xlu0 %v1976, 111
      %v2465 = vpop.permute.xlu0 %2464
      %2466 = vrot.lane.b32.xlu0 %v1979, 111
      %v2467 = vpop.permute.xlu0 %2466
      %2468 = vrot.lane.b32.xlu0 %v1982, 111
      %v2469 = vpop.permute.xlu0 %2468
      %2470 = vrot.lane.b32.xlu0 %v1985, 111
      %v2471 = vpop.permute.xlu0 %2470
      %2472 = vrot.lane.b32.xlu0 %v1988, 111
      %v2473 = vpop.permute.xlu0 %2472
      %2474 = vrot.lane.b32.xlu0 %v1991, 111
      %v2475 = vpop.permute.xlu0 %2474
      %2476 = vrot.lane.b32.xlu0 %v1994, 111
      %v2477 = vpop.permute.xlu0 %2476
      %2478 = vrot.lane.b32.xlu0 %v1997, 111
      %v2479 = vpop.permute.xlu0 %2478
      %2480 = vrot.lane.b32.xlu0 %v2000, 111
      %v2481 = vpop.permute.xlu0 %2480
      %2482 = vrot.lane.b32.xlu0 %v2003, 111
      %v2483 = vpop.permute.xlu0 %2482
      %2484 = vrot.lane.b32.xlu0 %v2006, 111
      %v2485 = vpop.permute.xlu0 %2484
      %2486 = vrot.lane.b32.xlu0 %v2009, 111
      %v2487 = vpop.permute.xlu0 %2486
      %2488 = vrot.lane.b32.xlu0 %v2012, 111
      %v2489 = vpop.permute.xlu0 %2488
      %2490 = vrot.lane.b32.xlu0 %v2015, 111
      %v2491 = vpop.permute.xlu0 %2490
      %2492 = vrot.lane.b32.xlu0 %v2018, 111
      %v2493 = vpop.permute.xlu0 %2492
      %2494 = vrot.lane.b32.xlu0 %v2021, 111
      %v2495 = vpop.permute.xlu0 %2494
      %2496 = vrot.lane.b32.xlu0 %v2024, 111
      %v2497 = vpop.permute.xlu0 %2496
      %2498 = vrot.lane.b32.xlu0 %v2027, 111
      %v2499 = vpop.permute.xlu0 %2498
      %2500 = vrot.lane.b32.xlu0 %v2030, 111
      %v2501 = vpop.permute.xlu0 %2500
      %2502 = vrot.lane.b32.xlu0 %v2033, 111
      %v2503 = vpop.permute.xlu0 %2502
      %2504 = vrot.lane.b32.xlu0 %v2036, 111
      %v2505 = vpop.permute.xlu0 %2504
      %2506 = vrot.lane.b32.xlu0 %v2039, 111
      %v2507 = vpop.permute.xlu0 %2506
      %2508 = vrot.lane.b32.xlu0 %v2042, 111
      %v2509 = vpop.permute.xlu0 %2508
      %2510 = vrot.lane.b32.xlu0 %v2045, 111
      %v2511 = vpop.permute.xlu0 %2510
      %2512 = vrot.lane.b32.xlu0 %v2048, 111
      %v2513 = vpop.permute.xlu0 %2512
      %2514 = vrot.lane.b32.xlu0 %v2051, 111
      %v2515 = vpop.permute.xlu0 %2514
      %2516 = vrot.lane.b32.xlu0 %v2054, 111
      %v2517 = vpop.permute.xlu0 %2516
      %2518 = vrot.lane.b32.xlu0 %v2057, 111
      %v2519 = vpop.permute.xlu0 %2518
      %2520 = vrot.lane.b32.xlu0 %v2060, 111
      %v2521 = vpop.permute.xlu0 %2520
      %2522 = vrot.lane.b32.xlu0 %v2063, 111
      %v2523 = vpop.permute.xlu0 %2522
      %2524 = vrot.lane.b32.xlu0 %v1961, 111
      %v2525 = vpop.permute.xlu0 %2524
      %2526 = vrot.lane.b32.xlu0 %v1962, 111
      %v2527 = vpop.permute.xlu0 %2526
      %2528 = vrot.lane.b32.xlu0 %v1963, 111
      %v2529 = vpop.permute.xlu0 %2528
      %2530 = vrot.lane.b32.xlu0 %v1964, 111
      %v2531 = vpop.permute.xlu0 %2530
      %2532 = vrot.lane.b32.xlu0 %v1965, 111
      %v2533 = vpop.permute.xlu0 %2532
      %2534 = vrot.lane.b32.xlu0 %v1966, 111
      %v2535 = vpop.permute.xlu0 %2534
      %2536 = vrot.lane.b32.xlu0 %v1967, 111
      %v2537 = vpop.permute.xlu0 %2536
      %2538 = vrot.lane.b32.xlu0 %v1960, 111
      %v2539 = vpop.permute.xlu0 %2538
      %vm2540 = vcmask 908288
      %v2541 = vsel %vm2540, %v2461, %v2463
      %v2542 = vsel %vm2540, %v2463, %v2465
      %v2543 = vsel %vm2540, %v2465, %v2467
      %v2544 = vsel %vm2540, %v2467, %v2469
      %v2545 = vsel %vm2540, %v2469, %v2471
      %v2546 = vsel %vm2540, %v2471, %v2473
      %v2547 = vsel %vm2540, %v2473, %v2475
      %v2548 = vsel %vm2540, %v2477, %v2479
      %v2549 = vsel %vm2540, %v2479, %v2481
      %v2550 = vsel %vm2540, %v2481, %v2483
      %v2551 = vsel %vm2540, %v2483, %v2485
      %v2552 = vsel %vm2540, %v2485, %v2487
      %v2553 = vsel %vm2540, %v2487, %v2489
      %v2554 = vsel %vm2540, %v2489, %v2491
      %v2555 = vsel %vm2540, %v2493, %v2495
      %v2556 = vsel %vm2540, %v2495, %v2497
      %v2557 = vsel %vm2540, %v2497, %v2499
      %v2558 = vsel %vm2540, %v2499, %v2501
      %v2559 = vsel %vm2540, %v2501, %v2503
      %v2560 = vsel %vm2540, %v2503, %v2505
      %v2561 = vsel %vm2540, %v2505, %v2507
      %v2562 = vsel %vm2540, %v2509, %v2511
      %v2563 = vsel %vm2540, %v2511, %v2513
      %v2564 = vsel %vm2540, %v2513, %v2515
      %v2565 = vsel %vm2540, %v2515, %v2517
      %v2566 = vsel %vm2540, %v2517, %v2519
      %v2567 = vsel %vm2540, %v2519, %v2521
      %v2568 = vsel %vm2540, %v2521, %v2523
      %v2569 = vsel %vm2540, %v2525, %v2527
      %v2570 = vsel %vm2540, %v2527, %v2529
      %v2571 = vsel %vm2540, %v2529, %v2531
      %v2572 = vsel %vm2540, %v2531, %v2533
      %v2573 = vsel %vm2540, %v2533, %v2535
      %v2574 = vsel %vm2540, %v2535, %v2537
      %v2575 = vsel %vm2540, %v2537, %v2539
      %v2605 = vsel %vm721, %v2064, 0
      %v2608 = vsel %vm417, %v2569, 0
      %v2611 = vsel %vm417, %v2570, 0
      %v2614 = vsel %vm417, %v2571, 0
      %v2617 = vsel %vm417, %v2572, 0
      %v2620 = vsel %vm417, %v2573, 0
      %v2623 = vsel %vm417, %v2574, 0
      %v2626 = vsel %vm417, %v2575, 0
      %2628 = vmatprep.subr.bf16.mxu0 %v2542
      %2629 = vmatpush1.bf16.msra.mxu0 %v2541
      %2630 = vmatprep.subr.bf16.mxu0 %v2549
      %2631 = vmatpush1.bf16.msra.mxu0 %v2548
      %2632 = vmatprep.subr.bf16.mxu0 %v2556
      %2633 = vmatpush1.bf16.msra.mxu0 %v2555
      %2634 = vmatprep.subr.bf16.mxu0 %v2563
      %2635 = vmatpush1.bf16.msra.mxu0 %v2562
      %2636 = vmatprep.subr.bf16.mxu0 %v2611
      %2637 = vmatpush1.bf16.msra.mxu0 %v2608
      %2638 = vmatprep.subr.bf16.mxu0 0
      %2639 = vmatpush1.bf16.msra.mxu0 0
      %2640 = vmatprep.subr.bf16.mxu0 0
      %2641 = vmatpush1.bf16.msra.mxu0 0
      %2642 = vmatprep.subr.bf16.mxu0 0
      %2643 = vmatpush1.bf16.msra.mxu0 0
      %2644 = vmatprep.subr.bf16.mxu0 0
      %2645 = vmatpush1.bf16.msra.mxu0 0
      %2646 = vmatprep.subr.bf16.mxu0 0
      %2647 = vmatpush1.bf16.msra.mxu0 0
      %2648 = vmatprep.subr.bf16.mxu0 0
      %2649 = vmatpush1.bf16.msra.mxu0 0
      %2650 = vmatprep.subr.bf16.mxu0 0
      %2651 = vmatpush1.bf16.msra.mxu0 0
      %2652 = vmatprep.subr.bf16.mxu0 0
      %2653 = vmatpush1.bf16.msra.mxu0 0
      %2654 = vmatprep.subr.bf16.mxu0 0
      %2655 = vmatpush1.bf16.msra.mxu0 0
      %2656 = vmatprep.subr.bf16.mxu0 0
      %2657 = vmatpush1.bf16.msra.mxu0 0
      %2658 = vmatprep.subr.bf16.mxu0 0
      %2659 = vmatpush1.bf16.msra.mxu0 0
      %2660 = vmatprep.mubr.bf16.mxu0 0
      %2661 = vmatmul.mubr.bf16.gmra.mrb[0].mxu0 %v2605
      %v2662 = vpop.f32.mrb[0].mxu0
      %v2663 = vadd.f32 %v2328, %v2662
      %v2664 = vpop.f32.mrb[0].mxu0
      %v2665 = vadd.f32 %v2330, %v2664
      %v2666 = vpop.f32.mrb[0].mxu0
      %v2667 = vpop.f32.mrb[0].mxu0
      %2668 = vdwg.mxu0
      %2669 = vmatprep.subr.bf16.mxu0 %v2544
      %2670 = vmatpush1.bf16.msra.mxu0 %v2543
      %2671 = vmatprep.subr.bf16.mxu0 %v2551
      %2672 = vmatpush1.bf16.msra.mxu0 %v2550
      %2673 = vmatprep.subr.bf16.mxu0 %v2558
      %2674 = vmatpush1.bf16.msra.mxu0 %v2557
      %2675 = vmatprep.subr.bf16.mxu0 %v2565
      %2676 = vmatpush1.bf16.msra.mxu0 %v2564
      %2677 = vmatprep.subr.bf16.mxu0 %v2617
      %2678 = vmatpush1.bf16.msra.mxu0 %v2614
      %2679 = vmatprep.subr.bf16.mxu0 0
      %2680 = vmatpush1.bf16.msra.mxu0 0
      %2681 = vmatprep.subr.bf16.mxu0 0
      %2682 = vmatpush1.bf16.msra.mxu0 0
      %2683 = vmatprep.subr.bf16.mxu0 0
      %2684 = vmatpush1.bf16.msra.mxu0 0
      %2685 = vmatprep.subr.bf16.mxu0 0
      %2686 = vmatpush1.bf16.msra.mxu0 0
      %2687 = vmatprep.subr.bf16.mxu0 0
      %2688 = vmatpush1.bf16.msra.mxu0 0
      %2689 = vmatprep.subr.bf16.mxu0 0
      %2690 = vmatpush1.bf16.msra.mxu0 0
      %2691 = vmatprep.subr.bf16.mxu0 0
      %2692 = vmatpush1.bf16.msra.mxu0 0
      %2693 = vmatprep.subr.bf16.mxu0 0
      %2694 = vmatpush1.bf16.msra.mxu0 0
      %2695 = vmatprep.subr.bf16.mxu0 0
      %2696 = vmatpush1.bf16.msra.mxu0 0
      %2697 = vmatprep.subr.bf16.mxu0 0
      %2698 = vmatpush1.bf16.msra.mxu0 0
      %2699 = vmatprep.subr.bf16.mxu0 0
      %2700 = vmatpush1.bf16.msra.mxu0 0
      %2701 = vmatprep.mubr.bf16.mxu0 0
      %2702 = vmatmul.mubr.bf16.gmra.mrb[0].mxu0 %v2605
      %v2703 = vpop.f32.mrb[0].mxu0
      %v2704 = vadd.f32 %v2369, %v2703
      %v2705 = vpop.f32.mrb[0].mxu0
      %v2706 = vadd.f32 %v2371, %v2705
      %v2707 = vpop.f32.mrb[0].mxu0
      %v2708 = vpop.f32.mrb[0].mxu0
      %2709 = vdwg.mxu0
      %2710 = vmatprep.subr.bf16.mxu0 %v2546
      %2711 = vmatpush1.bf16.msra.mxu0 %v2545
      %2712 = vmatprep.subr.bf16.mxu0 %v2553
      %2713 = vmatpush1.bf16.msra.mxu0 %v2552
      %2714 = vmatprep.subr.bf16.mxu0 %v2560
      %2715 = vmatpush1.bf16.msra.mxu0 %v2559
      %2716 = vmatprep.subr.bf16.mxu0 %v2567
      %2717 = vmatpush1.bf16.msra.mxu0 %v2566
      %2718 = vmatprep.subr.bf16.mxu0 %v2623
      %2719 = vmatpush1.bf16.msra.mxu0 %v2620
      %2720 = vmatprep.subr.bf16.mxu0 0
      %2721 = vmatpush1.bf16.msra.mxu0 0
      %2722 = vmatprep.subr.bf16.mxu0 0
      %2723 = vmatpush1.bf16.msra.mxu0 0
      %2724 = vmatprep.subr.bf16.mxu0 0
      %2725 = vmatpush1.bf16.msra.mxu0 0
      %2726 = vmatprep.subr.bf16.mxu0 0
      %2727 = vmatpush1.bf16.msra.mxu0 0
      %2728 = vmatprep.subr.bf16.mxu0 0
      %2729 = vmatpush1.bf16.msra.mxu0 0
      %2730 = vmatprep.subr.bf16.mxu0 0
      %2731 = vmatpush1.bf16.msra.mxu0 0
      %2732 = vmatprep.subr.bf16.mxu0 0
      %2733 = vmatpush1.bf16.msra.mxu0 0
      %2734 = vmatprep.subr.bf16.mxu0 0
      %2735 = vmatpush1.bf16.msra.mxu0 0
      %2736 = vmatprep.subr.bf16.mxu0 0
      %2737 = vmatpush1.bf16.msra.mxu0 0
      %2738 = vmatprep.subr.bf16.mxu0 0
      %2739 = vmatpush1.bf16.msra.mxu0 0
      %2740 = vmatprep.subr.bf16.mxu0 0
      %2741 = vmatpush1.bf16.msra.mxu0 0
      %2742 = vmatprep.mubr.bf16.mxu0 0
      %2743 = vmatmul.mubr.bf16.gmra.mrb[0].mxu0 %v2605
      %v2744 = vpop.f32.mrb[0].mxu0
      %v2745 = vadd.f32 %v2410, %v2744
      %v2746 = vpop.f32.mrb[0].mxu0
      %v2747 = vadd.f32 %v2412, %v2746
      %v2748 = vpop.f32.mrb[0].mxu0
      %v2749 = vpop.f32.mrb[0].mxu0
      %2750 = vdwg.mxu0
      %2751 = vmatprep.subr.bf16.mxu0 0
      %2752 = vmatpush1.bf16.msra.mxu0 %v2547
      %2753 = vmatprep.subr.bf16.mxu0 0
      %2754 = vmatpush1.bf16.msra.mxu0 %v2554
      %2755 = vmatprep.subr.bf16.mxu0 0
      %2756 = vmatpush1.bf16.msra.mxu0 %v2561
      %2757 = vmatprep.subr.bf16.mxu0 0
      %2758 = vmatpush1.bf16.msra.mxu0 %v2568
      %2759 = vmatprep.subr.bf16.mxu0 0
      %2760 = vmatpush1.bf16.msra.mxu0 %v2626
      %2761 = vmatprep.subr.bf16.mxu0 0
      %2762 = vmatpush1.bf16.msra.mxu0 0
      %2763 = vmatprep.subr.bf16.mxu0 0
      %2764 = vmatpush1.bf16.msra.mxu0 0
      %2765 = vmatprep.subr.bf16.mxu0 0
      %2766 = vmatpush1.bf16.msra.mxu0 0
      %2767 = vmatprep.subr.bf16.mxu0 0
      %2768 = vmatpush1.bf16.msra.mxu0 0
      %2769 = vmatprep.subr.bf16.mxu0 0
      %2770 = vmatpush1.bf16.msra.mxu0 0
      %2771 = vmatprep.subr.bf16.mxu0 0
      %2772 = vmatpush1.bf16.msra.mxu0 0
      %2773 = vmatprep.subr.bf16.mxu0 0
      %2774 = vmatpush1.bf16.msra.mxu0 0
      %2775 = vmatprep.subr.bf16.mxu0 0
      %2776 = vmatpush1.bf16.msra.mxu0 0
      %2777 = vmatprep.subr.bf16.mxu0 0
      %2778 = vmatpush1.bf16.msra.mxu0 0
      %2779 = vmatprep.subr.bf16.mxu0 0
      %2780 = vmatpush1.bf16.msra.mxu0 0
      %2781 = vmatprep.subr.bf16.mxu0 0
      %2782 = vmatpush1.bf16.msra.mxu0 0
      %2783 = vmatprep.mubr.bf16.mxu0 0
      %2784 = vmatmul.mubr.bf16.gmra.mrb[0].mxu0 %v2605
      %v2785 = vpop.f32.mrb[0].mxu0
      %v2786 = vadd.f32 %v2451, %v2785
      %v2787 = vpop.f32.mrb[0].mxu0
      %v2788 = vpop.f32.mrb[0].mxu0
      %v2789 = vpop.f32.mrb[0].mxu0
      %2790 = vdwg.mxu0
      %2791 = vrot.lane.b32.xlu0 %v1777, 39
      %v2792 = vpop.permute.xlu0 %2791
      %2793 = vrot.lane.b32.xlu0 %v1778, 39
      %v2794 = vpop.permute.xlu0 %2793
      %2795 = vrot.lane.b32.xlu0 %v1779, 39
      %v2796 = vpop.permute.xlu0 %2795
      %2797 = vrot.lane.b32.xlu0 %v1780, 39
      %v2798 = vpop.permute.xlu0 %2797
      %2799 = vrot.lane.b32.xlu0 %v1781, 39
      %v2800 = vpop.permute.xlu0 %2799
      %2801 = vrot.lane.b32.xlu0 %v1782, 39
      %v2802 = vpop.permute.xlu0 %2801
      %2803 = vrot.lane.b32.xlu0 %v1783, 39
      %v2804 = vpop.permute.xlu0 %2803
      %2805 = vrot.lane.b32.xlu0 %v2067, 39
      %v2806 = vpop.permute.xlu0 %2805
      %vm2807 = vcmask 318464
      %v2808 = vsel %vm2807, %v2792, %v2794
      %v2809 = vsel %vm2807, %v2794, %v2796
      %v2810 = vsel %vm2807, %v2796, %v2798
      %v2811 = vsel %vm2807, %v2798, %v2800
      %v2812 = vsel %vm2807, %v2800, %v2802
      %v2813 = vsel %vm2807, %v2802, %v2804
      %v2814 = vsel %vm2807, %v2804, %v2806
      %2815 = vrot.lane.b32.xlu0 %v1777, 38
      %v2816 = vpop.permute.xlu0 %2815
      %2817 = vrot.lane.b32.xlu0 %v1778, 38
      %v2818 = vpop.permute.xlu0 %2817
      %2819 = vrot.lane.b32.xlu0 %v1779, 38
      %v2820 = vpop.permute.xlu0 %2819
      %2821 = vrot.lane.b32.xlu0 %v1780, 38
      %v2822 = vpop.permute.xlu0 %2821
      %2823 = vrot.lane.b32.xlu0 %v1781, 38
      %v2824 = vpop.permute.xlu0 %2823
      %2825 = vrot.lane.b32.xlu0 %v1782, 38
      %v2826 = vpop.permute.xlu0 %2825
      %2827 = vrot.lane.b32.xlu0 %v1783, 38
      %v2828 = vpop.permute.xlu0 %2827
      %2829 = vrot.lane.b32.xlu0 %v2067, 38
      %v2830 = vpop.permute.xlu0 %2829
      %vm2831 = vcmask 310272
      %v2832 = vsel %vm2831, %v2816, %v2818
      %v2833 = vsel %vm2831, %v2818, %v2820
      %v2834 = vsel %vm2831, %v2820, %v2822
      %v2835 = vsel %vm2831, %v2822, %v2824
      %v2836 = vsel %vm2831, %v2824, %v2826
      %v2837 = vsel %vm2831, %v2826, %v2828
      %v2838 = vsel %vm2831, %v2828, %v2830
      %2839 = vrot.lane.b32.xlu0 %v1777, 37
      %v2840 = vpop.permute.xlu0 %2839
      %2841 = vrot.lane.b32.xlu0 %v1778, 37
      %v2842 = vpop.permute.xlu0 %2841
      %2843 = vrot.lane.b32.xlu0 %v1779, 37
      %v2844 = vpop.permute.xlu0 %2843
      %2845 = vrot.lane.b32.xlu0 %v1780, 37
      %v2846 = vpop.permute.xlu0 %2845
      %2847 = vrot.lane.b32.xlu0 %v1781, 37
      %v2848 = vpop.permute.xlu0 %2847
      %2849 = vrot.lane.b32.xlu0 %v1782, 37
      %v2850 = vpop.permute.xlu0 %2849
      %2851 = vrot.lane.b32.xlu0 %v1783, 37
      %v2852 = vpop.permute.xlu0 %2851
      %2853 = vrot.lane.b32.xlu0 %v2067, 37
      %v2854 = vpop.permute.xlu0 %2853
      %vm2855 = vcmask 302080
      %v2856 = vsel %vm2855, %v2840, %v2842
      %v2857 = vsel %vm2855, %v2842, %v2844
      %v2858 = vsel %vm2855, %v2844, %v2846
      %v2859 = vsel %vm2855, %v2846, %v2848
      %v2860 = vsel %vm2855, %v2848, %v2850
      %v2861 = vsel %vm2855, %v2850, %v2852
      %v2862 = vsel %vm2855, %v2852, %v2854
      %2863 = vrot.lane.b32.xlu0 %v1777, 29
      %v2864 = vpop.permute.xlu0 %2863
      %2865 = vrot.lane.b32.xlu0 %v1778, 29
      %v2866 = vpop.permute.xlu0 %2865
      %2867 = vrot.lane.b32.xlu0 %v1779, 29
      %v2868 = vpop.permute.xlu0 %2867
      %2869 = vrot.lane.b32.xlu0 %v1780, 29
      %v2870 = vpop.permute.xlu0 %2869
      %2871 = vrot.lane.b32.xlu0 %v1781, 29
      %v2872 = vpop.permute.xlu0 %2871
      %2873 = vrot.lane.b32.xlu0 %v1782, 29
      %v2874 = vpop.permute.xlu0 %2873
      %2875 = vrot.lane.b32.xlu0 %v1783, 29
      %v2876 = vpop.permute.xlu0 %2875
      %2877 = vrot.lane.b32.xlu0 %v2067, 29
      %v2878 = vpop.permute.xlu0 %2877
      %vm2879 = vcmask 236544
      %v2880 = vsel %vm2879, %v2864, %v2866
      %v2881 = vsel %vm2879, %v2866, %v2868
      %v2882 = vsel %vm2879, %v2868, %v2870
      %v2883 = vsel %vm2879, %v2870, %v2872
      %v2884 = vsel %vm2879, %v2872, %v2874
      %v2885 = vsel %vm2879, %v2874, %v2876
      %v2886 = vsel %vm2879, %v2876, %v2878
      %2887 = vrot.lane.b32.xlu0 %v1777, 28
      %v2888 = vpop.permute.xlu0 %2887
      %2889 = vrot.lane.b32.xlu0 %v1778, 28
      %v2890 = vpop.permute.xlu0 %2889
      %2891 = vrot.lane.b32.xlu0 %v1779, 28
      %v2892 = vpop.permute.xlu0 %2891
      %2893 = vrot.lane.b32.xlu0 %v1780, 28
      %v2894 = vpop.permute.xlu0 %2893
      %2895 = vrot.lane.b32.xlu0 %v1781, 28
      %v2896 = vpop.permute.xlu0 %2895
      %2897 = vrot.lane.b32.xlu0 %v1782, 28
      %v2898 = vpop.permute.xlu0 %2897
      %2899 = vrot.lane.b32.xlu0 %v1783, 28
      %v2900 = vpop.permute.xlu0 %2899
      %2901 = vrot.lane.b32.xlu0 %v2067, 28
      %v2902 = vpop.permute.xlu0 %2901
      %v2903 = vsel %vm657, %v2888, %v2890
      %v2904 = vsel %vm657, %v2890, %v2892
      %v2905 = vsel %vm657, %v2892, %v2894
      %v2906 = vsel %vm657, %v2894, %v2896
      %v2907 = vsel %vm657, %v2896, %v2898
      %v2908 = vsel %vm657, %v2898, %v2900
      %v2909 = vsel %vm657, %v2900, %v2902
      %2910 = vrot.lane.b32.xlu0 %v1777, 27
      %v2911 = vpop.permute.xlu0 %2910
      %2912 = vrot.lane.b32.xlu0 %v1778, 27
      %v2913 = vpop.permute.xlu0 %2912
      %2914 = vrot.lane.b32.xlu0 %v1779, 27
      %v2915 = vpop.permute.xlu0 %2914
      %2916 = vrot.lane.b32.xlu0 %v1780, 27
      %v2917 = vpop.permute.xlu0 %2916
      %2918 = vrot.lane.b32.xlu0 %v1781, 27
      %v2919 = vpop.permute.xlu0 %2918
      %2920 = vrot.lane.b32.xlu0 %v1782, 27
      %v2921 = vpop.permute.xlu0 %2920
      %2922 = vrot.lane.b32.xlu0 %v1783, 27
      %v2923 = vpop.permute.xlu0 %2922
      %2924 = vrot.lane.b32.xlu0 %v2067, 27
      %v2925 = vpop.permute.xlu0 %2924
      %vm2926 = vcmask 220160
      %v2927 = vsel %vm2926, %v2911, %v2913
      %v2928 = vsel %vm2926, %v2913, %v2915
      %v2929 = vsel %vm2926, %v2915, %v2917
      %v2930 = vsel %vm2926, %v2917, %v2919
      %v2931 = vsel %vm2926, %v2919, %v2921
      %v2932 = vsel %vm2926, %v2921, %v2923
      %v2933 = vsel %vm2926, %v2923, %v2925
      %2934 = vrot.lane.b32.xlu0 %v1777, 19
      %v2935 = vpop.permute.xlu0 %2934
      %2936 = vrot.lane.b32.xlu0 %v1778, 19
      %v2937 = vpop.permute.xlu0 %2936
      %2938 = vrot.lane.b32.xlu0 %v1779, 19
      %v2939 = vpop.permute.xlu0 %2938
      %2940 = vrot.lane.b32.xlu0 %v1780, 19
      %v2941 = vpop.permute.xlu0 %2940
      %2942 = vrot.lane.b32.xlu0 %v1781, 19
      %v2943 = vpop.permute.xlu0 %2942
      %2944 = vrot.lane.b32.xlu0 %v1782, 19
      %v2945 = vpop.permute.xlu0 %2944
      %2946 = vrot.lane.b32.xlu0 %v1783, 19
      %v2947 = vpop.permute.xlu0 %2946
      %2948 = vrot.lane.b32.xlu0 %v2067, 19
      %v2949 = vpop.permute.xlu0 %2948
      %vm2950 = vcmask 154624
      %v2951 = vsel %vm2950, %v2935, %v2937
      %v2952 = vsel %vm2950, %v2937, %v2939
      %v2953 = vsel %vm2950, %v2939, %v2941
      %v2954 = vsel %vm2950, %v2941, %v2943
      %v2955 = vsel %vm2950, %v2943, %v2945
      %v2956 = vsel %vm2950, %v2945, %v2947
      %v2957 = vsel %vm2950, %v2947, %v2949
      %2958 = vrot.lane.b32.xlu0 %v1777, 18
      %v2959 = vpop.permute.xlu0 %2958
      %2960 = vrot.lane.b32.xlu0 %v1778, 18
      %v2961 = vpop.permute.xlu0 %2960
      %2962 = vrot.lane.b32.xlu0 %v1779, 18
      %v2963 = vpop.permute.xlu0 %2962
      %2964 = vrot.lane.b32.xlu0 %v1780, 18
      %v2965 = vpop.permute.xlu0 %2964
      %2966 = vrot.lane.b32.xlu0 %v1781, 18
      %v2967 = vpop.permute.xlu0 %2966
      %2968 = vrot.lane.b32.xlu0 %v1782, 18
      %v2969 = vpop.permute.xlu0 %2968
      %2970 = vrot.lane.b32.xlu0 %v1783, 18
      %v2971 = vpop.permute.xlu0 %2970
      %2972 = vrot.lane.b32.xlu0 %v2067, 18
      %v2973 = vpop.permute.xlu0 %2972
      %vm2974 = vcmask 146432
      %v2975 = vsel %vm2974, %v2959, %v2961
      %v2976 = vsel %vm2974, %v2961, %v2963
      %v2977 = vsel %vm2974, %v2963, %v2965
      %v2978 = vsel %vm2974, %v2965, %v2967
      %v2979 = vsel %vm2974, %v2967, %v2969
      %v2980 = vsel %vm2974, %v2969, %v2971
      %v2981 = vsel %vm2974, %v2971, %v2973
      %2982 = vrot.lane.b32.xlu0 %v1777, 17
      %v2983 = vpop.permute.xlu0 %2982
      %2984 = vrot.lane.b32.xlu0 %v1778, 17
      %v2985 = vpop.permute.xlu0 %2984
      %2986 = vrot.lane.b32.xlu0 %v1779, 17
      %v2987 = vpop.permute.xlu0 %2986
      %2988 = vrot.lane.b32.xlu0 %v1780, 17
      %v2989 = vpop.permute.xlu0 %2988
      %2990 = vrot.lane.b32.xlu0 %v1781, 17
      %v2991 = vpop.permute.xlu0 %2990
      %2992 = vrot.lane.b32.xlu0 %v1782, 17
      %v2993 = vpop.permute.xlu0 %2992
      %2994 = vrot.lane.b32.xlu0 %v1783, 17
      %v2995 = vpop.permute.xlu0 %2994
      %2996 = vrot.lane.b32.xlu0 %v2067, 17
      %v2997 = vpop.permute.xlu0 %2996
      %vm2998 = vcmask 138240
      %v2999 = vsel %vm2998, %v2983, %v2985
      %v3000 = vsel %vm2998, %v2985, %v2987
      %v3001 = vsel %vm2998, %v2987, %v2989
      %v3002 = vsel %vm2998, %v2989, %v2991
      %v3003 = vsel %vm2998, %v2991, %v2993
      %v3004 = vsel %vm2998, %v2993, %v2995
      %v3005 = vsel %vm2998, %v2995, %v2997
      %v3008 = vsel %vm417, %v2808, %v2832
      %v3012 = vsel %vm417, %v2809, %v2833
      %v3016 = vsel %vm417, %v2810, %v2834
      %v3020 = vsel %vm417, %v2811, %v2835
      %v3024 = vsel %vm417, %v2812, %v2836
      %v3028 = vsel %vm417, %v2813, %v2837
      %v3032 = vsel %vm417, %v2814, %v2838
      %v3036 = vsel %vm417, %v2856, %v2880
      %v3040 = vsel %vm417, %v2857, %v2881
      %v3044 = vsel %vm417, %v2858, %v2882
      %v3048 = vsel %vm417, %v2859, %v2883
      %v3052 = vsel %vm417, %v2860, %v2884
      %v3056 = vsel %vm417, %v2861, %v2885
      %v3060 = vsel %vm417, %v2862, %v2886
      %v3064 = vsel %vm417, %v2903, %v2927
      %v3068 = vsel %vm417, %v2904, %v2928
      %v3072 = vsel %vm417, %v2905, %v2929
      %v3076 = vsel %vm417, %v2906, %v2930
      %v3080 = vsel %vm417, %v2907, %v2931
      %v3084 = vsel %vm417, %v2908, %v2932
      %v3088 = vsel %vm417, %v2909, %v2933
      %v3092 = vsel %vm417, %v2951, %v2975
      %v3096 = vsel %vm417, %v2952, %v2976
      %v3100 = vsel %vm417, %v2953, %v2977
      %v3104 = vsel %vm417, %v2954, %v2978
      %v3108 = vsel %vm417, %v2955, %v2979
      %v3112 = vsel %vm417, %v2956, %v2980
      %v3116 = vsel %vm417, %v2957, %v2981
      %s3118 = scalar_lea.vmem %s2, 8
      %v3119 = vld [vmem:[%s3118] sm:$0xf]
      %v3121 = vsel %vm721, %v3119, 0
      %v3124 = vsel %vm417, %v2999, 0
      %v3127 = vsel %vm417, %v3000, 0
      %v3130 = vsel %vm417, %v3001, 0
      %v3133 = vsel %vm417, %v3002, 0
      %v3136 = vsel %vm417, %v3003, 0
      %v3139 = vsel %vm417, %v3004, 0
      %v3142 = vsel %vm417, %v3005, 0
      %3144 = vmatprep.subr.bf16.mxu0 %v3012
      %3145 = vmatpush1.bf16.msra.mxu0 %v3008
      %3146 = vmatprep.subr.bf16.mxu0 %v3040
      %3147 = vmatpush1.bf16.msra.mxu0 %v3036
      %3148 = vmatprep.subr.bf16.mxu0 %v3068
      %3149 = vmatpush1.bf16.msra.mxu0 %v3064
      %3150 = vmatprep.subr.bf16.mxu0 %v3096
      %3151 = vmatpush1.bf16.msra.mxu0 %v3092
      %3152 = vmatprep.subr.bf16.mxu0 %v3127
      %3153 = vmatpush1.bf16.msra.mxu0 %v3124
      %3154 = vmatprep.subr.bf16.mxu0 0
      %3155 = vmatpush1.bf16.msra.mxu0 0
      %3156 = vmatprep.subr.bf16.mxu0 0
      %3157 = vmatpush1.bf16.msra.mxu0 0
      %3158 = vmatprep.subr.bf16.mxu0 0
      %3159 = vmatpush1.bf16.msra.mxu0 0
      %3160 = vmatprep.subr.bf16.mxu0 0
      %3161 = vmatpush1.bf16.msra.mxu0 0
      %3162 = vmatprep.subr.bf16.mxu0 0
      %3163 = vmatpush1.bf16.msra.mxu0 0
      %3164 = vmatprep.subr.bf16.mxu0 0
      %3165 = vmatpush1.bf16.msra.mxu0 0
      %3166 = vmatprep.subr.bf16.mxu0 0
      %3167 = vmatpush1.bf16.msra.mxu0 0
      %3168 = vmatprep.subr.bf16.mxu0 0
      %3169 = vmatpush1.bf16.msra.mxu0 0
      %3170 = vmatprep.subr.bf16.mxu0 0
      %3171 = vmatpush1.bf16.msra.mxu0 0
      %3172 = vmatprep.subr.bf16.mxu0 0
      %3173 = vmatpush1.bf16.msra.mxu0 0
      %3174 = vmatprep.subr.bf16.mxu0 0
      %3175 = vmatpush1.bf16.msra.mxu0 0
      %3176 = vmatprep.mubr.bf16.mxu0 0
      %3177 = vmatmul.mubr.bf16.gmra.mrb[0].mxu0 %v3121
      %v3178 = vpop.f32.mrb[0].mxu0
      %v3179 = vadd.f32 0.0, %v3178
      %v3180 = vpop.f32.mrb[0].mxu0
      %v3181 = vadd.f32 0.0, %v3180
      %v3182 = vpop.f32.mrb[0].mxu0
      %v3183 = vpop.f32.mrb[0].mxu0
      %3184 = vdwg.mxu0
      %3185 = vmatprep.subr.bf16.mxu0 %v3020
      %3186 = vmatpush1.bf16.msra.mxu0 %v3016
      %3187 = vmatprep.subr.bf16.mxu0 %v3048
      %3188 = vmatpush1.bf16.msra.mxu0 %v3044
      %3189 = vmatprep.subr.bf16.mxu0 %v3076
      %3190 = vmatpush1.bf16.msra.mxu0 %v3072
      %3191 = vmatprep.subr.bf16.mxu0 %v3104
      %3192 = vmatpush1.bf16.msra.mxu0 %v3100
      %3193 = vmatprep.subr.bf16.mxu0 %v3133
      %3194 = vmatpush1.bf16.msra.mxu0 %v3130
      %3195 = vmatprep.subr.bf16.mxu0 0
      %3196 = vmatpush1.bf16.msra.mxu0 0
      %3197 = vmatprep.subr.bf16.mxu0 0
      %3198 = vmatpush1.bf16.msra.mxu0 0
      %3199 = vmatprep.subr.bf16.mxu0 0
      %3200 = vmatpush1.bf16.msra.mxu0 0
      %3201 = vmatprep.subr.bf16.mxu0 0
      %3202 = vmatpush1.bf16.msra.mxu0 0
      %3203 = vmatprep.subr.bf16.mxu0 0
      %3204 = vmatpush1.bf16.msra.mxu0 0
      %3205 = vmatprep.subr.bf16.mxu0 0
      %3206 = vmatpush1.bf16.msra.mxu0 0
      %3207 = vmatprep.subr.bf16.mxu0 0
      %3208 = vmatpush1.bf16.msra.mxu0 0
      %3209 = vmatprep.subr.bf16.mxu0 0
      %3210 = vmatpush1.bf16.msra.mxu0 0
      %3211 = vmatprep.subr.bf16.mxu0 0
      %3212 = vmatpush1.bf16.msra.mxu0 0
      %3213 = vmatprep.subr.bf16.mxu0 0
      %3214 = vmatpush1.bf16.msra.mxu0 0
      %3215 = vmatprep.subr.bf16.mxu0 0
      %3216 = vmatpush1.bf16.msra.mxu0 0
      %3217 = vmatprep.mubr.bf16.mxu0 0
      %3218 = vmatmul.mubr.bf16.gmra.mrb[0].mxu0 %v3121
      %v3219 = vpop.f32.mrb[0].mxu0
      %v3220 = vadd.f32 0.0, %v3219
      %v3221 = vpop.f32.mrb[0].mxu0
      %v3222 = vadd.f32 0.0, %v3221
      %v3223 = vpop.f32.mrb[0].mxu0
      %v3224 = vpop.f32.mrb[0].mxu0
      %3225 = vdwg.mxu0
      %3226 = vmatprep.subr.bf16.mxu0 %v3028
      %3227 = vmatpush1.bf16.msra.mxu0 %v3024
      %3228 = vmatprep.subr.bf16.mxu0 %v3056
      %3229 = vmatpush1.bf16.msra.mxu0 %v3052
      %3230 = vmatprep.subr.bf16.mxu0 %v3084
      %3231 = vmatpush1.bf16.msra.mxu0 %v3080
      %3232 = vmatprep.subr.bf16.mxu0 %v3112
      %3233 = vmatpush1.bf16.msra.mxu0 %v3108
      %3234 = vmatprep.subr.bf16.mxu0 %v3139
      %3235 = vmatpush1.bf16.msra.mxu0 %v3136
      %3236 = vmatprep.subr.bf16.mxu0 0
      %3237 = vmatpush1.bf16.msra.mxu0 0
      %3238 = vmatprep.subr.bf16.mxu0 0
      %3239 = vmatpush1.bf16.msra.mxu0 0
      %3240 = vmatprep.subr.bf16.mxu0 0
      %3241 = vmatpush1.bf16.msra.mxu0 0
      %3242 = vmatprep.subr.bf16.mxu0 0
      %3243 = vmatpush1.bf16.msra.mxu0 0
      %3244 = vmatprep.subr.bf16.mxu0 0
      %3245 = vmatpush1.bf16.msra.mxu0 0
      %3246 = vmatprep.subr.bf16.mxu0 0
      %3247 = vmatpush1.bf16.msra.mxu0 0
      %3248 = vmatprep.subr.bf16.mxu0 0
      %3249 = vmatpush1.bf16.msra.mxu0 0
      %3250 = vmatprep.subr.bf16.mxu0 0
      %3251 = vmatpush1.bf16.msra.mxu0 0
      %3252 = vmatprep.subr.bf16.mxu0 0
      %3253 = vmatpush1.bf16.msra.mxu0 0
      %3254 = vmatprep.subr.bf16.mxu0 0
      %3255 = vmatpush1.bf16.msra.mxu0 0
      %3256 = vmatprep.subr.bf16.mxu0 0
      %3257 = vmatpush1.bf16.msra.mxu0 0
      %3258 = vmatprep.mubr.bf16.mxu0 0
      %3259 = vmatmul.mubr.bf16.gmra.mrb[0].mxu0 %v3121
      %v3260 = vpop.f32.mrb[0].mxu0
      %v3261 = vadd.f32 0.0, %v3260
      %v3262 = vpop.f32.mrb[0].mxu0
      %v3263 = vadd.f32 0.0, %v3262
      %v3264 = vpop.f32.mrb[0].mxu0
      %v3265 = vpop.f32.mrb[0].mxu0
      %3266 = vdwg.mxu0
      %3267 = vmatprep.subr.bf16.mxu0 0
      %3268 = vmatpush1.bf16.msra.mxu0 %v3032
      %3269 = vmatprep.subr.bf16.mxu0 0
      %3270 = vmatpush1.bf16.msra.mxu0 %v3060
      %3271 = vmatprep.subr.bf16.mxu0 0
      %3272 = vmatpush1.bf16.msra.mxu0 %v3088
      %3273 = vmatprep.subr.bf16.mxu0 0
      %3274 = vmatpush1.bf16.msra.mxu0 %v3116
      %3275 = vmatprep.subr.bf16.mxu0 0
      %3276 = vmatpush1.bf16.msra.mxu0 %v3142
      %3277 = vmatprep.subr.bf16.mxu0 0
      %3278 = vmatpush1.bf16.msra.mxu0 0
      %3279 = vmatprep.subr.bf16.mxu0 0
      %3280 = vmatpush1.bf16.msra.mxu0 0
      %3281 = vmatprep.subr.bf16.mxu0 0
      %3282 = vmatpush1.bf16.msra.mxu0 0
      %3283 = vmatprep.subr.bf16.mxu0 0
      %3284 = vmatpush1.bf16.msra.mxu0 0
      %3285 = vmatprep.subr.bf16.mxu0 0
      %3286 = vmatpush1.bf16.msra.mxu0 0
      %3287 = vmatprep.subr.bf16.mxu0 0
      %3288 = vmatpush1.bf16.msra.mxu0 0
      %3289 = vmatprep.subr.bf16.mxu0 0
      %3290 = vmatpush1.bf16.msra.mxu0 0
      %3291 = vmatprep.subr.bf16.mxu0 0
      %3292 = vmatpush1.bf16.msra.mxu0 0
      %3293 = vmatprep.subr.bf16.mxu0 0
      %3294 = vmatpush1.bf16.msra.mxu0 0
      %3295 = vmatprep.subr.bf16.mxu0 0
      %3296 = vmatpush1.bf16.msra.mxu0 0
      %3297 = vmatprep.subr.bf16.mxu0 0
      %3298 = vmatpush1.bf16.msra.mxu0 0
      %3299 = vmatprep.mubr.bf16.mxu0 0
      %3300 = vmatmul.mubr.bf16.gmra.mrb[0].mxu0 %v3121
      %v3301 = vpop.f32.mrb[0].mxu0
      %v3302 = vadd.f32 0.0, %v3301
      %v3303 = vpop.f32.mrb[0].mxu0
      %v3304 = vpop.f32.mrb[0].mxu0
      %v3305 = vpop.f32.mrb[0].mxu0
      %3306 = vdwg.mxu0
      %v3307 = vadd.f32 %v2663, %v3179
      %v3308 = vadd.f32 %v2665, %v3181
      %v3309 = vadd.f32 %v2704, %v3220
      %v3310 = vadd.f32 %v2706, %v3222
      %v3311 = vadd.f32 %v2745, %v3261
      %v3312 = vadd.f32 %v2747, %v3263
      %v3313 = vadd.f32 %v2786, %v3302
      %v3314 = vmul.f32 %v3307, %v1627
      %v3315 = vmul.f32 %v3308, %v1631
      %v3316 = vmul.f32 %v3309, %v1635
      %v3317 = vmul.f32 %v3310, %v1639
      %v3318 = vmul.f32 %v3311, %v1643
      %v3319 = vmul.f32 %v3312, %v1647
      %v3320 = vmul.f32 %v3313, %v1651
      %v3321 = vadd.f32 %v3314, %v3315
      %v3322 = vadd.f32 %v3321, %v3316
      %v3323 = vadd.f32 %v3322, %v3317
      %v3324 = vadd.f32 %v3323, %v3318
      %v3325 = vadd.f32 %v3324, %v3319
      %v3326 = vadd.f32 %v3325, %v3320
      %3327 = vadd.xlane.f32.xlu0 %v3326
      %v3328 = vpop.xlane.xlu0 %3327
      %v3329 = vmul.f32 %v3314, %v3307
      %v3330 = vmul.f32 %v3315, %v3308
      %v3331 = vmul.f32 %v3316, %v3309
      %v3332 = vmul.f32 %v3317, %v3310
      %v3333 = vmul.f32 %v3318, %v3311
      %v3334 = vmul.f32 %v3319, %v3312
      %v3335 = vmul.f32 %v3320, %v3313
      %v3336 = vadd.f32 %v3329, %v3330
      %v3337 = vadd.f32 %v3336, %v3331
      %v3338 = vadd.f32 %v3337, %v3332
      %v3339 = vadd.f32 %v3338, %v3333
      %v3340 = vadd.f32 %v3339, %v3334
      %v3341 = vadd.f32 %v3340, %v3335
      %3342 = vadd.xlane.f32.xlu0 %v3341
      %v3343 = vpop.xlane.xlu0 %3342
      %v3344 = vmul.f32 %v3328, 0.001953125
      %v3345 = vmul.f32 %v3343, 0.001953125
      %v3346 = vmul.f32 %v3344, %v3344
      %v3347 = vsub.f32 %v3345, %v3346
      %v3348 = vmax.f32 %v3347, 0.0
      %v3349 = vsub.f32 %v3307, %v3344
      %v3350 = vsub.f32 %v3308, %v3344
      %v3351 = vsub.f32 %v3309, %v3344
      %v3352 = vsub.f32 %v3310, %v3344
      %v3353 = vsub.f32 %v3311, %v3344
      %v3354 = vsub.f32 %v3312, %v3344
      %v3355 = vsub.f32 %v3313, %v3344
      %v3356 = vadd.f32 %v3348, 1e-05
      %v3357 = vrsqrt.pop %v3356
      %v3358 = vmul.f32 %v3349, %v3357
      %v3359 = vmul.f32 %v3350, %v3357
      %v3360 = vmul.f32 %v3351, %v3357
      %v3361 = vmul.f32 %v3352, %v3357
      %v3362 = vmul.f32 %v3353, %v3357
      %v3363 = vmul.f32 %v3354, %v3357
      %v3364 = vmul.f32 %v3355, %v3357
      %v3365 = vmul.f32 %v3358, %v1627
      %v3366 = vmul.f32 %v3359, %v1631
      %v3367 = vmul.f32 %v3360, %v1635
      %v3368 = vmul.f32 %v3361, %v1639
      %v3369 = vmul.f32 %v3362, %v1643
      %v3370 = vmul.f32 %v3363, %v1647
      %v3371 = vmul.f32 %v3364, %v1651
      %v3372 = vunpack.c.l.bf16 %v199
      %v3373 = vunpack.c.h.bf16 %v199
      %v3374 = vunpack.c.l.bf16 %v200
      %v3375 = vunpack.c.h.bf16 %v200
      %v3376 = vunpack.c.l.bf16 %v201
      %v3377 = vunpack.c.h.bf16 %v201
      %v3378 = vunpack.c.l.bf16 %v202
      %v3379 = vunpack.c.h.bf16 %v202
      %3388 = vrot.lane.b32.xlu0 %v3372, 17
      %v3389 = vpop.permute.xlu0 %3388
      %3390 = vrot.lane.b32.xlu0 %v3373, 17
      %v3391 = vpop.permute.xlu0 %3390
      %3392 = vrot.lane.b32.xlu0 %v3374, 17
      %v3393 = vpop.permute.xlu0 %3392
      %3394 = vrot.lane.b32.xlu0 %v3375, 17
      %v3395 = vpop.permute.xlu0 %3394
      %3396 = vrot.lane.b32.xlu0 %v3376, 17
      %v3397 = vpop.permute.xlu0 %3396
      %3398 = vrot.lane.b32.xlu0 %v3377, 17
      %v3399 = vpop.permute.xlu0 %3398
      %3400 = vrot.lane.b32.xlu0 %v3378, 17
      %v3401 = vpop.permute.xlu0 %3400
      %3402 = vrot.lane.b32.xlu0 %v3379, 17
      %v3403 = vpop.permute.xlu0 %3402
      %vm3404 = vcmask 138240
      %v3405 = vsel %vm3404, %v3389, %v3391
      %v3406 = vsel %vm3404, %v3391, %v3393
      %v3407 = vsel %vm3404, %v3393, %v3395
      %v3408 = vsel %vm3404, %v3395, %v3397
      %v3409 = vsel %vm3404, %v3397, %v3399
      %v3410 = vsel %vm3404, %v3399, %v3401
      %v3411 = vsel %vm3404, %v3401, %v3403
      %v3419 = vadd.f32 %v3365, %v3405
      %v3420 = vadd.f32 %v3366, %v3406
      %v3421 = vadd.f32 %v3367, %v3407
      %v3422 = vadd.f32 %v3368, %v3408
      %v3423 = vadd.f32 %v3369, %v3409
      %v3424 = vadd.f32 %v3370, %v3410
      %v3425 = vadd.f32 %v3371, %v3411
      %v3426 = vmax.f32 %v3419, 0.0
      %v3427 = vmax.f32 %v3420, 0.0
      %v3428 = vmax.f32 %v3421, 0.0
      %v3429 = vmax.f32 %v3422, 0.0
      %v3430 = vmax.f32 %v3423, 0.0
      %v3431 = vmax.f32 %v3424, 0.0
      %v3432 = vmax.f32 %v3425, 0.0
      %3433 = vst [vmem:[%s197] sm:$0xff] %v3426
      %3434 = vst [vmem:[%s197 + $0x8] sm:$0xff] %v3427
      %3435 = vst [vmem:[%s197 + $0x10] sm:$0xff] %v3428
      %3436 = vst [vmem:[%s197 + $0x18] sm:$0xff] %v3429
      %3437 = vst [vmem:[%s197 + $0x20] sm:$0xff] %v3430
      %3438 = vst [vmem:[%s197 + $0x28] sm:$0xff] %v3431
      %3439 = vst [vmem:[%s197 + $0x30] sm:$0xff] %v3432
      %p3440 = scmp.lt.s32.totalorder %s15, 1
      %s3441 = scalar_select %p3440, %s15, 1
      %s3442 = smul.addr %s3441, 7
      %s3443 = smul.addr %s3442, 8
      %s3444 = scalar_lea.vmem %s4, %s3443
      // Predicated region
      $region37: #{basic_block_forward.1} parent=35 // pred_check
        %p3445 = pneg %p122
      $region38: #{basic_block_forward.1} parent=35 // pred_check_branch
        %3447 = sbr.rel (%p3445) target = $region40
      $region39: #{basic_block_forward.1} parent=35 // pred_region
        _
      $region40: #{basic_block_forward.1} parent=35 // pred_fallthru
        _
    $region36: #{basic_block_forward.1} parent=5 // pred_fallthru
      _
    %p3448 = scmp.le.s32.totalorder 2, %s10
    // Predicated region
    $region41: #{basic_block_forward.1} parent=5 // pred_check
      %p3449 = pneg %p3448
    $region42: #{basic_block_forward.1} parent=5 // pred_check_branch
      %3451 = sbr.rel (%p3449) target = $region44
    $region43: #{basic_block_forward.1} parent=5 // pred_region
      %s3452 = ssub.s32 %s10, 2
      // Predicated region
      $region45: #{basic_block_forward.1} parent=43 // pred_check
        %p3453 = pneg %p128
      $region46: #{basic_block_forward.1} parent=43 // pred_check_branch
        %3455 = sbr.rel (%p3453) target = $region48
      $region47: #{basic_block_forward.1} parent=43 // pred_region
        %p3456 = scmp.lt.s32.totalorder %s16, 1
        %s3457 = scalar_select %p3456, %s16, 1
        %s3458 = smul.addr %s3457, 7
        %s3459 = smul.addr %s3458, 8
        %s3460 = scalar_lea.vmem %s4, %s3459
      $region48: #{basic_block_forward.1} parent=43 // pred_fallthru
        _
    $region44: #{basic_block_forward.1} parent=5 // pred_fallthru
      _
  $region6: #{basic_block_forward.1} parent=0 // loop_footer
    %s14 = sadd.s32 1, %s10
  $region7: #{basic_block_forward.1} parent=0 // loop_footer_branch
    %9 = sbr.rel target = $region3
  $region8: #{basic_block_forward.1} parent=0 // loop_exit
    _

</llo_original>
